<compile_context>
chip_gen: v7x
topology: tpu7x:2x2x1
jax: 0.10.0
libtpu: 0.0.40
codegen_flags: <defaults>
</compile_context>

<pallas_src>
import functools

import jax
import jax.numpy as jnp
from jax.experimental import pallas as pl
from jax.experimental.pallas import tpu as pltpu


def _round_up(x, m):
    return ((x + m - 1) // m) * m


def _pick_tile(dim, want, align):
    """Largest multiple of `align` that divides `dim` and is <= want (or dim itself if small)."""
    if dim <= want:
        return dim
    t = max(align, (want // align) * align)
    while t > align and dim % t:
        t -= align
    return t


# ------------------------- Fused multi-layer GRU kernel -------------------------

def _fused_gru_kernel(x_ref, ctx_ref, h0_ref, w0e_ref, w0c_ref, wih_ref, whh_ref,
                      bgi_ref, bhn_ref,
                      y_ref, hT_ref,
                      gi_scr, seq_scr,
                      *, num_layers, T, Bp, Hp):
    """All GRU layers in one invocation. Hidden state + inter-layer activations stay in VMEM."""
    f32 = jnp.float32
    bf16 = jnp.bfloat16

    def recur(layer, gi_extra):
        """T-step recurrence of one layer over the precomputed (hoisted) input gates."""
        whh = whh_ref[layer]                                    # (Hp, 3Hp) bf16, loop-invariant
        bhn = jnp.broadcast_to(bhn_ref[layer], (Bp, Hp))        # broadcast hoisted out of loop

        def step(t, h):
            off = pl.multiple_of(t * Bp, Bp)                    # sublane-aligned row offset
            gi_t = gi_scr[pl.ds(off, Bp), :]                    # (Bp, 3Hp) precomputed gates
            if gi_extra is not None:                            # layer 0: + folded ctx term
                gi_t = gi_t + gi_extra
            gh = jnp.dot(h.astype(bf16), whh, preferred_element_type=f32)
            # PyTorch gate order (r, z, n); 128-aligned lane slices.
            r = jax.nn.sigmoid(gi_t[:, :Hp] + gh[:, :Hp])
            z = jax.nn.sigmoid(gi_t[:, Hp:2 * Hp] + gh[:, Hp:2 * Hp])
            n = jnp.tanh(gi_t[:, 2 * Hp:] + r * (gh[:, 2 * Hp:] + bhn))
            h_new = (1.0 - z) * n + z * h
            seq_scr[pl.ds(off, Bp), :] = h_new
            return h_new                                        # hidden state carried in vregs

        h_final = jax.lax.fori_loop(0, T, step, h0_ref[layer], unroll=True)
        hT_ref[layer] = h_final                                 # single write per layer

    # Layer 0: hoisted input projection (one big MXU matmul over the whole sequence) plus the
    # time-invariant context contribution folded into a per-batch bias (computed once).
    ctx_c = jnp.dot(ctx_ref[...].astype(bf16), w0c_ref[...],
                    preferred_element_type=f32) + bgi_ref[0]          # (Bp, 3Hp)
    gi_scr[...] = jnp.dot(x_ref[...], w0e_ref[...],
                          preferred_element_type=f32)                 # (T*Bp, 3Hp)
    recur(0, ctx_c)

    # Layers 1..L-1: input projection of the previous layer's VMEM-resident outputs.
    for l in range(1, num_layers):
        gi_scr[...] = jnp.dot(seq_scr[...].astype(bf16), wih_ref[l - 1],
                              preferred_element_type=f32) + bgi_ref[l]
        recur(l, None)

    # bf16 writeback: the sequence output only feeds the bf16 dense matmul -> halve HBM traffic.
    y_ref[...] = seq_scr[...].astype(bf16)                             # lane-dense (last dim = Hp)


def fused_multilayer_gru(x, ctx, h0, w0e, w0c, wih_rest, whh, bgi, bhn,
                         *, num_layers, T, Bp, Hp):
    """x: (T*Bp, E) bf16 time-major embeddings; ctx/h0 padded f32.
    Returns y: (T*Bp, Hp) bf16 (last layer outputs), hT: (L, Bp, Hp) f32."""
    TB = T * Bp
    E = x.shape[-1]
    kernel = functools.partial(_fused_gru_kernel, num_layers=num_layers,
                               T=T, Bp=Bp, Hp=Hp)
    return pl.pallas_call(
        kernel,
        out_shape=(jax.ShapeDtypeStruct((TB, Hp), jnp.bfloat16),
                   jax.ShapeDtypeStruct((num_layers, Bp, Hp), jnp.float32)),
        in_specs=[
            pl.BlockSpec((TB, E), lambda: (0, 0)),                             # x (bf16)
            pl.BlockSpec((Bp, Hp), lambda: (0, 0)),                            # ctx = state[-1]
            pl.BlockSpec((num_layers, Bp, Hp), lambda: (0, 0, 0)),             # h0
            pl.BlockSpec((E, 3 * Hp), lambda: (0, 0)),                         # W_ih0 (embed rows)
            pl.BlockSpec((Hp, 3 * Hp), lambda: (0, 0)),                        # W_ih0 (ctx rows)
            pl.BlockSpec((max(num_layers - 1, 1), Hp, 3 * Hp),
                         lambda: (0, 0, 0)),                                   # W_ih, layers >= 1
            pl.BlockSpec((num_layers, Hp, 3 * Hp), lambda: (0, 0, 0)),         # W_hh
            pl.BlockSpec((num_layers, 1, 3 * Hp), lambda: (0, 0, 0)),          # folded gi bias
            pl.BlockSpec((num_layers, 1, Hp), lambda: (0, 0, 0)),              # b_hh_n
        ],
        out_specs=(pl.BlockSpec((TB, Hp), lambda: (0, 0)),
                   pl.BlockSpec((num_layers, Bp, Hp), lambda: (0, 0, 0))),
        scratch_shapes=[
            pltpu.VMEM((TB, 3 * Hp), jnp.float32),   # hoisted input gates for current layer
            pltpu.VMEM((TB, Hp), jnp.float32),       # inter-layer activations (never leave VMEM)
        ],
    )(x, ctx, h0, w0e, w0c, wih_rest, whh, bgi, bhn)


# ------------------------------ Tiled dense kernel --------------------------------

def _dense_kernel(x_ref, w_ref, b_ref, o_ref):
    o_ref[...] = (jnp.dot(x_ref[...].astype(jnp.bfloat16), w_ref[...],
                          preferred_element_type=jnp.float32) + b_ref[...])


def dense(x, w, b, *, row_tile=256, col_tile=512):
    """x: (N, K) bf16/f32, w: (K, V) bf16, b: (1, V) f32 -> (N, V) f32. Tiled over rows x vocab."""
    N, K = x.shape
    V = w.shape[-1]
    tm = _pick_tile(N, row_tile, 8)
    tv = _pick_tile(V, col_tile, 128)
    return pl.pallas_call(
        _dense_kernel,
        out_shape=jax.ShapeDtypeStruct((N, V), jnp.float32),
        grid=(N // tm, V // tv),
        in_specs=[pl.BlockSpec((tm, K), lambda i, j: (i, 0)),
                  pl.BlockSpec((K, tv), lambda i, j: (0, j)),
                  pl.BlockSpec((1, tv), lambda i, j: (0, j))],
        out_specs=pl.BlockSpec((tm, tv), lambda i, j: (i, j)),
        compiler_params=pltpu.CompilerParams(
            dimension_semantics=("parallel", "parallel"),
            vmem_limit_bytes=32 * 1024 * 1024),
    )(x, w, b)


# ------------------------- Parameter construction ---------------------------

def init_params(key, vocab_size, embed_size, num_hiddens, num_layers):
    """Raw parameters with PyTorch-equivalent shapes (weights pre-transposed to (in, 3H))."""
    params = {}
    key, k = jax.random.split(key)
    params["embedding"] = jax.random.normal(k, (vocab_size, embed_size), jnp.float32) * 0.1

    bound = 1.0 / jnp.sqrt(num_hiddens)
    wih, whh, bih, bhh = [], [], [], []
    for layer in range(num_layers):
        in_size = embed_size + num_hiddens if layer == 0 else num_hiddens
        key, k1, k2, k3, k4 = jax.random.split(key, 5)
        wih.append(jax.random.uniform(k1, (in_size, 3 * num_hiddens), jnp.float32, -bound, bound))
        whh.append(jax.random.uniform(k2, (num_hiddens, 3 * num_hiddens), jnp.float32, -bound, bound))
        bih.append(jax.random.uniform(k3, (1, 3 * num_hiddens), jnp.float32, -bound, bound))
        bhh.append(jax.random.uniform(k4, (1, 3 * num_hiddens), jnp.float32, -bound, bound))
    params["wih"], params["whh"], params["bih"], params["bhh"] = wih, whh, bih, bhh

    key, k1, k2 = jax.random.split(key, 3)
    params["w_dense"] = jax.random.uniform(k1, (num_hiddens, vocab_size), jnp.float32, -bound, bound)
    params["b_dense"] = jax.random.uniform(k2, (1, vocab_size), jnp.float32, -bound, bound)
    return params


def prepare_kernel_params(params):
    """Pad to lane/sublane multiples, fold biases, split layer-0 W_ih, cast MXU weights to bf16."""
    E = params["embedding"].shape[1]
    H = params["whh"][0].shape[0]
    V = params["w_dense"].shape[1]
    L = len(params["whh"])
    Hp = _round_up(H, 128)
    Vp = _round_up(V, 128)

    def pad_gate_cols(w):
        # (..., 3H) -> (..., 3Hp), zero-padding each (r|z|n) gate block independently.
        pad = [(0, 0)] * (w.ndim - 1) + [(0, Hp - H)]
        segs = [jnp.pad(w[..., g * H:(g + 1) * H], pad) for g in range(3)]
        return jnp.concatenate(segs, axis=-1)

    wih0 = params["wih"][0]                                               # (E + H, 3H)
    w0e = pad_gate_cols(wih0[:E]).astype(jnp.bfloat16)                    # (E, 3Hp)
    w0c = jnp.pad(pad_gate_cols(wih0[E:]), ((0, Hp - H), (0, 0))).astype(jnp.bfloat16)

    if L > 1:
        wih_rest = jnp.stack([jnp.pad(pad_gate_cols(params["wih"][l]), ((0, Hp - H), (0, 0)))
                              for l in range(1, L)]).astype(jnp.bfloat16)  # (L-1, Hp, 3Hp)
    else:
        wih_rest = jnp.zeros((1, Hp, 3 * Hp), jnp.bfloat16)                # unused dummy

    whh = jnp.stack([jnp.pad(pad_gate_cols(params["whh"][l]), ((0, Hp - H), (0, 0)))
                     for l in range(L)]).astype(jnp.bfloat16)              # (L, Hp, 3Hp)

    # Fold b_hh's r/z parts into the hoisted input-gate bias; keep b_hh_n separate (n-gate path).
    bgi, bhn = [], []
    for l in range(L):
        bih_l, bhh_l = params["bih"][l], params["bhh"][l]                  # (1, 3H) each
        rz = bih_l + jnp.concatenate([bhh_l[:, :2 * H], jnp.zeros((1, H), jnp.float32)], axis=-1)
        bgi.append(pad_gate_cols(rz))                                      # (1, 3Hp)
        bhn.append(jnp.pad(bhh_l[:, 2 * H:], ((0, 0), (0, Hp - H))))       # (1, Hp)
    bgi = jnp.stack(bgi)                                                   # (L, 1, 3Hp)
    bhn = jnp.stack(bhn)                                                   # (L, 1, Hp)

    w_dense = jnp.pad(params["w_dense"], ((0, Hp - H), (0, Vp - V))).astype(jnp.bfloat16)
    b_dense = jnp.pad(params["b_dense"], ((0, 0), (0, Vp - V)))

    return dict(embedding=params["embedding"], w0e=w0e, w0c=w0c, wih_rest=wih_rest,
                whh=whh, bgi=bgi, bhn=bhn, w_dense=w_dense, b_dense=b_dense,
                E=E, H=H, Hp=Hp, V=V, Vp=Vp, L=L)


# ------------------------------ Forward pass --------------------------------

def seq2seq_decoder_forward(kp, X_tokens, state):
    """X_tokens: (B, T) int32, state: (L, B, H) f32.
    Returns (op: (B, T, vocab) f32, new_state: (L, B, H) f32)."""
    L, B, H = state.shape
    T = X_tokens.shape[1]
    E, Hp, V, Vp = kp["E"], kp["Hp"], kp["V"], kp["Vp"]
    Bp = _round_up(B, 8)

    # Glue: embedding gather + time-major layout + batch/lane padding (see TODO(synk) above).
    emb = kp["embedding"][X_tokens]                                   # (B, T, E)
    x = jnp.transpose(emb, (1, 0, 2))                                 # (T, B, E)
    x = jnp.pad(x, ((0, 0), (0, Bp - B), (0, 0)))
    x = x.reshape(T * Bp, E).astype(jnp.bfloat16)

    state_p = jnp.pad(state, ((0, 0), (0, Bp - B), (0, Hp - H)))      # (L, Bp, Hp)
    ctx = state_p[-1]                                                 # (Bp, Hp)

    y, hT = fused_multilayer_gru(x, ctx, state_p, kp["w0e"], kp["w0c"], kp["wih_rest"],
                                 kp["whh"], kp["bgi"], kp["bhn"],
                                 num_layers=L, T=T, Bp=Bp, Hp=Hp)

    logits = dense(y, kp["w_dense"], kp["b_dense"])                   # (T*Bp, Vp)
    op = logits.reshape(T, Bp, Vp)[:, :B, :V].transpose(1, 0, 2)      # (B, T, V)
    new_state = hT[:, :B, :H]                                         # (L, B, H)
    return op, new_state


# ----------------------- Pure-JAX reference (checking) -----------------------

def reference_forward(params, X_tokens, state):
    num_layers = state.shape[0]
    H = state.shape[-1]
    emb = params["embedding"][X_tokens]
    X = jnp.transpose(emb, (1, 0, 2))
    T, B, _ = X.shape
    context = jnp.broadcast_to(state[-1][None], (T, B, H))
    layer_in = jnp.concatenate([X, context], axis=2)

    new_state = []
    for layer in range(num_layers):
        wih, whh = params["wih"][layer], params["whh"][layer]
        bih, bhh = params["bih"][layer], params["bhh"][layer]

        def step(h, x_t):
            gi = x_t @ wih + bih
            gh = h @ whh + bhh
            r = jax.nn.sigmoid(gi[:, :H] + gh[:, :H])
            z = jax.nn.sigmoid(gi[:, H:2 * H] + gh[:, H:2 * H])
            n = jnp.tanh(gi[:, 2 * H:] + r * gh[:, 2 * H:])
            h_new = (1.0 - z) * n + z * h
            return h_new, h_new

        hT, ys = jax.lax.scan(step, state[layer], layer_in)
        new_state.append(hT)
        layer_in = ys
    new_state = jnp.stack(new_state, axis=0)
    logits = layer_in @ params["w_dense"] + params["b_dense"]
    return jnp.transpose(logits, (1, 0, 2)), new_state


# ---------------------------------- Main -------------------------------------

if __name__ == "__main__":
    vocab_size, embed_size, num_hiddens, num_layers = 50, 16, 32, 2
    batch, seq = 2, 8

    key = jax.random.PRNGKey(0)
    kparam, kx, ks = jax.random.split(key, 3)
    params = init_params(kparam, vocab_size, embed_size, num_hiddens, num_layers)
    kparams = prepare_kernel_params(params)

    X_tokens = jax.random.randint(kx, (batch, seq), 0, vocab_size, jnp.int32)
    # Encoder GRU hidden states are tanh-bounded; use a bounded synthetic state.
    state = jnp.tanh(jax.random.normal(ks, (num_layers, batch, num_hiddens), jnp.float32))

    op, new_state = jax.block_until_ready(
        seq2seq_decoder_forward(kparams, X_tokens, state))

    op_ref, state_ref = reference_forward(params, X_tokens, state)
    assert op.shape == (batch, seq, vocab_size)
    assert new_state.shape == (num_layers, batch, num_hiddens)
    # bf16 MXU operands (f32 accumulate / gate math) -> slightly wider tolerance than pure f32.
    assert jnp.allclose(op, op_ref, atol=3e-2, rtol=3e-2)
    assert jnp.allclose(new_state, state_ref, atol=3e-2, rtol=3e-2)

    print("KERNEL_OK")
</pallas_src>

<mosaic_0001>
module attributes {stable_mosaic.version = 11 : i64} {
  func.func @_fused_gru_kernel(%arg0: memref<64x16xbf16, #tpu.memory_space<vmem>>, %arg1: memref<8x128xf32, #tpu.memory_space<vmem>>, %arg2: memref<2x8x128xf32, #tpu.memory_space<vmem>>, %arg3: memref<16x384xbf16, #tpu.memory_space<vmem>>, %arg4: memref<128x384xbf16, #tpu.memory_space<vmem>>, %arg5: memref<1x128x384xbf16, #tpu.memory_space<vmem>>, %arg6: memref<2x128x384xbf16, #tpu.memory_space<vmem>>, %arg7: memref<2x1x384xf32, #tpu.memory_space<vmem>>, %arg8: memref<2x1x128xf32, #tpu.memory_space<vmem>>, %arg9: memref<64x128xbf16, #tpu.memory_space<vmem>>, %arg10: memref<2x8x128xf32, #tpu.memory_space<vmem>>, %arg11: memref<64x384xf32, #tpu.memory_space<vmem>>, %arg12: memref<64x128xf32, #tpu.memory_space<vmem>>) attributes {dimension_semantics = [], scalar_prefetch = 0 : i64, scratch_operands = 2 : i64, tpu.core_type = #tpu.core_type<tc>} {
    %c0 = arith.constant 0 : index
    %c0_0 = arith.constant 0 : index
    %0 = vector.load %arg1[%c0, %c0_0] : memref<8x128xf32, #tpu.memory_space<vmem>>, vector<8x128xf32>
    %1 = arith.truncf %0 : vector<8x128xf32> to vector<8x128xbf16>
    %c0_1 = arith.constant 0 : index
    %c0_2 = arith.constant 0 : index
    %2 = vector.load %arg4[%c0_1, %c0_2] : memref<128x384xbf16, #tpu.memory_space<vmem>>, vector<128x384xbf16>
    %cst = arith.constant dense<0.000000e+00> : vector<8x384xf32>
    %3 = tpu.matmul %1, %2, %cst {dimension_numbers = #tpu.dot_dimension_numbers<[1], [0], [0], [1], [0, 0, 1, 1], [], []>} : vector<8x128xbf16>, vector<128x384xbf16>, vector<8x384xf32> -> vector<8x384xf32>
    %c0_3 = arith.constant 0 : index
    %c0_4 = arith.constant 0 : index
    %c0_5 = arith.constant 0 : index
    %4 = vector.load %arg7[%c0_3, %c0_4, %c0_5] : memref<2x1x384xf32, #tpu.memory_space<vmem>>, vector<1x1x384xf32>
    %5 = vector.shape_cast %4 : vector<1x1x384xf32> to vector<1x384xf32>
    %6 = vector.broadcast %5 : vector<1x384xf32> to vector<8x384xf32>
    %7 = arith.addf %3, %6 : vector<8x384xf32>
    %c0_6 = arith.constant 0 : index
    %c0_7 = arith.constant 0 : index
    %8 = vector.load %arg0[%c0_6, %c0_7] : memref<64x16xbf16, #tpu.memory_space<vmem>>, vector<64x16xbf16>
    %c0_8 = arith.constant 0 : index
    %c0_9 = arith.constant 0 : index
    %9 = vector.load %arg3[%c0_8, %c0_9] : memref<16x384xbf16, #tpu.memory_space<vmem>>, vector<16x384xbf16>
    %cst_10 = arith.constant dense<0.000000e+00> : vector<64x384xf32>
    %10 = tpu.matmul %8, %9, %cst_10 {dimension_numbers = #tpu.dot_dimension_numbers<[1], [0], [0], [1], [0, 0, 1, 1], [], []>} : vector<64x16xbf16>, vector<16x384xbf16>, vector<64x384xf32> -> vector<64x384xf32>
    %c0_11 = arith.constant 0 : index
    %c0_12 = arith.constant 0 : index
    %11 = vector.load %arg11[%c0_11, %c0_12] : memref<64x384xf32, #tpu.memory_space<vmem>>, vector<64x384xf32>
    tpu.vector_store %arg11[%c0_11, %c0_12], %10 {strides = array<i32>} : memref<64x384xf32, #tpu.memory_space<vmem>>, vector<64x384xf32>,
    %c0_13 = arith.constant 0 : index
    %c0_14 = arith.constant 0 : index
    %c0_15 = arith.constant 0 : index
    %12 = vector.load %arg6[%c0_13, %c0_14, %c0_15] : memref<2x128x384xbf16, #tpu.memory_space<vmem>>, vector<1x128x384xbf16>
    %13 = vector.shape_cast %12 : vector<1x128x384xbf16> to vector<128x384xbf16>
    %c0_16 = arith.constant 0 : index
    %c0_17 = arith.constant 0 : index
    %c0_18 = arith.constant 0 : index
    %14 = vector.load %arg8[%c0_16, %c0_17, %c0_18] : memref<2x1x128xf32, #tpu.memory_space<vmem>>, vector<1x1x128xf32>
    %15 = vector.shape_cast %14 : vector<1x1x128xf32> to vector<1x128xf32>
    %16 = vector.shape_cast %15 : vector<1x128xf32> to vector<1x128xf32>
    %17 = vector.broadcast %16 : vector<1x128xf32> to vector<8x128xf32>
    %c0_19 = arith.constant 0 : index
    %c0_20 = arith.constant 0 : index
    %c0_21 = arith.constant 0 : index
    %18 = vector.load %arg2[%c0_19, %c0_20, %c0_21] : memref<2x8x128xf32, #tpu.memory_space<vmem>>, vector<1x8x128xf32>
    %19 = vector.shape_cast %18 : vector<1x8x128xf32> to vector<8x128xf32>
    %c0_i32 = arith.constant 0 : i32
    %c8_i32 = arith.constant 8 : i32
    %20 = arith.muli %c0_i32, %c8_i32 : i32
    %21 = tpu.assume_multiple %20, 8 : i32
    %22 = arith.index_cast %21 : i32 to index
    %c0_22 = arith.constant 0 : index
    %23 = vector.load %arg11[%22, %c0_22] : memref<64x384xf32, #tpu.memory_space<vmem>>, vector<8x384xf32>
    %24 = arith.addf %23, %7 : vector<8x384xf32>
    %25 = arith.truncf %19 : vector<8x128xf32> to vector<8x128xbf16>
    %cst_23 = arith.constant dense<0.000000e+00> : vector<8x384xf32>
    %26 = tpu.matmul %25, %13, %cst_23 {dimension_numbers = #tpu.dot_dimension_numbers<[1], [0], [0], [1], [0, 0, 1, 1], [], []>} : vector<8x128xbf16>, vector<128x384xbf16>, vector<8x384xf32> -> vector<8x384xf32>
    %27 = vector.extract_strided_slice %24 {offsets = [0, 0], sizes = [8, 128], strides = [1, 1]} : vector<8x384xf32> to vector<8x128xf32>
    %28 = vector.extract_strided_slice %26 {offsets = [0, 0], sizes = [8, 128], strides = [1, 1]} : vector<8x384xf32> to vector<8x128xf32>
    %29 = arith.addf %27, %28 : vector<8x128xf32>
    %30 = arith.negf %29 : vector<8x128xf32>
    %31 = math.exp %30 : vector<8x128xf32>
    %cst_24 = arith.constant 1.000000e+00 : f32
    %32 = vector.broadcast %cst_24 : f32 to vector<8x128xf32>
    %33 = arith.addf %32, %31 : vector<8x128xf32>
    %34 = arith.divf %32, %33 : vector<8x128xf32>
    %35 = vector.extract_strided_slice %24 {offsets = [0, 128], sizes = [8, 128], strides = [1, 1]} : vector<8x384xf32> to vector<8x128xf32>
    %36 = vector.extract_strided_slice %26 {offsets = [0, 128], sizes = [8, 128], strides = [1, 1]} : vector<8x384xf32> to vector<8x128xf32>
    %37 = arith.addf %35, %36 : vector<8x128xf32>
    %38 = arith.negf %37 : vector<8x128xf32>
    %39 = math.exp %38 : vector<8x128xf32>
    %cst_25 = arith.constant 1.000000e+00 : f32
    %40 = vector.broadcast %cst_25 : f32 to vector<8x128xf32>
    %41 = arith.addf %40, %39 : vector<8x128xf32>
    %42 = arith.divf %40, %41 : vector<8x128xf32>
    %43 = vector.extract_strided_slice %24 {offsets = [0, 256], sizes = [8, 128], strides = [1, 1]} : vector<8x384xf32> to vector<8x128xf32>
    %44 = vector.extract_strided_slice %26 {offsets = [0, 256], sizes = [8, 128], strides = [1, 1]} : vector<8x384xf32> to vector<8x128xf32>
    %45 = arith.addf %44, %17 : vector<8x128xf32>
    %46 = arith.mulf %34, %45 : vector<8x128xf32>
    %47 = arith.addf %43, %46 : vector<8x128xf32>
    %48 = math.tanh %47 : vector<8x128xf32>
    %cst_26 = arith.constant 1.000000e+00 : f32
    %49 = vector.broadcast %cst_26 : f32 to vector<8x128xf32>
    %50 = arith.subf %49, %42 : vector<8x128xf32>
    %51 = arith.mulf %50, %48 : vector<8x128xf32>
    %52 = arith.mulf %42, %19 : vector<8x128xf32>
    %53 = arith.addf %51, %52 : vector<8x128xf32>
    %54 = arith.index_cast %21 : i32 to index
    %c0_27 = arith.constant 0 : index
    %55 = vector.load %arg12[%54, %c0_27] : memref<64x128xf32, #tpu.memory_space<vmem>>, vector<8x128xf32>
    tpu.vector_store %arg12[%54, %c0_27], %53 {strides = array<i32>} : memref<64x128xf32, #tpu.memory_space<vmem>>, vector<8x128xf32>,
    %c1_i32 = arith.constant 1 : i32
    %c8_i32_28 = arith.constant 8 : i32
    %56 = arith.muli %c1_i32, %c8_i32_28 : i32
    %57 = tpu.assume_multiple %56, 8 : i32
    %58 = arith.index_cast %57 : i32 to index
    %c0_29 = arith.constant 0 : index
    %59 = vector.load %arg11[%58, %c0_29] : memref<64x384xf32, #tpu.memory_space<vmem>>, vector<8x384xf32>
    %60 = arith.addf %59, %7 : vector<8x384xf32>
    %61 = arith.truncf %53 : vector<8x128xf32> to vector<8x128xbf16>
    %cst_30 = arith.constant dense<0.000000e+00> : vector<8x384xf32>
    %62 = tpu.matmul %61, %13, %cst_30 {dimension_numbers = #tpu.dot_dimension_numbers<[1], [0], [0], [1], [0, 0, 1, 1], [], []>} : vector<8x128xbf16>, vector<128x384xbf16>, vector<8x384xf32> -> vector<8x384xf32>
    %63 = vector.extract_strided_slice %60 {offsets = [0, 0], sizes = [8, 128], strides = [1, 1]} : vector<8x384xf32> to vector<8x128xf32>
    %64 = vector.extract_strided_slice %62 {offsets = [0, 0], sizes = [8, 128], strides = [1, 1]} : vector<8x384xf32> to vector<8x128xf32>
    %65 = arith.addf %63, %64 : vector<8x128xf32>
    %66 = arith.negf %65 : vector<8x128xf32>
    %67 = math.exp %66 : vector<8x128xf32>
    %cst_31 = arith.constant 1.000000e+00 : f32
    %68 = vector.broadcast %cst_31 : f32 to vector<8x128xf32>
    %69 = arith.addf %68, %67 : vector<8x128xf32>
    %70 = arith.divf %68, %69 : vector<8x128xf32>
    %71 = vector.extract_strided_slice %60 {offsets = [0, 128], sizes = [8, 128], strides = [1, 1]} : vector<8x384xf32> to vector<8x128xf32>
    %72 = vector.extract_strided_slice %62 {offsets = [0, 128], sizes = [8, 128], strides = [1, 1]} : vector<8x384xf32> to vector<8x128xf32>
    %73 = arith.addf %71, %72 : vector<8x128xf32>
    %74 = arith.negf %73 : vector<8x128xf32>
    %75 = math.exp %74 : vector<8x128xf32>
    %cst_32 = arith.constant 1.000000e+00 : f32
    %76 = vector.broadcast %cst_32 : f32 to vector<8x128xf32>
    %77 = arith.addf %76, %75 : vector<8x128xf32>
    %78 = arith.divf %76, %77 : vector<8x128xf32>
    %79 = vector.extract_strided_slice %60 {offsets = [0, 256], sizes = [8, 128], strides = [1, 1]} : vector<8x384xf32> to vector<8x128xf32>
    %80 = vector.extract_strided_slice %62 {offsets = [0, 256], sizes = [8, 128], strides = [1, 1]} : vector<8x384xf32> to vector<8x128xf32>
    %81 = arith.addf %80, %17 : vector<8x128xf32>
    %82 = arith.mulf %70, %81 : vector<8x128xf32>
    %83 = arith.addf %79, %82 : vector<8x128xf32>
    %84 = math.tanh %83 : vector<8x128xf32>
    %cst_33 = arith.constant 1.000000e+00 : f32
    %85 = vector.broadcast %cst_33 : f32 to vector<8x128xf32>
    %86 = arith.subf %85, %78 : vector<8x128xf32>
    %87 = arith.mulf %86, %84 : vector<8x128xf32>
    %88 = arith.mulf %78, %53 : vector<8x128xf32>
    %89 = arith.addf %87, %88 : vector<8x128xf32>
    %90 = arith.index_cast %57 : i32 to index
    %c0_34 = arith.constant 0 : index
    %91 = vector.load %arg12[%90, %c0_34] : memref<64x128xf32, #tpu.memory_space<vmem>>, vector<8x128xf32>
    tpu.vector_store %arg12[%90, %c0_34], %89 {strides = array<i32>} : memref<64x128xf32, #tpu.memory_space<vmem>>, vector<8x128xf32>,
    %c2_i32 = arith.constant 2 : i32
    %c8_i32_35 = arith.constant 8 : i32
    %92 = arith.muli %c2_i32, %c8_i32_35 : i32
    %93 = tpu.assume_multiple %92, 8 : i32
    %94 = arith.index_cast %93 : i32 to index
    %c0_36 = arith.constant 0 : index
    %95 = vector.load %arg11[%94, %c0_36] : memref<64x384xf32, #tpu.memory_space<vmem>>, vector<8x384xf32>
    %96 = arith.addf %95, %7 : vector<8x384xf32>
    %97 = arith.truncf %89 : vector<8x128xf32> to vector<8x128xbf16>
    %cst_37 = arith.constant dense<0.000000e+00> : vector<8x384xf32>
    %98 = tpu.matmul %97, %13, %cst_37 {dimension_numbers = #tpu.dot_dimension_numbers<[1], [0], [0], [1], [0, 0, 1, 1], [], []>} : vector<8x128xbf16>, vector<128x384xbf16>, vector<8x384xf32> -> vector<8x384xf32>
    %99 = vector.extract_strided_slice %96 {offsets = [0, 0], sizes = [8, 128], strides = [1, 1]} : vector<8x384xf32> to vector<8x128xf32>
    %100 = vector.extract_strided_slice %98 {offsets = [0, 0], sizes = [8, 128], strides = [1, 1]} : vector<8x384xf32> to vector<8x128xf32>
    %101 = arith.addf %99, %100 : vector<8x128xf32>
    %102 = arith.negf %101 : vector<8x128xf32>
    %103 = math.exp %102 : vector<8x128xf32>
    %cst_38 = arith.constant 1.000000e+00 : f32
    %104 = vector.broadcast %cst_38 : f32 to vector<8x128xf32>
    %105 = arith.addf %104, %103 : vector<8x128xf32>
    %106 = arith.divf %104, %105 : vector<8x128xf32>
    %107 = vector.extract_strided_slice %96 {offsets = [0, 128], sizes = [8, 128], strides = [1, 1]} : vector<8x384xf32> to vector<8x128xf32>
    %108 = vector.extract_strided_slice %98 {offsets = [0, 128], sizes = [8, 128], strides = [1, 1]} : vector<8x384xf32> to vector<8x128xf32>
    %109 = arith.addf %107, %108 : vector<8x128xf32>
    %110 = arith.negf %109 : vector<8x128xf32>
    %111 = math.exp %110 : vector<8x128xf32>
    %cst_39 = arith.constant 1.000000e+00 : f32
    %112 = vector.broadcast %cst_39 : f32 to vector<8x128xf32>
    %113 = arith.addf %112, %111 : vector<8x128xf32>
    %114 = arith.divf %112, %113 : vector<8x128xf32>
    %115 = vector.extract_strided_slice %96 {offsets = [0, 256], sizes = [8, 128], strides = [1, 1]} : vector<8x384xf32> to vector<8x128xf32>
    %116 = vector.extract_strided_slice %98 {offsets = [0, 256], sizes = [8, 128], strides = [1, 1]} : vector<8x384xf32> to vector<8x128xf32>
    %117 = arith.addf %116, %17 : vector<8x128xf32>
    %118 = arith.mulf %106, %117 : vector<8x128xf32>
    %119 = arith.addf %115, %118 : vector<8x128xf32>
    %120 = math.tanh %119 : vector<8x128xf32>
    %cst_40 = arith.constant 1.000000e+00 : f32
    %121 = vector.broadcast %cst_40 : f32 to vector<8x128xf32>
    %122 = arith.subf %121, %114 : vector<8x128xf32>
    %123 = arith.mulf %122, %120 : vector<8x128xf32>
    %124 = arith.mulf %114, %89 : vector<8x128xf32>
    %125 = arith.addf %123, %124 : vector<8x128xf32>
    %126 = arith.index_cast %93 : i32 to index
    %c0_41 = arith.constant 0 : index
    %127 = vector.load %arg12[%126, %c0_41] : memref<64x128xf32, #tpu.memory_space<vmem>>, vector<8x128xf32>
    tpu.vector_store %arg12[%126, %c0_41], %125 {strides = array<i32>} : memref<64x128xf32, #tpu.memory_space<vmem>>, vector<8x128xf32>,
    %c3_i32 = arith.constant 3 : i32
    %c8_i32_42 = arith.constant 8 : i32
    %128 = arith.muli %c3_i32, %c8_i32_42 : i32
    %129 = tpu.assume_multiple %128, 8 : i32
    %130 = arith.index_cast %129 : i32 to index
    %c0_43 = arith.constant 0 : index
    %131 = vector.load %arg11[%130, %c0_43] : memref<64x384xf32, #tpu.memory_space<vmem>>, vector<8x384xf32>
    %132 = arith.addf %131, %7 : vector<8x384xf32>
    %133 = arith.truncf %125 : vector<8x128xf32> to vector<8x128xbf16>
    %cst_44 = arith.constant dense<0.000000e+00> : vector<8x384xf32>
    %134 = tpu.matmul %133, %13, %cst_44 {dimension_numbers = #tpu.dot_dimension_numbers<[1], [0], [0], [1], [0, 0, 1, 1], [], []>} : vector<8x128xbf16>, vector<128x384xbf16>, vector<8x384xf32> -> vector<8x384xf32>
    %135 = vector.extract_strided_slice %132 {offsets = [0, 0], sizes = [8, 128], strides = [1, 1]} : vector<8x384xf32> to vector<8x128xf32>
    %136 = vector.extract_strided_slice %134 {offsets = [0, 0], sizes = [8, 128], strides = [1, 1]} : vector<8x384xf32> to vector<8x128xf32>
    %137 = arith.addf %135, %136 : vector<8x128xf32>
    %138 = arith.negf %137 : vector<8x128xf32>
    %139 = math.exp %138 : vector<8x128xf32>
    %cst_45 = arith.constant 1.000000e+00 : f32
    %140 = vector.broadcast %cst_45 : f32 to vector<8x128xf32>
    %141 = arith.addf %140, %139 : vector<8x128xf32>
    %142 = arith.divf %140, %141 : vector<8x128xf32>
    %143 = vector.extract_strided_slice %132 {offsets = [0, 128], sizes = [8, 128], strides = [1, 1]} : vector<8x384xf32> to vector<8x128xf32>
    %144 = vector.extract_strided_slice %134 {offsets = [0, 128], sizes = [8, 128], strides = [1, 1]} : vector<8x384xf32> to vector<8x128xf32>
    %145 = arith.addf %143, %144 : vector<8x128xf32>
    %146 = arith.negf %145 : vector<8x128xf32>
    %147 = math.exp %146 : vector<8x128xf32>
    %cst_46 = arith.constant 1.000000e+00 : f32
    %148 = vector.broadcast %cst_46 : f32 to vector<8x128xf32>
    %149 = arith.addf %148, %147 : vector<8x128xf32>
    %150 = arith.divf %148, %149 : vector<8x128xf32>
    %151 = vector.extract_strided_slice %132 {offsets = [0, 256], sizes = [8, 128], strides = [1, 1]} : vector<8x384xf32> to vector<8x128xf32>
    %152 = vector.extract_strided_slice %134 {offsets = [0, 256], sizes = [8, 128], strides = [1, 1]} : vector<8x384xf32> to vector<8x128xf32>
    %153 = arith.addf %152, %17 : vector<8x128xf32>
    %154 = arith.mulf %142, %153 : vector<8x128xf32>
    %155 = arith.addf %151, %154 : vector<8x128xf32>
    %156 = math.tanh %155 : vector<8x128xf32>
    %cst_47 = arith.constant 1.000000e+00 : f32
    %157 = vector.broadcast %cst_47 : f32 to vector<8x128xf32>
    %158 = arith.subf %157, %150 : vector<8x128xf32>
    %159 = arith.mulf %158, %156 : vector<8x128xf32>
    %160 = arith.mulf %150, %125 : vector<8x128xf32>
    %161 = arith.addf %159, %160 : vector<8x128xf32>
    %162 = arith.index_cast %129 : i32 to index
    %c0_48 = arith.constant 0 : index
    %163 = vector.load %arg12[%162, %c0_48] : memref<64x128xf32, #tpu.memory_space<vmem>>, vector<8x128xf32>
    tpu.vector_store %arg12[%162, %c0_48], %161 {strides = array<i32>} : memref<64x128xf32, #tpu.memory_space<vmem>>, vector<8x128xf32>,
    %c4_i32 = arith.constant 4 : i32
    %c8_i32_49 = arith.constant 8 : i32
    %164 = arith.muli %c4_i32, %c8_i32_49 : i32
    %165 = tpu.assume_multiple %164, 8 : i32
    %166 = arith.index_cast %165 : i32 to index
    %c0_50 = arith.constant 0 : index
    %167 = vector.load %arg11[%166, %c0_50] : memref<64x384xf32, #tpu.memory_space<vmem>>, vector<8x384xf32>
    %168 = arith.addf %167, %7 : vector<8x384xf32>
    %169 = arith.truncf %161 : vector<8x128xf32> to vector<8x128xbf16>
    %cst_51 = arith.constant dense<0.000000e+00> : vector<8x384xf32>
    %170 = tpu.matmul %169, %13, %cst_51 {dimension_numbers = #tpu.dot_dimension_numbers<[1], [0], [0], [1], [0, 0, 1, 1], [], []>} : vector<8x128xbf16>, vector<128x384xbf16>, vector<8x384xf32> -> vector<8x384xf32>
    %171 = vector.extract_strided_slice %168 {offsets = [0, 0], sizes = [8, 128], strides = [1, 1]} : vector<8x384xf32> to vector<8x128xf32>
    %172 = vector.extract_strided_slice %170 {offsets = [0, 0], sizes = [8, 128], strides = [1, 1]} : vector<8x384xf32> to vector<8x128xf32>
    %173 = arith.addf %171, %172 : vector<8x128xf32>
    %174 = arith.negf %173 : vector<8x128xf32>
    %175 = math.exp %174 : vector<8x128xf32>
    %cst_52 = arith.constant 1.000000e+00 : f32
    %176 = vector.broadcast %cst_52 : f32 to vector<8x128xf32>
    %177 = arith.addf %176, %175 : vector<8x128xf32>
    %178 = arith.divf %176, %177 : vector<8x128xf32>
    %179 = vector.extract_strided_slice %168 {offsets = [0, 128], sizes = [8, 128], strides = [1, 1]} : vector<8x384xf32> to vector<8x128xf32>
    %180 = vector.extract_strided_slice %170 {offsets = [0, 128], sizes = [8, 128], strides = [1, 1]} : vector<8x384xf32> to vector<8x128xf32>
    %181 = arith.addf %179, %180 : vector<8x128xf32>
    %182 = arith.negf %181 : vector<8x128xf32>
    %183 = math.exp %182 : vector<8x128xf32>
    %cst_53 = arith.constant 1.000000e+00 : f32
    %184 = vector.broadcast %cst_53 : f32 to vector<8x128xf32>
    %185 = arith.addf %184, %183 : vector<8x128xf32>
    %186 = arith.divf %184, %185 : vector<8x128xf32>
    %187 = vector.extract_strided_slice %168 {offsets = [0, 256], sizes = [8, 128], strides = [1, 1]} : vector<8x384xf32> to vector<8x128xf32>
    %188 = vector.extract_strided_slice %170 {offsets = [0, 256], sizes = [8, 128], strides = [1, 1]} : vector<8x384xf32> to vector<8x128xf32>
    %189 = arith.addf %188, %17 : vector<8x128xf32>
    %190 = arith.mulf %178, %189 : vector<8x128xf32>
    %191 = arith.addf %187, %190 : vector<8x128xf32>
    %192 = math.tanh %191 : vector<8x128xf32>
    %cst_54 = arith.constant 1.000000e+00 : f32
    %193 = vector.broadcast %cst_54 : f32 to vector<8x128xf32>
    %194 = arith.subf %193, %186 : vector<8x128xf32>
    %195 = arith.mulf %194, %192 : vector<8x128xf32>
    %196 = arith.mulf %186, %161 : vector<8x128xf32>
    %197 = arith.addf %195, %196 : vector<8x128xf32>
    %198 = arith.index_cast %165 : i32 to index
    %c0_55 = arith.constant 0 : index
    %199 = vector.load %arg12[%198, %c0_55] : memref<64x128xf32, #tpu.memory_space<vmem>>, vector<8x128xf32>
    tpu.vector_store %arg12[%198, %c0_55], %197 {strides = array<i32>} : memref<64x128xf32, #tpu.memory_space<vmem>>, vector<8x128xf32>,
    %c5_i32 = arith.constant 5 : i32
    %c8_i32_56 = arith.constant 8 : i32
    %200 = arith.muli %c5_i32, %c8_i32_56 : i32
    %201 = tpu.assume_multiple %200, 8 : i32
    %202 = arith.index_cast %201 : i32 to index
    %c0_57 = arith.constant 0 : index
    %203 = vector.load %arg11[%202, %c0_57] : memref<64x384xf32, #tpu.memory_space<vmem>>, vector<8x384xf32>
    %204 = arith.addf %203, %7 : vector<8x384xf32>
    %205 = arith.truncf %197 : vector<8x128xf32> to vector<8x128xbf16>
    %cst_58 = arith.constant dense<0.000000e+00> : vector<8x384xf32>
    %206 = tpu.matmul %205, %13, %cst_58 {dimension_numbers = #tpu.dot_dimension_numbers<[1], [0], [0], [1], [0, 0, 1, 1], [], []>} : vector<8x128xbf16>, vector<128x384xbf16>, vector<8x384xf32> -> vector<8x384xf32>
    %207 = vector.extract_strided_slice %204 {offsets = [0, 0], sizes = [8, 128], strides = [1, 1]} : vector<8x384xf32> to vector<8x128xf32>
    %208 = vector.extract_strided_slice %206 {offsets = [0, 0], sizes = [8, 128], strides = [1, 1]} : vector<8x384xf32> to vector<8x128xf32>
    %209 = arith.addf %207, %208 : vector<8x128xf32>
    %210 = arith.negf %209 : vector<8x128xf32>
    %211 = math.exp %210 : vector<8x128xf32>
    %cst_59 = arith.constant 1.000000e+00 : f32
    %212 = vector.broadcast %cst_59 : f32 to vector<8x128xf32>
    %213 = arith.addf %212, %211 : vector<8x128xf32>
    %214 = arith.divf %212, %213 : vector<8x128xf32>
    %215 = vector.extract_strided_slice %204 {offsets = [0, 128], sizes = [8, 128], strides = [1, 1]} : vector<8x384xf32> to vector<8x128xf32>
    %216 = vector.extract_strided_slice %206 {offsets = [0, 128], sizes = [8, 128], strides = [1, 1]} : vector<8x384xf32> to vector<8x128xf32>
    %217 = arith.addf %215, %216 : vector<8x128xf32>
    %218 = arith.negf %217 : vector<8x128xf32>
    %219 = math.exp %218 : vector<8x128xf32>
    %cst_60 = arith.constant 1.000000e+00 : f32
    %220 = vector.broadcast %cst_60 : f32 to vector<8x128xf32>
    %221 = arith.addf %220, %219 : vector<8x128xf32>
    %222 = arith.divf %220, %221 : vector<8x128xf32>
    %223 = vector.extract_strided_slice %204 {offsets = [0, 256], sizes = [8, 128], strides = [1, 1]} : vector<8x384xf32> to vector<8x128xf32>
    %224 = vector.extract_strided_slice %206 {offsets = [0, 256], sizes = [8, 128], strides = [1, 1]} : vector<8x384xf32> to vector<8x128xf32>
    %225 = arith.addf %224, %17 : vector<8x128xf32>
    %226 = arith.mulf %214, %225 : vector<8x128xf32>
    %227 = arith.addf %223, %226 : vector<8x128xf32>
    %228 = math.tanh %227 : vector<8x128xf32>
    %cst_61 = arith.constant 1.000000e+00 : f32
    %229 = vector.broadcast %cst_61 : f32 to vector<8x128xf32>
    %230 = arith.subf %229, %222 : vector<8x128xf32>
    %231 = arith.mulf %230, %228 : vector<8x128xf32>
    %232 = arith.mulf %222, %197 : vector<8x128xf32>
    %233 = arith.addf %231, %232 : vector<8x128xf32>
    %234 = arith.index_cast %201 : i32 to index
    %c0_62 = arith.constant 0 : index
    %235 = vector.load %arg12[%234, %c0_62] : memref<64x128xf32, #tpu.memory_space<vmem>>, vector<8x128xf32>
    tpu.vector_store %arg12[%234, %c0_62], %233 {strides = array<i32>} : memref<64x128xf32, #tpu.memory_space<vmem>>, vector<8x128xf32>,
    %c6_i32 = arith.constant 6 : i32
    %c8_i32_63 = arith.constant 8 : i32
    %236 = arith.muli %c6_i32, %c8_i32_63 : i32
    %237 = tpu.assume_multiple %236, 8 : i32
    %238 = arith.index_cast %237 : i32 to index
    %c0_64 = arith.constant 0 : index
    %239 = vector.load %arg11[%238, %c0_64] : memref<64x384xf32, #tpu.memory_space<vmem>>, vector<8x384xf32>
    %240 = arith.addf %239, %7 : vector<8x384xf32>
    %241 = arith.truncf %233 : vector<8x128xf32> to vector<8x128xbf16>
    %cst_65 = arith.constant dense<0.000000e+00> : vector<8x384xf32>
    %242 = tpu.matmul %241, %13, %cst_65 {dimension_numbers = #tpu.dot_dimension_numbers<[1], [0], [0], [1], [0, 0, 1, 1], [], []>} : vector<8x128xbf16>, vector<128x384xbf16>, vector<8x384xf32> -> vector<8x384xf32>
    %243 = vector.extract_strided_slice %240 {offsets = [0, 0], sizes = [8, 128], strides = [1, 1]} : vector<8x384xf32> to vector<8x128xf32>
    %244 = vector.extract_strided_slice %242 {offsets = [0, 0], sizes = [8, 128], strides = [1, 1]} : vector<8x384xf32> to vector<8x128xf32>
    %245 = arith.addf %243, %244 : vector<8x128xf32>
    %246 = arith.negf %245 : vector<8x128xf32>
    %247 = math.exp %246 : vector<8x128xf32>
    %cst_66 = arith.constant 1.000000e+00 : f32
    %248 = vector.broadcast %cst_66 : f32 to vector<8x128xf32>
    %249 = arith.addf %248, %247 : vector<8x128xf32>
    %250 = arith.divf %248, %249 : vector<8x128xf32>
    %251 = vector.extract_strided_slice %240 {offsets = [0, 128], sizes = [8, 128], strides = [1, 1]} : vector<8x384xf32> to vector<8x128xf32>
    %252 = vector.extract_strided_slice %242 {offsets = [0, 128], sizes = [8, 128], strides = [1, 1]} : vector<8x384xf32> to vector<8x128xf32>
    %253 = arith.addf %251, %252 : vector<8x128xf32>
    %254 = arith.negf %253 : vector<8x128xf32>
    %255 = math.exp %254 : vector<8x128xf32>
    %cst_67 = arith.constant 1.000000e+00 : f32
    %256 = vector.broadcast %cst_67 : f32 to vector<8x128xf32>
    %257 = arith.addf %256, %255 : vector<8x128xf32>
    %258 = arith.divf %256, %257 : vector<8x128xf32>
    %259 = vector.extract_strided_slice %240 {offsets = [0, 256], sizes = [8, 128], strides = [1, 1]} : vector<8x384xf32> to vector<8x128xf32>
    %260 = vector.extract_strided_slice %242 {offsets = [0, 256], sizes = [8, 128], strides = [1, 1]} : vector<8x384xf32> to vector<8x128xf32>
    %261 = arith.addf %260, %17 : vector<8x128xf32>
    %262 = arith.mulf %250, %261 : vector<8x128xf32>
    %263 = arith.addf %259, %262 : vector<8x128xf32>
    %264 = math.tanh %263 : vector<8x128xf32>
    %cst_68 = arith.constant 1.000000e+00 : f32
    %265 = vector.broadcast %cst_68 : f32 to vector<8x128xf32>
    %266 = arith.subf %265, %258 : vector<8x128xf32>
    %267 = arith.mulf %266, %264 : vector<8x128xf32>
    %268 = arith.mulf %258, %233 : vector<8x128xf32>
    %269 = arith.addf %267, %268 : vector<8x128xf32>
    %270 = arith.index_cast %237 : i32 to index
    %c0_69 = arith.constant 0 : index
    %271 = vector.load %arg12[%270, %c0_69] : memref<64x128xf32, #tpu.memory_space<vmem>>, vector<8x128xf32>
    tpu.vector_store %arg12[%270, %c0_69], %269 {strides = array<i32>} : memref<64x128xf32, #tpu.memory_space<vmem>>, vector<8x128xf32>,
    %c7_i32 = arith.constant 7 : i32
    %c8_i32_70 = arith.constant 8 : i32
    %272 = arith.muli %c7_i32, %c8_i32_70 : i32
    %273 = tpu.assume_multiple %272, 8 : i32
    %274 = arith.index_cast %273 : i32 to index
    %c0_71 = arith.constant 0 : index
    %275 = vector.load %arg11[%274, %c0_71] : memref<64x384xf32, #tpu.memory_space<vmem>>, vector<8x384xf32>
    %276 = arith.addf %275, %7 : vector<8x384xf32>
    %277 = arith.truncf %269 : vector<8x128xf32> to vector<8x128xbf16>
    %cst_72 = arith.constant dense<0.000000e+00> : vector<8x384xf32>
    %278 = tpu.matmul %277, %13, %cst_72 {dimension_numbers = #tpu.dot_dimension_numbers<[1], [0], [0], [1], [0, 0, 1, 1], [], []>} : vector<8x128xbf16>, vector<128x384xbf16>, vector<8x384xf32> -> vector<8x384xf32>
    %279 = vector.extract_strided_slice %276 {offsets = [0, 0], sizes = [8, 128], strides = [1, 1]} : vector<8x384xf32> to vector<8x128xf32>
    %280 = vector.extract_strided_slice %278 {offsets = [0, 0], sizes = [8, 128], strides = [1, 1]} : vector<8x384xf32> to vector<8x128xf32>
    %281 = arith.addf %279, %280 : vector<8x128xf32>
    %282 = arith.negf %281 : vector<8x128xf32>
    %283 = math.exp %282 : vector<8x128xf32>
    %cst_73 = arith.constant 1.000000e+00 : f32
    %284 = vector.broadcast %cst_73 : f32 to vector<8x128xf32>
    %285 = arith.addf %284, %283 : vector<8x128xf32>
    %286 = arith.divf %284, %285 : vector<8x128xf32>
    %287 = vector.extract_strided_slice %276 {offsets = [0, 128], sizes = [8, 128], strides = [1, 1]} : vector<8x384xf32> to vector<8x128xf32>
    %288 = vector.extract_strided_slice %278 {offsets = [0, 128], sizes = [8, 128], strides = [1, 1]} : vector<8x384xf32> to vector<8x128xf32>
    %289 = arith.addf %287, %288 : vector<8x128xf32>
    %290 = arith.negf %289 : vector<8x128xf32>
    %291 = math.exp %290 : vector<8x128xf32>
    %cst_74 = arith.constant 1.000000e+00 : f32
    %292 = vector.broadcast %cst_74 : f32 to vector<8x128xf32>
    %293 = arith.addf %292, %291 : vector<8x128xf32>
    %294 = arith.divf %292, %293 : vector<8x128xf32>
    %295 = vector.extract_strided_slice %276 {offsets = [0, 256], sizes = [8, 128], strides = [1, 1]} : vector<8x384xf32> to vector<8x128xf32>
    %296 = vector.extract_strided_slice %278 {offsets = [0, 256], sizes = [8, 128], strides = [1, 1]} : vector<8x384xf32> to vector<8x128xf32>
    %297 = arith.addf %296, %17 : vector<8x128xf32>
    %298 = arith.mulf %286, %297 : vector<8x128xf32>
    %299 = arith.addf %295, %298 : vector<8x128xf32>
    %300 = math.tanh %299 : vector<8x128xf32>
    %cst_75 = arith.constant 1.000000e+00 : f32
    %301 = vector.broadcast %cst_75 : f32 to vector<8x128xf32>
    %302 = arith.subf %301, %294 : vector<8x128xf32>
    %303 = arith.mulf %302, %300 : vector<8x128xf32>
    %304 = arith.mulf %294, %269 : vector<8x128xf32>
    %305 = arith.addf %303, %304 : vector<8x128xf32>
    %306 = arith.index_cast %273 : i32 to index
    %c0_76 = arith.constant 0 : index
    %307 = vector.load %arg12[%306, %c0_76] : memref<64x128xf32, #tpu.memory_space<vmem>>, vector<8x128xf32>
    tpu.vector_store %arg12[%306, %c0_76], %305 {strides = array<i32>} : memref<64x128xf32, #tpu.memory_space<vmem>>, vector<8x128xf32>,
    %c8_i32_77 = arith.constant 8 : i32
    %c0_78 = arith.constant 0 : index
    %c0_79 = arith.constant 0 : index
    %c0_80 = arith.constant 0 : index
    %308 = vector.load %arg10[%c0_78, %c0_79, %c0_80] : memref<2x8x128xf32, #tpu.memory_space<vmem>>, vector<1x8x128xf32>
    %309 = vector.shape_cast %308 : vector<1x8x128xf32> to vector<8x128xf32>
    %310 = vector.shape_cast %305 : vector<8x128xf32> to vector<1x8x128xf32>
    tpu.vector_store %arg10[%c0_78, %c0_79, %c0_80], %310 {strides = array<i32>} : memref<2x8x128xf32, #tpu.memory_space<vmem>>, vector<1x8x128xf32>,
    %c0_81 = arith.constant 0 : index
    %c0_82 = arith.constant 0 : index
    %311 = vector.load %arg12[%c0_81, %c0_82] : memref<64x128xf32, #tpu.memory_space<vmem>>, vector<64x128xf32>
    %312 = arith.truncf %311 : vector<64x128xf32> to vector<64x128xbf16>
    %c0_83 = arith.constant 0 : index
    %c0_84 = arith.constant 0 : index
    %c0_85 = arith.constant 0 : index
    %313 = vector.load %arg5[%c0_83, %c0_84, %c0_85] : memref<1x128x384xbf16, #tpu.memory_space<vmem>>, vector<1x128x384xbf16>
    %314 = vector.shape_cast %313 : vector<1x128x384xbf16> to vector<128x384xbf16>
    %cst_86 = arith.constant dense<0.000000e+00> : vector<64x384xf32>
    %315 = tpu.matmul %312, %314, %cst_86 {dimension_numbers = #tpu.dot_dimension_numbers<[1], [0], [0], [1], [0, 0, 1, 1], [], []>} : vector<64x128xbf16>, vector<128x384xbf16>, vector<64x384xf32> -> vector<64x384xf32>
    %c1 = arith.constant 1 : index
    %c0_87 = arith.constant 0 : index
    %c0_88 = arith.constant 0 : index
    %316 = vector.load %arg7[%c1, %c0_87, %c0_88] : memref<2x1x384xf32, #tpu.memory_space<vmem>>, vector<1x1x384xf32>
    %317 = vector.shape_cast %316 : vector<1x1x384xf32> to vector<1x384xf32>
    %318 = vector.broadcast %317 : vector<1x384xf32> to vector<64x384xf32>
    %319 = arith.addf %315, %318 : vector<64x384xf32>
    %c0_89 = arith.constant 0 : index
    %c0_90 = arith.constant 0 : index
    %320 = vector.load %arg11[%c0_89, %c0_90] : memref<64x384xf32, #tpu.memory_space<vmem>>, vector<64x384xf32>
    tpu.vector_store %arg11[%c0_89, %c0_90], %319 {strides = array<i32>} : memref<64x384xf32, #tpu.memory_space<vmem>>, vector<64x384xf32>,
    %c1_91 = arith.constant 1 : index
    %c0_92 = arith.constant 0 : index
    %c0_93 = arith.constant 0 : index
    %321 = vector.load %arg6[%c1_91, %c0_92, %c0_93] : memref<2x128x384xbf16, #tpu.memory_space<vmem>>, vector<1x128x384xbf16>
    %322 = vector.shape_cast %321 : vector<1x128x384xbf16> to vector<128x384xbf16>
    %c1_94 = arith.constant 1 : index
    %c0_95 = arith.constant 0 : index
    %c0_96 = arith.constant 0 : index
    %323 = vector.load %arg8[%c1_94, %c0_95, %c0_96] : memref<2x1x128xf32, #tpu.memory_space<vmem>>, vector<1x1x128xf32>
    %324 = vector.shape_cast %323 : vector<1x1x128xf32> to vector<1x128xf32>
    %325 = vector.shape_cast %324 : vector<1x128xf32> to vector<1x128xf32>
    %326 = vector.broadcast %325 : vector<1x128xf32> to vector<8x128xf32>
    %c1_97 = arith.constant 1 : index
    %c0_98 = arith.constant 0 : index
    %c0_99 = arith.constant 0 : index
    %327 = vector.load %arg2[%c1_97, %c0_98, %c0_99] : memref<2x8x128xf32, #tpu.memory_space<vmem>>, vector<1x8x128xf32>
    %328 = vector.shape_cast %327 : vector<1x8x128xf32> to vector<8x128xf32>
    %c0_i32_100 = arith.constant 0 : i32
    %c8_i32_101 = arith.constant 8 : i32
    %329 = arith.muli %c0_i32_100, %c8_i32_101 : i32
    %330 = tpu.assume_multiple %329, 8 : i32
    %331 = arith.index_cast %330 : i32 to index
    %c0_102 = arith.constant 0 : index
    %332 = vector.load %arg11[%331, %c0_102] : memref<64x384xf32, #tpu.memory_space<vmem>>, vector<8x384xf32>
    %333 = arith.truncf %328 : vector<8x128xf32> to vector<8x128xbf16>
    %cst_103 = arith.constant dense<0.000000e+00> : vector<8x384xf32>
    %334 = tpu.matmul %333, %322, %cst_103 {dimension_numbers = #tpu.dot_dimension_numbers<[1], [0], [0], [1], [0, 0, 1, 1], [], []>} : vector<8x128xbf16>, vector<128x384xbf16>, vector<8x384xf32> -> vector<8x384xf32>
    %335 = vector.extract_strided_slice %332 {offsets = [0, 0], sizes = [8, 128], strides = [1, 1]} : vector<8x384xf32> to vector<8x128xf32>
    %336 = vector.extract_strided_slice %334 {offsets = [0, 0], sizes = [8, 128], strides = [1, 1]} : vector<8x384xf32> to vector<8x128xf32>
    %337 = arith.addf %335, %336 : vector<8x128xf32>
    %338 = arith.negf %337 : vector<8x128xf32>
    %339 = math.exp %338 : vector<8x128xf32>
    %cst_104 = arith.constant 1.000000e+00 : f32
    %340 = vector.broadcast %cst_104 : f32 to vector<8x128xf32>
    %341 = arith.addf %340, %339 : vector<8x128xf32>
    %342 = arith.divf %340, %341 : vector<8x128xf32>
    %343 = vector.extract_strided_slice %332 {offsets = [0, 128], sizes = [8, 128], strides = [1, 1]} : vector<8x384xf32> to vector<8x128xf32>
    %344 = vector.extract_strided_slice %334 {offsets = [0, 128], sizes = [8, 128], strides = [1, 1]} : vector<8x384xf32> to vector<8x128xf32>
    %345 = arith.addf %343, %344 : vector<8x128xf32>
    %346 = arith.negf %345 : vector<8x128xf32>
    %347 = math.exp %346 : vector<8x128xf32>
    %cst_105 = arith.constant 1.000000e+00 : f32
    %348 = vector.broadcast %cst_105 : f32 to vector<8x128xf32>
    %349 = arith.addf %348, %347 : vector<8x128xf32>
    %350 = arith.divf %348, %349 : vector<8x128xf32>
    %351 = vector.extract_strided_slice %332 {offsets = [0, 256], sizes = [8, 128], strides = [1, 1]} : vector<8x384xf32> to vector<8x128xf32>
    %352 = vector.extract_strided_slice %334 {offsets = [0, 256], sizes = [8, 128], strides = [1, 1]} : vector<8x384xf32> to vector<8x128xf32>
    %353 = arith.addf %352, %326 : vector<8x128xf32>
    %354 = arith.mulf %342, %353 : vector<8x128xf32>
    %355 = arith.addf %351, %354 : vector<8x128xf32>
    %356 = math.tanh %355 : vector<8x128xf32>
    %cst_106 = arith.constant 1.000000e+00 : f32
    %357 = vector.broadcast %cst_106 : f32 to vector<8x128xf32>
    %358 = arith.subf %357, %350 : vector<8x128xf32>
    %359 = arith.mulf %358, %356 : vector<8x128xf32>
    %360 = arith.mulf %350, %328 : vector<8x128xf32>
    %361 = arith.addf %359, %360 : vector<8x128xf32>
    %362 = arith.index_cast %330 : i32 to index
    %c0_107 = arith.constant 0 : index
    %363 = vector.load %arg12[%362, %c0_107] : memref<64x128xf32, #tpu.memory_space<vmem>>, vector<8x128xf32>
    tpu.vector_store %arg12[%362, %c0_107], %361 {strides = array<i32>} : memref<64x128xf32, #tpu.memory_space<vmem>>, vector<8x128xf32>,
    %c1_i32_108 = arith.constant 1 : i32
    %c8_i32_109 = arith.constant 8 : i32
    %364 = arith.muli %c1_i32_108, %c8_i32_109 : i32
    %365 = tpu.assume_multiple %364, 8 : i32
    %366 = arith.index_cast %365 : i32 to index
    %c0_110 = arith.constant 0 : index
    %367 = vector.load %arg11[%366, %c0_110] : memref<64x384xf32, #tpu.memory_space<vmem>>, vector<8x384xf32>
    %368 = arith.truncf %361 : vector<8x128xf32> to vector<8x128xbf16>
    %cst_111 = arith.constant dense<0.000000e+00> : vector<8x384xf32>
    %369 = tpu.matmul %368, %322, %cst_111 {dimension_numbers = #tpu.dot_dimension_numbers<[1], [0], [0], [1], [0, 0, 1, 1], [], []>} : vector<8x128xbf16>, vector<128x384xbf16>, vector<8x384xf32> -> vector<8x384xf32>
    %370 = vector.extract_strided_slice %367 {offsets = [0, 0], sizes = [8, 128], strides = [1, 1]} : vector<8x384xf32> to vector<8x128xf32>
    %371 = vector.extract_strided_slice %369 {offsets = [0, 0], sizes = [8, 128], strides = [1, 1]} : vector<8x384xf32> to vector<8x128xf32>
    %372 = arith.addf %370, %371 : vector<8x128xf32>
    %373 = arith.negf %372 : vector<8x128xf32>
    %374 = math.exp %373 : vector<8x128xf32>
    %cst_112 = arith.constant 1.000000e+00 : f32
    %375 = vector.broadcast %cst_112 : f32 to vector<8x128xf32>
    %376 = arith.addf %375, %374 : vector<8x128xf32>
    %377 = arith.divf %375, %376 : vector<8x128xf32>
    %378 = vector.extract_strided_slice %367 {offsets = [0, 128], sizes = [8, 128], strides = [1, 1]} : vector<8x384xf32> to vector<8x128xf32>
    %379 = vector.extract_strided_slice %369 {offsets = [0, 128], sizes = [8, 128], strides = [1, 1]} : vector<8x384xf32> to vector<8x128xf32>
    %380 = arith.addf %378, %379 : vector<8x128xf32>
    %381 = arith.negf %380 : vector<8x128xf32>
    %382 = math.exp %381 : vector<8x128xf32>
    %cst_113 = arith.constant 1.000000e+00 : f32
    %383 = vector.broadcast %cst_113 : f32 to vector<8x128xf32>
    %384 = arith.addf %383, %382 : vector<8x128xf32>
    %385 = arith.divf %383, %384 : vector<8x128xf32>
    %386 = vector.extract_strided_slice %367 {offsets = [0, 256], sizes = [8, 128], strides = [1, 1]} : vector<8x384xf32> to vector<8x128xf32>
    %387 = vector.extract_strided_slice %369 {offsets = [0, 256], sizes = [8, 128], strides = [1, 1]} : vector<8x384xf32> to vector<8x128xf32>
    %388 = arith.addf %387, %326 : vector<8x128xf32>
    %389 = arith.mulf %377, %388 : vector<8x128xf32>
    %390 = arith.addf %386, %389 : vector<8x128xf32>
    %391 = math.tanh %390 : vector<8x128xf32>
    %cst_114 = arith.constant 1.000000e+00 : f32
    %392 = vector.broadcast %cst_114 : f32 to vector<8x128xf32>
    %393 = arith.subf %392, %385 : vector<8x128xf32>
    %394 = arith.mulf %393, %391 : vector<8x128xf32>
    %395 = arith.mulf %385, %361 : vector<8x128xf32>
    %396 = arith.addf %394, %395 : vector<8x128xf32>
    %397 = arith.index_cast %365 : i32 to index
    %c0_115 = arith.constant 0 : index
    %398 = vector.load %arg12[%397, %c0_115] : memref<64x128xf32, #tpu.memory_space<vmem>>, vector<8x128xf32>
    tpu.vector_store %arg12[%397, %c0_115], %396 {strides = array<i32>} : memref<64x128xf32, #tpu.memory_space<vmem>>, vector<8x128xf32>,
    %c2_i32_116 = arith.constant 2 : i32
    %c8_i32_117 = arith.constant 8 : i32
    %399 = arith.muli %c2_i32_116, %c8_i32_117 : i32
    %400 = tpu.assume_multiple %399, 8 : i32
    %401 = arith.index_cast %400 : i32 to index
    %c0_118 = arith.constant 0 : index
    %402 = vector.load %arg11[%401, %c0_118] : memref<64x384xf32, #tpu.memory_space<vmem>>, vector<8x384xf32>
    %403 = arith.truncf %396 : vector<8x128xf32> to vector<8x128xbf16>
    %cst_119 = arith.constant dense<0.000000e+00> : vector<8x384xf32>
    %404 = tpu.matmul %403, %322, %cst_119 {dimension_numbers = #tpu.dot_dimension_numbers<[1], [0], [0], [1], [0, 0, 1, 1], [], []>} : vector<8x128xbf16>, vector<128x384xbf16>, vector<8x384xf32> -> vector<8x384xf32>
    %405 = vector.extract_strided_slice %402 {offsets = [0, 0], sizes = [8, 128], strides = [1, 1]} : vector<8x384xf32> to vector<8x128xf32>
    %406 = vector.extract_strided_slice %404 {offsets = [0, 0], sizes = [8, 128], strides = [1, 1]} : vector<8x384xf32> to vector<8x128xf32>
    %407 = arith.addf %405, %406 : vector<8x128xf32>
    %408 = arith.negf %407 : vector<8x128xf32>
    %409 = math.exp %408 : vector<8x128xf32>
    %cst_120 = arith.constant 1.000000e+00 : f32
    %410 = vector.broadcast %cst_120 : f32 to vector<8x128xf32>
    %411 = arith.addf %410, %409 : vector<8x128xf32>
    %412 = arith.divf %410, %411 : vector<8x128xf32>
    %413 = vector.extract_strided_slice %402 {offsets = [0, 128], sizes = [8, 128], strides = [1, 1]} : vector<8x384xf32> to vector<8x128xf32>
    %414 = vector.extract_strided_slice %404 {offsets = [0, 128], sizes = [8, 128], strides = [1, 1]} : vector<8x384xf32> to vector<8x128xf32>
    %415 = arith.addf %413, %414 : vector<8x128xf32>
    %416 = arith.negf %415 : vector<8x128xf32>
    %417 = math.exp %416 : vector<8x128xf32>
    %cst_121 = arith.constant 1.000000e+00 : f32
    %418 = vector.broadcast %cst_121 : f32 to vector<8x128xf32>
    %419 = arith.addf %418, %417 : vector<8x128xf32>
    %420 = arith.divf %418, %419 : vector<8x128xf32>
    %421 = vector.extract_strided_slice %402 {offsets = [0, 256], sizes = [8, 128], strides = [1, 1]} : vector<8x384xf32> to vector<8x128xf32>
    %422 = vector.extract_strided_slice %404 {offsets = [0, 256], sizes = [8, 128], strides = [1, 1]} : vector<8x384xf32> to vector<8x128xf32>
    %423 = arith.addf %422, %326 : vector<8x128xf32>
    %424 = arith.mulf %412, %423 : vector<8x128xf32>
    %425 = arith.addf %421, %424 : vector<8x128xf32>
    %426 = math.tanh %425 : vector<8x128xf32>
    %cst_122 = arith.constant 1.000000e+00 : f32
    %427 = vector.broadcast %cst_122 : f32 to vector<8x128xf32>
    %428 = arith.subf %427, %420 : vector<8x128xf32>
    %429 = arith.mulf %428, %426 : vector<8x128xf32>
    %430 = arith.mulf %420, %396 : vector<8x128xf32>
    %431 = arith.addf %429, %430 : vector<8x128xf32>
    %432 = arith.index_cast %400 : i32 to index
    %c0_123 = arith.constant 0 : index
    %433 = vector.load %arg12[%432, %c0_123] : memref<64x128xf32, #tpu.memory_space<vmem>>, vector<8x128xf32>
    tpu.vector_store %arg12[%432, %c0_123], %431 {strides = array<i32>} : memref<64x128xf32, #tpu.memory_space<vmem>>, vector<8x128xf32>,
    %c3_i32_124 = arith.constant 3 : i32
    %c8_i32_125 = arith.constant 8 : i32
    %434 = arith.muli %c3_i32_124, %c8_i32_125 : i32
    %435 = tpu.assume_multiple %434, 8 : i32
    %436 = arith.index_cast %435 : i32 to index
    %c0_126 = arith.constant 0 : index
    %437 = vector.load %arg11[%436, %c0_126] : memref<64x384xf32, #tpu.memory_space<vmem>>, vector<8x384xf32>
    %438 = arith.truncf %431 : vector<8x128xf32> to vector<8x128xbf16>
    %cst_127 = arith.constant dense<0.000000e+00> : vector<8x384xf32>
    %439 = tpu.matmul %438, %322, %cst_127 {dimension_numbers = #tpu.dot_dimension_numbers<[1], [0], [0], [1], [0, 0, 1, 1], [], []>} : vector<8x128xbf16>, vector<128x384xbf16>, vector<8x384xf32> -> vector<8x384xf32>
    %440 = vector.extract_strided_slice %437 {offsets = [0, 0], sizes = [8, 128], strides = [1, 1]} : vector<8x384xf32> to vector<8x128xf32>
    %441 = vector.extract_strided_slice %439 {offsets = [0, 0], sizes = [8, 128], strides = [1, 1]} : vector<8x384xf32> to vector<8x128xf32>
    %442 = arith.addf %440, %441 : vector<8x128xf32>
    %443 = arith.negf %442 : vector<8x128xf32>
    %444 = math.exp %443 : vector<8x128xf32>
    %cst_128 = arith.constant 1.000000e+00 : f32
    %445 = vector.broadcast %cst_128 : f32 to vector<8x128xf32>
    %446 = arith.addf %445, %444 : vector<8x128xf32>
    %447 = arith.divf %445, %446 : vector<8x128xf32>
    %448 = vector.extract_strided_slice %437 {offsets = [0, 128], sizes = [8, 128], strides = [1, 1]} : vector<8x384xf32> to vector<8x128xf32>
    %449 = vector.extract_strided_slice %439 {offsets = [0, 128], sizes = [8, 128], strides = [1, 1]} : vector<8x384xf32> to vector<8x128xf32>
    %450 = arith.addf %448, %449 : vector<8x128xf32>
    %451 = arith.negf %450 : vector<8x128xf32>
    %452 = math.exp %451 : vector<8x128xf32>
    %cst_129 = arith.constant 1.000000e+00 : f32
    %453 = vector.broadcast %cst_129 : f32 to vector<8x128xf32>
    %454 = arith.addf %453, %452 : vector<8x128xf32>
    %455 = arith.divf %453, %454 : vector<8x128xf32>
    %456 = vector.extract_strided_slice %437 {offsets = [0, 256], sizes = [8, 128], strides = [1, 1]} : vector<8x384xf32> to vector<8x128xf32>
    %457 = vector.extract_strided_slice %439 {offsets = [0, 256], sizes = [8, 128], strides = [1, 1]} : vector<8x384xf32> to vector<8x128xf32>
    %458 = arith.addf %457, %326 : vector<8x128xf32>
    %459 = arith.mulf %447, %458 : vector<8x128xf32>
    %460 = arith.addf %456, %459 : vector<8x128xf32>
    %461 = math.tanh %460 : vector<8x128xf32>
    %cst_130 = arith.constant 1.000000e+00 : f32
    %462 = vector.broadcast %cst_130 : f32 to vector<8x128xf32>
    %463 = arith.subf %462, %455 : vector<8x128xf32>
    %464 = arith.mulf %463, %461 : vector<8x128xf32>
    %465 = arith.mulf %455, %431 : vector<8x128xf32>
    %466 = arith.addf %464, %465 : vector<8x128xf32>
    %467 = arith.index_cast %435 : i32 to index
    %c0_131 = arith.constant 0 : index
    %468 = vector.load %arg12[%467, %c0_131] : memref<64x128xf32, #tpu.memory_space<vmem>>, vector<8x128xf32>
    tpu.vector_store %arg12[%467, %c0_131], %466 {strides = array<i32>} : memref<64x128xf32, #tpu.memory_space<vmem>>, vector<8x128xf32>,
    %c4_i32_132 = arith.constant 4 : i32
    %c8_i32_133 = arith.constant 8 : i32
    %469 = arith.muli %c4_i32_132, %c8_i32_133 : i32
    %470 = tpu.assume_multiple %469, 8 : i32
    %471 = arith.index_cast %470 : i32 to index
    %c0_134 = arith.constant 0 : index
    %472 = vector.load %arg11[%471, %c0_134] : memref<64x384xf32, #tpu.memory_space<vmem>>, vector<8x384xf32>
    %473 = arith.truncf %466 : vector<8x128xf32> to vector<8x128xbf16>
    %cst_135 = arith.constant dense<0.000000e+00> : vector<8x384xf32>
    %474 = tpu.matmul %473, %322, %cst_135 {dimension_numbers = #tpu.dot_dimension_numbers<[1], [0], [0], [1], [0, 0, 1, 1], [], []>} : vector<8x128xbf16>, vector<128x384xbf16>, vector<8x384xf32> -> vector<8x384xf32>
    %475 = vector.extract_strided_slice %472 {offsets = [0, 0], sizes = [8, 128], strides = [1, 1]} : vector<8x384xf32> to vector<8x128xf32>
    %476 = vector.extract_strided_slice %474 {offsets = [0, 0], sizes = [8, 128], strides = [1, 1]} : vector<8x384xf32> to vector<8x128xf32>
    %477 = arith.addf %475, %476 : vector<8x128xf32>
    %478 = arith.negf %477 : vector<8x128xf32>
    %479 = math.exp %478 : vector<8x128xf32>
    %cst_136 = arith.constant 1.000000e+00 : f32
    %480 = vector.broadcast %cst_136 : f32 to vector<8x128xf32>
    %481 = arith.addf %480, %479 : vector<8x128xf32>
    %482 = arith.divf %480, %481 : vector<8x128xf32>
    %483 = vector.extract_strided_slice %472 {offsets = [0, 128], sizes = [8, 128], strides = [1, 1]} : vector<8x384xf32> to vector<8x128xf32>
    %484 = vector.extract_strided_slice %474 {offsets = [0, 128], sizes = [8, 128], strides = [1, 1]} : vector<8x384xf32> to vector<8x128xf32>
    %485 = arith.addf %483, %484 : vector<8x128xf32>
    %486 = arith.negf %485 : vector<8x128xf32>
    %487 = math.exp %486 : vector<8x128xf32>
    %cst_137 = arith.constant 1.000000e+00 : f32
    %488 = vector.broadcast %cst_137 : f32 to vector<8x128xf32>
    %489 = arith.addf %488, %487 : vector<8x128xf32>
    %490 = arith.divf %488, %489 : vector<8x128xf32>
    %491 = vector.extract_strided_slice %472 {offsets = [0, 256], sizes = [8, 128], strides = [1, 1]} : vector<8x384xf32> to vector<8x128xf32>
    %492 = vector.extract_strided_slice %474 {offsets = [0, 256], sizes = [8, 128], strides = [1, 1]} : vector<8x384xf32> to vector<8x128xf32>
    %493 = arith.addf %492, %326 : vector<8x128xf32>
    %494 = arith.mulf %482, %493 : vector<8x128xf32>
    %495 = arith.addf %491, %494 : vector<8x128xf32>
    %496 = math.tanh %495 : vector<8x128xf32>
    %cst_138 = arith.constant 1.000000e+00 : f32
    %497 = vector.broadcast %cst_138 : f32 to vector<8x128xf32>
    %498 = arith.subf %497, %490 : vector<8x128xf32>
    %499 = arith.mulf %498, %496 : vector<8x128xf32>
    %500 = arith.mulf %490, %466 : vector<8x128xf32>
    %501 = arith.addf %499, %500 : vector<8x128xf32>
    %502 = arith.index_cast %470 : i32 to index
    %c0_139 = arith.constant 0 : index
    %503 = vector.load %arg12[%502, %c0_139] : memref<64x128xf32, #tpu.memory_space<vmem>>, vector<8x128xf32>
    tpu.vector_store %arg12[%502, %c0_139], %501 {strides = array<i32>} : memref<64x128xf32, #tpu.memory_space<vmem>>, vector<8x128xf32>,
    %c5_i32_140 = arith.constant 5 : i32
    %c8_i32_141 = arith.constant 8 : i32
    %504 = arith.muli %c5_i32_140, %c8_i32_141 : i32
    %505 = tpu.assume_multiple %504, 8 : i32
    %506 = arith.index_cast %505 : i32 to index
    %c0_142 = arith.constant 0 : index
    %507 = vector.load %arg11[%506, %c0_142] : memref<64x384xf32, #tpu.memory_space<vmem>>, vector<8x384xf32>
    %508 = arith.truncf %501 : vector<8x128xf32> to vector<8x128xbf16>
    %cst_143 = arith.constant dense<0.000000e+00> : vector<8x384xf32>
    %509 = tpu.matmul %508, %322, %cst_143 {dimension_numbers = #tpu.dot_dimension_numbers<[1], [0], [0], [1], [0, 0, 1, 1], [], []>} : vector<8x128xbf16>, vector<128x384xbf16>, vector<8x384xf32> -> vector<8x384xf32>
    %510 = vector.extract_strided_slice %507 {offsets = [0, 0], sizes = [8, 128], strides = [1, 1]} : vector<8x384xf32> to vector<8x128xf32>
    %511 = vector.extract_strided_slice %509 {offsets = [0, 0], sizes = [8, 128], strides = [1, 1]} : vector<8x384xf32> to vector<8x128xf32>
    %512 = arith.addf %510, %511 : vector<8x128xf32>
    %513 = arith.negf %512 : vector<8x128xf32>
    %514 = math.exp %513 : vector<8x128xf32>
    %cst_144 = arith.constant 1.000000e+00 : f32
    %515 = vector.broadcast %cst_144 : f32 to vector<8x128xf32>
    %516 = arith.addf %515, %514 : vector<8x128xf32>
    %517 = arith.divf %515, %516 : vector<8x128xf32>
    %518 = vector.extract_strided_slice %507 {offsets = [0, 128], sizes = [8, 128], strides = [1, 1]} : vector<8x384xf32> to vector<8x128xf32>
    %519 = vector.extract_strided_slice %509 {offsets = [0, 128], sizes = [8, 128], strides = [1, 1]} : vector<8x384xf32> to vector<8x128xf32>
    %520 = arith.addf %518, %519 : vector<8x128xf32>
    %521 = arith.negf %520 : vector<8x128xf32>
    %522 = math.exp %521 : vector<8x128xf32>
    %cst_145 = arith.constant 1.000000e+00 : f32
    %523 = vector.broadcast %cst_145 : f32 to vector<8x128xf32>
    %524 = arith.addf %523, %522 : vector<8x128xf32>
    %525 = arith.divf %523, %524 : vector<8x128xf32>
    %526 = vector.extract_strided_slice %507 {offsets = [0, 256], sizes = [8, 128], strides = [1, 1]} : vector<8x384xf32> to vector<8x128xf32>
    %527 = vector.extract_strided_slice %509 {offsets = [0, 256], sizes = [8, 128], strides = [1, 1]} : vector<8x384xf32> to vector<8x128xf32>
    %528 = arith.addf %527, %326 : vector<8x128xf32>
    %529 = arith.mulf %517, %528 : vector<8x128xf32>
    %530 = arith.addf %526, %529 : vector<8x128xf32>
    %531 = math.tanh %530 : vector<8x128xf32>
    %cst_146 = arith.constant 1.000000e+00 : f32
    %532 = vector.broadcast %cst_146 : f32 to vector<8x128xf32>
    %533 = arith.subf %532, %525 : vector<8x128xf32>
    %534 = arith.mulf %533, %531 : vector<8x128xf32>
    %535 = arith.mulf %525, %501 : vector<8x128xf32>
    %536 = arith.addf %534, %535 : vector<8x128xf32>
    %537 = arith.index_cast %505 : i32 to index
    %c0_147 = arith.constant 0 : index
    %538 = vector.load %arg12[%537, %c0_147] : memref<64x128xf32, #tpu.memory_space<vmem>>, vector<8x128xf32>
    tpu.vector_store %arg12[%537, %c0_147], %536 {strides = array<i32>} : memref<64x128xf32, #tpu.memory_space<vmem>>, vector<8x128xf32>,
    %c6_i32_148 = arith.constant 6 : i32
    %c8_i32_149 = arith.constant 8 : i32
    %539 = arith.muli %c6_i32_148, %c8_i32_149 : i32
    %540 = tpu.assume_multiple %539, 8 : i32
    %541 = arith.index_cast %540 : i32 to index
    %c0_150 = arith.constant 0 : index
    %542 = vector.load %arg11[%541, %c0_150] : memref<64x384xf32, #tpu.memory_space<vmem>>, vector<8x384xf32>
    %543 = arith.truncf %536 : vector<8x128xf32> to vector<8x128xbf16>
    %cst_151 = arith.constant dense<0.000000e+00> : vector<8x384xf32>
    %544 = tpu.matmul %543, %322, %cst_151 {dimension_numbers = #tpu.dot_dimension_numbers<[1], [0], [0], [1], [0, 0, 1, 1], [], []>} : vector<8x128xbf16>, vector<128x384xbf16>, vector<8x384xf32> -> vector<8x384xf32>
    %545 = vector.extract_strided_slice %542 {offsets = [0, 0], sizes = [8, 128], strides = [1, 1]} : vector<8x384xf32> to vector<8x128xf32>
    %546 = vector.extract_strided_slice %544 {offsets = [0, 0], sizes = [8, 128], strides = [1, 1]} : vector<8x384xf32> to vector<8x128xf32>
    %547 = arith.addf %545, %546 : vector<8x128xf32>
    %548 = arith.negf %547 : vector<8x128xf32>
    %549 = math.exp %548 : vector<8x128xf32>
    %cst_152 = arith.constant 1.000000e+00 : f32
    %550 = vector.broadcast %cst_152 : f32 to vector<8x128xf32>
    %551 = arith.addf %550, %549 : vector<8x128xf32>
    %552 = arith.divf %550, %551 : vector<8x128xf32>
    %553 = vector.extract_strided_slice %542 {offsets = [0, 128], sizes = [8, 128], strides = [1, 1]} : vector<8x384xf32> to vector<8x128xf32>
    %554 = vector.extract_strided_slice %544 {offsets = [0, 128], sizes = [8, 128], strides = [1, 1]} : vector<8x384xf32> to vector<8x128xf32>
    %555 = arith.addf %553, %554 : vector<8x128xf32>
    %556 = arith.negf %555 : vector<8x128xf32>
    %557 = math.exp %556 : vector<8x128xf32>
    %cst_153 = arith.constant 1.000000e+00 : f32
    %558 = vector.broadcast %cst_153 : f32 to vector<8x128xf32>
    %559 = arith.addf %558, %557 : vector<8x128xf32>
    %560 = arith.divf %558, %559 : vector<8x128xf32>
    %561 = vector.extract_strided_slice %542 {offsets = [0, 256], sizes = [8, 128], strides = [1, 1]} : vector<8x384xf32> to vector<8x128xf32>
    %562 = vector.extract_strided_slice %544 {offsets = [0, 256], sizes = [8, 128], strides = [1, 1]} : vector<8x384xf32> to vector<8x128xf32>
    %563 = arith.addf %562, %326 : vector<8x128xf32>
    %564 = arith.mulf %552, %563 : vector<8x128xf32>
    %565 = arith.addf %561, %564 : vector<8x128xf32>
    %566 = math.tanh %565 : vector<8x128xf32>
    %cst_154 = arith.constant 1.000000e+00 : f32
    %567 = vector.broadcast %cst_154 : f32 to vector<8x128xf32>
    %568 = arith.subf %567, %560 : vector<8x128xf32>
    %569 = arith.mulf %568, %566 : vector<8x128xf32>
    %570 = arith.mulf %560, %536 : vector<8x128xf32>
    %571 = arith.addf %569, %570 : vector<8x128xf32>
    %572 = arith.index_cast %540 : i32 to index
    %c0_155 = arith.constant 0 : index
    %573 = vector.load %arg12[%572, %c0_155] : memref<64x128xf32, #tpu.memory_space<vmem>>, vector<8x128xf32>
    tpu.vector_store %arg12[%572, %c0_155], %571 {strides = array<i32>} : memref<64x128xf32, #tpu.memory_space<vmem>>, vector<8x128xf32>,
    %c7_i32_156 = arith.constant 7 : i32
    %c8_i32_157 = arith.constant 8 : i32
    %574 = arith.muli %c7_i32_156, %c8_i32_157 : i32
    %575 = tpu.assume_multiple %574, 8 : i32
    %576 = arith.index_cast %575 : i32 to index
    %c0_158 = arith.constant 0 : index
    %577 = vector.load %arg11[%576, %c0_158] : memref<64x384xf32, #tpu.memory_space<vmem>>, vector<8x384xf32>
    %578 = arith.truncf %571 : vector<8x128xf32> to vector<8x128xbf16>
    %cst_159 = arith.constant dense<0.000000e+00> : vector<8x384xf32>
    %579 = tpu.matmul %578, %322, %cst_159 {dimension_numbers = #tpu.dot_dimension_numbers<[1], [0], [0], [1], [0, 0, 1, 1], [], []>} : vector<8x128xbf16>, vector<128x384xbf16>, vector<8x384xf32> -> vector<8x384xf32>
    %580 = vector.extract_strided_slice %577 {offsets = [0, 0], sizes = [8, 128], strides = [1, 1]} : vector<8x384xf32> to vector<8x128xf32>
    %581 = vector.extract_strided_slice %579 {offsets = [0, 0], sizes = [8, 128], strides = [1, 1]} : vector<8x384xf32> to vector<8x128xf32>
    %582 = arith.addf %580, %581 : vector<8x128xf32>
    %583 = arith.negf %582 : vector<8x128xf32>
    %584 = math.exp %583 : vector<8x128xf32>
    %cst_160 = arith.constant 1.000000e+00 : f32
    %585 = vector.broadcast %cst_160 : f32 to vector<8x128xf32>
    %586 = arith.addf %585, %584 : vector<8x128xf32>
    %587 = arith.divf %585, %586 : vector<8x128xf32>
    %588 = vector.extract_strided_slice %577 {offsets = [0, 128], sizes = [8, 128], strides = [1, 1]} : vector<8x384xf32> to vector<8x128xf32>
    %589 = vector.extract_strided_slice %579 {offsets = [0, 128], sizes = [8, 128], strides = [1, 1]} : vector<8x384xf32> to vector<8x128xf32>
    %590 = arith.addf %588, %589 : vector<8x128xf32>
    %591 = arith.negf %590 : vector<8x128xf32>
    %592 = math.exp %591 : vector<8x128xf32>
    %cst_161 = arith.constant 1.000000e+00 : f32
    %593 = vector.broadcast %cst_161 : f32 to vector<8x128xf32>
    %594 = arith.addf %593, %592 : vector<8x128xf32>
    %595 = arith.divf %593, %594 : vector<8x128xf32>
    %596 = vector.extract_strided_slice %577 {offsets = [0, 256], sizes = [8, 128], strides = [1, 1]} : vector<8x384xf32> to vector<8x128xf32>
    %597 = vector.extract_strided_slice %579 {offsets = [0, 256], sizes = [8, 128], strides = [1, 1]} : vector<8x384xf32> to vector<8x128xf32>
    %598 = arith.addf %597, %326 : vector<8x128xf32>
    %599 = arith.mulf %587, %598 : vector<8x128xf32>
    %600 = arith.addf %596, %599 : vector<8x128xf32>
    %601 = math.tanh %600 : vector<8x128xf32>
    %cst_162 = arith.constant 1.000000e+00 : f32
    %602 = vector.broadcast %cst_162 : f32 to vector<8x128xf32>
    %603 = arith.subf %602, %595 : vector<8x128xf32>
    %604 = arith.mulf %603, %601 : vector<8x128xf32>
    %605 = arith.mulf %595, %571 : vector<8x128xf32>
    %606 = arith.addf %604, %605 : vector<8x128xf32>
    %607 = arith.index_cast %575 : i32 to index
    %c0_163 = arith.constant 0 : index
    %608 = vector.load %arg12[%607, %c0_163] : memref<64x128xf32, #tpu.memory_space<vmem>>, vector<8x128xf32>
    tpu.vector_store %arg12[%607, %c0_163], %606 {strides = array<i32>} : memref<64x128xf32, #tpu.memory_space<vmem>>, vector<8x128xf32>,
    %c8_i32_164 = arith.constant 8 : i32
    %c1_165 = arith.constant 1 : index
    %c0_166 = arith.constant 0 : index
    %c0_167 = arith.constant 0 : index
    %609 = vector.load %arg10[%c1_165, %c0_166, %c0_167] : memref<2x8x128xf32, #tpu.memory_space<vmem>>, vector<1x8x128xf32>
    %610 = vector.shape_cast %609 : vector<1x8x128xf32> to vector<8x128xf32>
    %611 = vector.shape_cast %606 : vector<8x128xf32> to vector<1x8x128xf32>
    tpu.vector_store %arg10[%c1_165, %c0_166, %c0_167], %611 {strides = array<i32>} : memref<2x8x128xf32, #tpu.memory_space<vmem>>, vector<1x8x128xf32>,
    %c0_168 = arith.constant 0 : index
    %c0_169 = arith.constant 0 : index
    %612 = vector.load %arg12[%c0_168, %c0_169] : memref<64x128xf32, #tpu.memory_space<vmem>>, vector<64x128xf32>
    %613 = arith.truncf %612 : vector<64x128xf32> to vector<64x128xbf16>
    %c0_170 = arith.constant 0 : index
    %c0_171 = arith.constant 0 : index
    %614 = vector.load %arg9[%c0_170, %c0_171] : memref<64x128xbf16, #tpu.memory_space<vmem>>, vector<64x128xbf16>
    tpu.vector_store %arg9[%c0_170, %c0_171], %613 {strides = array<i32>} : memref<64x128xbf16, #tpu.memory_space<vmem>>, vector<64x128xbf16>,
    return
  }
}

</mosaic_0001>

<llo_original>
// kernel: tpu_custom_call.1
$region0: #{tpu_custom_call.1}
  #allocation0 [shape = 'u32[]', space=smem, size = 0x4, offset = 0x4, fixed_abs, tag = 'smem constant byte address 0x4 - core index']
  #allocation1 [shape = 'u32[144,128]{1,0:T(1,128)}', space=vmem, size = 0x12000, scoped, tag = 'internal scratch']
  #allocation2 [shape = 'f32[64,384]{1,0:T(8,128)}', space=vmem, size = 0x18000, scoped, tag = 'scratch operand']
  #allocation3 [shape = 'f32[64,128]{1,0:T(8,128)}', space=vmem, size = 0x8000, scoped, tag = 'scratch operand']
  %s0 = inlined_call_operand.vmem [shape: bf16[64,16], index: 0, kind: input, shape index: {}]
  %s1 = inlined_call_operand.hbm [shape: f32[8,128], index: 1, kind: input, shape index: {}]
  %s2 = inlined_call_operand.vmem [shape: f32[2,8,128], index: 2, kind: input, shape index: {}]
  %s3 = inlined_call_operand.vmem [shape: bf16[16,384], index: 3, kind: input, shape index: {}]
  %s4 = inlined_call_operand.hbm [shape: bf16[128,384], index: 4, kind: input, shape index: {}]
  %s5 = inlined_call_operand.hbm [shape: bf16[1,128,384], index: 5, kind: input, shape index: {}]
  %s6 = inlined_call_operand.hbm [shape: bf16[2,128,384], index: 6, kind: input, shape index: {}]
  %s7 = inlined_call_operand.vmem [shape: f32[2,1,384], index: 7, kind: input, shape index: {}]
  %s8 = inlined_call_operand.vmem [shape: f32[2,1,128], index: 8, kind: input, shape index: {}]
  %s9 = inlined_call_operand.hbm [shape: bf16[64,128], index: 9, kind: output, shape index: {0}]
  %s10 = inlined_call_operand.hbm [shape: f32[2,8,128], index: 10, kind: output, shape index: {1}]
  %11 = xla_tuple %s9, %s10
  %s12 = sld [smem:[#allocation0]]
  $region70: #{tpu_custom_call.1} parent=0
    _
  %s14 = ssub.s32 1, %s12
  %s15 = scalar_select 0, %s14, %s12
  $region1: #{tpu_custom_call.1} parent=0
    #allocation4 [shape = 'u8[4096]{0}', space=vmem, size = 0x1000, scoped, tag = 'input window, operand 1, single buffered']
    #allocation5 [shape = 's32[1]{0}', space=sflag, size = 0x4, scoped, tag = 'scoped memory for tpu_custom_call.1']
    #allocation6 [shape = 's32[1]{0}', space=sflag, size = 0x4, scoped, tag = 'scoped memory for tpu_custom_call.1']
    #allocation7 [shape = 'u8[98304]{0}', space=vmem, size = 0x18000, scoped, tag = 'input window, operand 4, single buffered']
    #allocation8 [shape = 's32[1]{0}', space=sflag, size = 0x4, scoped, tag = 'scoped memory for tpu_custom_call.1']
    #allocation9 [shape = 'u8[98304]{0}', space=vmem, size = 0x18000, scoped, tag = 'input window, operand 5, single buffered']
    #allocation10 [shape = 'u8[196608]{0}', space=vmem, size = 0x30000, scoped, tag = 'input window, operand 6, single buffered']
    #allocation11 [shape = 's32[1]{0}', space=sflag, size = 0x4, scoped, tag = 'scoped memory for tpu_custom_call.1']
    #allocation12 [shape = 'u8[16384]{0}', space=vmem, size = 0x4000, scoped, tag = 'output window, operand 0, single buffered']
    #allocation13 [shape = 'u8[8192]{0}', space=vmem, size = 0x2000, scoped, tag = 'output window, operand 1, single buffered']
    #allocation14 [shape = 's32[1]{0}', space=sflag, size = 0x4, scoped, tag = 'scoped memory for tpu_custom_call.1']
    %16 = vsyncpa [#allocation5], 0
    %17 = vsyncpa [#allocation8], 0
    %18 = vsyncpa [#allocation11], 0
    %19 = vsyncpa [#allocation6], 0
    %20 = vsyncpa [#allocation14], 0
    // Predicated region
    $region2: #{tpu_custom_call.1} parent=1 // pred_check
      _
    $region3: #{tpu_custom_call.1} parent=1 // pred_check_branch
      %22 = sbr.rel (0) target = $region5
    $region4: #{tpu_custom_call.1} parent=1 // pred_region
      _
    $region5: #{tpu_custom_call.1} parent=1 // pred_fallthru
      _
    // Predicated region
    $region6: #{tpu_custom_call.1} parent=1 // pred_check
      _
    $region7: #{tpu_custom_call.1} parent=1 // pred_check_branch
      %24 = sbr.rel (0) target = $region9
    $region8: #{tpu_custom_call.1} parent=1 // pred_region
      %s26 = ssub.s32 128, 128
      %27 = vsyncadd [#allocation5], %s26
      %s29 = sshll.u32 [#allocation4], 4
      %s30 = int_to_ptr.vmem [resolvable:$true] %s29
      %32 = dma.hbm_to_vmem [thread:$0]  %s1, 128, %s30, [#allocation5]
    $region9: #{tpu_custom_call.1} parent=1 // pred_fallthru
      _
    // Predicated region
    $region10: #{tpu_custom_call.1} parent=1 // pred_check
      _
    $region11: #{tpu_custom_call.1} parent=1 // pred_check_branch
      %34 = sbr.rel (0) target = $region13
    $region12: #{tpu_custom_call.1} parent=1 // pred_region
      _
    $region13: #{tpu_custom_call.1} parent=1 // pred_fallthru
      _
    // Predicated region
    $region14: #{tpu_custom_call.1} parent=1 // pred_check
      _
    $region15: #{tpu_custom_call.1} parent=1 // pred_check_branch
      %36 = sbr.rel (0) target = $region17
    $region16: #{tpu_custom_call.1} parent=1 // pred_region
      _
    $region17: #{tpu_custom_call.1} parent=1 // pred_fallthru
      _
    // Predicated region
    $region18: #{tpu_custom_call.1} parent=1 // pred_check
      _
    $region19: #{tpu_custom_call.1} parent=1 // pred_check_branch
      %38 = sbr.rel (0) target = $region21
    $region20: #{tpu_custom_call.1} parent=1 // pred_region
      %s40 = ssub.s32 3072, 3072
      %41 = vsyncadd [#allocation8], %s40
      %s42 = sshll.u32 [#allocation7], 4
      %s43 = int_to_ptr.vmem [resolvable:$true] %s42
      %48 = dma.hbm_to_vmem [thread:$0]  %s4, 3072, %s43, [#allocation8], 192, 192, 12
    $region21: #{tpu_custom_call.1} parent=1 // pred_fallthru
      _
    // Predicated region
    $region22: #{tpu_custom_call.1} parent=1 // pred_check
      _
    $region23: #{tpu_custom_call.1} parent=1 // pred_check_branch
      %50 = sbr.rel (0) target = $region25
    $region24: #{tpu_custom_call.1} parent=1 // pred_region
      %s52 = ssub.s32 3072, 3072
      %53 = vsyncadd [#allocation8], %s52
      %s54 = sshll.u32 [#allocation9], 4
      %s55 = int_to_ptr.vmem [resolvable:$true] %s54
      %60 = dma.hbm_to_vmem [thread:$0]  %s5, 3072, %s55, [#allocation8], 192, 192, 12
    $region25: #{tpu_custom_call.1} parent=1 // pred_fallthru
      _
    // Predicated region
    $region26: #{tpu_custom_call.1} parent=1 // pred_check
      _
    $region27: #{tpu_custom_call.1} parent=1 // pred_check_branch
      %62 = sbr.rel (0) target = $region29
    $region28: #{tpu_custom_call.1} parent=1 // pred_region
      %s64 = ssub.s32 6144, 6144
      %65 = vsyncadd [#allocation11], %s64
      %s66 = sshll.u32 [#allocation10], 4
      %s67 = int_to_ptr.vmem [resolvable:$true] %s66
      %72 = dma.hbm_to_vmem [thread:$0]  %s6, 6144, %s67, [#allocation11], 192, 192, 12
    $region29: #{tpu_custom_call.1} parent=1 // pred_fallthru
      _
    // Predicated region
    $region30: #{tpu_custom_call.1} parent=1 // pred_check
      _
    $region31: #{tpu_custom_call.1} parent=1 // pred_check_branch
      %74 = sbr.rel (0) target = $region33
    $region32: #{tpu_custom_call.1} parent=1 // pred_region
      _
    $region33: #{tpu_custom_call.1} parent=1 // pred_fallthru
      _
    // Predicated region
    $region34: #{tpu_custom_call.1} parent=1 // pred_check
      _
    $region35: #{tpu_custom_call.1} parent=1 // pred_check_branch
      %76 = sbr.rel (0) target = $region37
    $region36: #{tpu_custom_call.1} parent=1 // pred_region
      _
    $region37: #{tpu_custom_call.1} parent=1 // pred_fallthru
      _
    // Predicated region
    $region38: #{tpu_custom_call.1} parent=1 // pred_check
      _
    $region39: #{tpu_custom_call.1} parent=1 // pred_check_branch
      %78 = sbr.rel (0) target = $region41
    $region40: #{tpu_custom_call.1} parent=1 // pred_region
      %79 = dma.done [#allocation5], 128
    $region41: #{tpu_custom_call.1} parent=1 // pred_fallthru
      _
    // Predicated region
    $region42: #{tpu_custom_call.1} parent=1 // pred_check
      _
    $region43: #{tpu_custom_call.1} parent=1 // pred_check_branch
      %81 = sbr.rel (0) target = $region45
    $region44: #{tpu_custom_call.1} parent=1 // pred_region
      %82 = dma.done [#allocation8], 3072
    $region45: #{tpu_custom_call.1} parent=1 // pred_fallthru
      _
    // Predicated region
    $region46: #{tpu_custom_call.1} parent=1 // pred_check
      _
    $region47: #{tpu_custom_call.1} parent=1 // pred_check_branch
      %84 = sbr.rel (0) target = $region49
    $region48: #{tpu_custom_call.1} parent=1 // pred_region
      %85 = dma.done [#allocation8], 3072
    $region49: #{tpu_custom_call.1} parent=1 // pred_fallthru
      _
    // Predicated region
    $region50: #{tpu_custom_call.1} parent=1 // pred_check
      _
    $region51: #{tpu_custom_call.1} parent=1 // pred_check_branch
      %87 = sbr.rel (0) target = $region53
    $region52: #{tpu_custom_call.1} parent=1 // pred_region
      %88 = dma.done [#allocation11], 6144
    $region53: #{tpu_custom_call.1} parent=1 // pred_fallthru
      _
    %v90 = vld [vmem:[#allocation4] sm:$0xff]
    %v91 = vpack.c.bf16 %v90, %v90
    %v92 = vld [vmem:[#allocation7] sm:$0xff]
    %v93 = vld [vmem:[#allocation7 + $0x8] sm:$0xf]
    %v94 = vld [vmem:[#allocation7 + $0xc] sm:$0xff]
    %v95 = vld [vmem:[#allocation7 + $0x14] sm:$0xf]
    %v96 = vld [vmem:[#allocation7 + $0x18] sm:$0xff]
    %v97 = vld [vmem:[#allocation7 + $0x20] sm:$0xf]
    %v98 = vld [vmem:[#allocation7 + $0x24] sm:$0xff]
    %v99 = vld [vmem:[#allocation7 + $0x2c] sm:$0xf]
    %v100 = vld [vmem:[#allocation7 + $0x30] sm:$0xff]
    %v101 = vld [vmem:[#allocation7 + $0x38] sm:$0xf]
    %v102 = vld [vmem:[#allocation7 + $0x3c] sm:$0xff]
    %v103 = vld [vmem:[#allocation7 + $0x44] sm:$0xf]
    %v104 = vld [vmem:[#allocation7 + $0x48] sm:$0xff]
    %v105 = vld [vmem:[#allocation7 + $0x50] sm:$0xf]
    %v106 = vld [vmem:[#allocation7 + $0x54] sm:$0xff]
    %v107 = vld [vmem:[#allocation7 + $0x5c] sm:$0xf]
    %v108 = vld [vmem:[#allocation7 + $0x60] sm:$0xff]
    %v109 = vld [vmem:[#allocation7 + $0x68] sm:$0xf]
    %v110 = vld [vmem:[#allocation7 + $0x6c] sm:$0xff]
    %v111 = vld [vmem:[#allocation7 + $0x74] sm:$0xf]
    %v112 = vld [vmem:[#allocation7 + $0x78] sm:$0xff]
    %v113 = vld [vmem:[#allocation7 + $0x80] sm:$0xf]
    %v114 = vld [vmem:[#allocation7 + $0x84] sm:$0xff]
    %v115 = vld [vmem:[#allocation7 + $0x8c] sm:$0xf]
    %v116 = vld [vmem:[#allocation7 + $0x90] sm:$0xff]
    %v117 = vld [vmem:[#allocation7 + $0x98] sm:$0xf]
    %v118 = vld [vmem:[#allocation7 + $0x9c] sm:$0xff]
    %v119 = vld [vmem:[#allocation7 + $0xa4] sm:$0xf]
    %v120 = vld [vmem:[#allocation7 + $0xa8] sm:$0xff]
    %v121 = vld [vmem:[#allocation7 + $0xb0] sm:$0xf]
    %v122 = vld [vmem:[#allocation7 + $0xb4] sm:$0xff]
    %v123 = vld [vmem:[#allocation7 + $0xbc] sm:$0xf]
    %v124 = vld [vmem:[%s7] sm:$0x7]
    %v126 = vlaneseq
    %v127 = vshrl.u32 %v126, 7
    %v128 = vsub.s32 0, %v127
    %v129 = vrot.slane %v124, %v128
    %v130 = vlaneseq
    %v131 = vshrl.u32 %v130, 7
    %v132 = vsub.s32 1, %v131
    %v133 = vrot.slane %v124, %v132
    %v134 = vlaneseq
    %v135 = vshrl.u32 %v134, 7
    %v136 = vsub.s32 2, %v135
    %v137 = vrot.slane %v124, %v136
    %v173 = vunpack.c.l.b16 %v92
    %v174 = vunpack.c.h.b16 %v92
    %v175 = vunpack.c.l.b16 %v93
    %v176 = vunpack.c.l.b16 %v94
    %v177 = vunpack.c.h.b16 %v94
    %v178 = vunpack.c.l.b16 %v95
    %v179 = vunpack.c.l.b16 %v96
    %v180 = vunpack.c.h.b16 %v96
    %v181 = vunpack.c.l.b16 %v97
    %v182 = vunpack.c.l.b16 %v98
    %v183 = vunpack.c.h.b16 %v98
    %v184 = vunpack.c.l.b16 %v99
    %v185 = vunpack.c.l.b16 %v100
    %v186 = vunpack.c.h.b16 %v100
    %v187 = vunpack.c.l.b16 %v101
    %v188 = vunpack.c.l.b16 %v102
    %v189 = vunpack.c.h.b16 %v102
    %v190 = vunpack.c.l.b16 %v103
    %v191 = vunpack.c.l.b16 %v104
    %v192 = vunpack.c.h.b16 %v104
    %v193 = vunpack.c.l.b16 %v105
    %v194 = vunpack.c.l.b16 %v106
    %v195 = vunpack.c.h.b16 %v106
    %v196 = vunpack.c.l.b16 %v107
    %v197 = vunpack.c.l.b16 %v108
    %v198 = vunpack.c.h.b16 %v108
    %v199 = vunpack.c.l.b16 %v109
    %v200 = vunpack.c.l.b16 %v110
    %v201 = vunpack.c.h.b16 %v110
    %v202 = vunpack.c.l.b16 %v111
    %v203 = vunpack.c.l.b16 %v112
    %v204 = vunpack.c.h.b16 %v112
    %v205 = vunpack.c.l.b16 %v113
    %v206 = vunpack.c.l.b16 %v114
    %v207 = vunpack.c.h.b16 %v114
    %v208 = vunpack.c.l.b16 %v115
    %v209 = vunpack.c.l.b16 %v116
    %v210 = vunpack.c.h.b16 %v116
    %v211 = vunpack.c.l.b16 %v117
    %v212 = vunpack.c.l.b16 %v118
    %v213 = vunpack.c.h.b16 %v118
    %v214 = vunpack.c.l.b16 %v119
    %v215 = vunpack.c.l.b16 %v120
    %v216 = vunpack.c.h.b16 %v120
    %v217 = vunpack.c.l.b16 %v121
    %v218 = vunpack.c.l.b16 %v122
    %v219 = vunpack.c.h.b16 %v122
    %v220 = vunpack.c.l.b16 %v123
    %v221 = vpack.c.b16 %v176, %v173
    %v222 = vpack.c.b16 %v177, %v174
    %v223 = vpack.c.b16 %v178, %v175
    %v224 = vpack.c.b16 %v182, %v179
    %v225 = vpack.c.b16 %v183, %v180
    %v226 = vpack.c.b16 %v184, %v181
    %v227 = vpack.c.b16 %v188, %v185
    %v228 = vpack.c.b16 %v189, %v186
    %v229 = vpack.c.b16 %v190, %v187
    %v230 = vpack.c.b16 %v194, %v191
    %v231 = vpack.c.b16 %v195, %v192
    %v232 = vpack.c.b16 %v196, %v193
    %v233 = vpack.c.b16 %v200, %v197
    %v234 = vpack.c.b16 %v201, %v198
    %v235 = vpack.c.b16 %v202, %v199
    %v236 = vpack.c.b16 %v206, %v203
    %v237 = vpack.c.b16 %v207, %v204
    %v238 = vpack.c.b16 %v208, %v205
    %v239 = vpack.c.b16 %v212, %v209
    %v240 = vpack.c.b16 %v213, %v210
    %v241 = vpack.c.b16 %v214, %v211
    %v242 = vpack.c.b16 %v218, %v215
    %v243 = vpack.c.b16 %v219, %v216
    %v244 = vpack.c.b16 %v220, %v217
    %269 = vmatprep.subr.bf16.mxu0 %v222
    %270 = vmatpush1.bf16.msra.mxu0 %v221
    %271 = vmatprep.subr.bf16.mxu0 %v225
    %272 = vmatpush1.bf16.msra.mxu0 %v224
    %273 = vmatprep.subr.bf16.mxu0 %v228
    %274 = vmatpush1.bf16.msra.mxu0 %v227
    %275 = vmatprep.subr.bf16.mxu0 %v231
    %276 = vmatpush1.bf16.msra.mxu0 %v230
    %277 = vmatprep.subr.bf16.mxu0 %v234
    %278 = vmatpush1.bf16.msra.mxu0 %v233
    %279 = vmatprep.subr.bf16.mxu0 %v237
    %280 = vmatpush1.bf16.msra.mxu0 %v236
    %281 = vmatprep.subr.bf16.mxu0 %v240
    %282 = vmatpush1.bf16.msra.mxu0 %v239
    %283 = vmatprep.subr.bf16.mxu0 %v243
    %284 = vmatpush1.bf16.msra.mxu0 %v242
    %285 = vmatprep.subr.bf16.mxu0 0
    %286 = vmatpush1.bf16.msra.mxu0 0
    %287 = vmatprep.subr.bf16.mxu0 0
    %288 = vmatpush1.bf16.msra.mxu0 0
    %289 = vmatprep.subr.bf16.mxu0 0
    %290 = vmatpush1.bf16.msra.mxu0 0
    %291 = vmatprep.subr.bf16.mxu0 0
    %292 = vmatpush1.bf16.msra.mxu0 0
    %293 = vmatprep.subr.bf16.mxu0 0
    %294 = vmatpush1.bf16.msra.mxu0 0
    %295 = vmatprep.subr.bf16.mxu0 0
    %296 = vmatpush1.bf16.msra.mxu0 0
    %297 = vmatprep.subr.bf16.mxu0 0
    %298 = vmatpush1.bf16.msra.mxu0 0
    %299 = vmatprep.subr.bf16.mxu0 0
    %300 = vmatpush1.bf16.msra.mxu0 0
    %301 = vmatprep.mubr.bf16.mxu0 0
    %302 = vmatmul.mubr.bf16.gmra.mrb[0].mxu0 %v91
    %v303 = vpop.f32.mrb[0].mxu0
    %v304 = vadd.f32 %v129, %v303
    %v305 = vpop.f32.mrb[0].mxu0
    %v306 = vadd.f32 %v133, %v305
    %v307 = vpop.f32.mrb[0].mxu0
    %v308 = vpop.f32.mrb[0].mxu0
    %309 = vdwg.mxu0
    %310 = vmatprep.subr.bf16.mxu0 0
    %311 = vmatpush1.bf16.msra.mxu0 %v223
    %312 = vmatprep.subr.bf16.mxu0 0
    %313 = vmatpush1.bf16.msra.mxu0 %v226
    %314 = vmatprep.subr.bf16.mxu0 0
    %315 = vmatpush1.bf16.msra.mxu0 %v229
    %316 = vmatprep.subr.bf16.mxu0 0
    %317 = vmatpush1.bf16.msra.mxu0 %v232
    %318 = vmatprep.subr.bf16.mxu0 0
    %319 = vmatpush1.bf16.msra.mxu0 %v235
    %320 = vmatprep.subr.bf16.mxu0 0
    %321 = vmatpush1.bf16.msra.mxu0 %v238
    %322 = vmatprep.subr.bf16.mxu0 0
    %323 = vmatpush1.bf16.msra.mxu0 %v241
    %324 = vmatprep.subr.bf16.mxu0 0
    %325 = vmatpush1.bf16.msra.mxu0 %v244
    %326 = vmatprep.subr.bf16.mxu0 0
    %327 = vmatpush1.bf16.msra.mxu0 0
    %328 = vmatprep.subr.bf16.mxu0 0
    %329 = vmatpush1.bf16.msra.mxu0 0
    %330 = vmatprep.subr.bf16.mxu0 0
    %331 = vmatpush1.bf16.msra.mxu0 0
    %332 = vmatprep.subr.bf16.mxu0 0
    %333 = vmatpush1.bf16.msra.mxu0 0
    %334 = vmatprep.subr.bf16.mxu0 0
    %335 = vmatpush1.bf16.msra.mxu0 0
    %336 = vmatprep.subr.bf16.mxu0 0
    %337 = vmatpush1.bf16.msra.mxu0 0
    %338 = vmatprep.subr.bf16.mxu0 0
    %339 = vmatpush1.bf16.msra.mxu0 0
    %340 = vmatprep.subr.bf16.mxu0 0
    %341 = vmatpush1.bf16.msra.mxu0 0
    %342 = vmatprep.mubr.bf16.mxu0 0
    %343 = vmatmul.mubr.bf16.gmra.mrb[0].mxu0 %v91
    %v344 = vpop.f32.mrb[0].mxu0
    %v345 = vadd.f32 %v137, %v344
    %v346 = vpop.f32.mrb[0].mxu0
    %v347 = vpop.f32.mrb[0].mxu0
    %v348 = vpop.f32.mrb[0].mxu0
    %349 = vdwg.mxu0
    %v350 = vld [vmem:[%s0] sm:$0xf]
    %v351 = vld [vmem:[%s0 + $0x4] sm:$0xf]
    %v352 = vld [vmem:[%s0 + $0x8] sm:$0xf]
    %v353 = vld [vmem:[%s0 + $0xc] sm:$0xf]
    %v354 = vld [vmem:[%s0 + $0x10] sm:$0xf]
    %v355 = vld [vmem:[%s0 + $0x14] sm:$0xf]
    %v356 = vld [vmem:[%s0 + $0x18] sm:$0xf]
    %v357 = vld [vmem:[%s0 + $0x1c] sm:$0xf]
    %v358 = vld [vmem:[%s3] sm:$0xff]
    %v359 = vld [vmem:[%s3 + $0x8] sm:$0xf]
    %v360 = vld [vmem:[%s3 + $0xc] sm:$0xff]
    %v361 = vld [vmem:[%s3 + $0x14] sm:$0xf]
    %v370 = vunpack.c.l.b16 %v350
    %v371 = vunpack.c.l.b16 %v351
    %v372 = vunpack.c.l.b16 %v352
    %v373 = vunpack.c.l.b16 %v353
    %v374 = vunpack.c.l.b16 %v354
    %v375 = vunpack.c.l.b16 %v355
    %v376 = vunpack.c.l.b16 %v356
    %v377 = vunpack.c.l.b16 %v357
    %v378 = vpack.c.b16 %v371, %v370
    %v379 = vpack.c.b16 %v373, %v372
    %v380 = vpack.c.b16 %v375, %v374
    %v381 = vpack.c.b16 %v377, %v376
    %v386 = vunpack.c.l.b16 %v358
    %v387 = vunpack.c.h.b16 %v358
    %v388 = vunpack.c.l.b16 %v359
    %v389 = vunpack.c.l.b16 %v360
    %v390 = vunpack.c.h.b16 %v360
    %v391 = vunpack.c.l.b16 %v361
    %v392 = vpack.c.b16 %v389, %v386
    %v393 = vpack.c.b16 %v390, %v387
    %v394 = vpack.c.b16 %v391, %v388
    %vm398 = vcmask 130048
    %v400 = vsel %vm398, %v378, 0
    %v403 = vsel %vm398, %v379, 0
    %v406 = vsel %vm398, %v380, 0
    %v409 = vsel %vm398, %v381, 0
    %411 = vmatprep.subr.bf16.mxu0 %v393
    %412 = vmatpush1.bf16.msra.mxu0 %v392
    %413 = vmatprep.subr.bf16.mxu0 0
    %414 = vmatpush1.bf16.msra.mxu0 0
    %415 = vmatprep.subr.bf16.mxu0 0
    %416 = vmatpush1.bf16.msra.mxu0 0
    %417 = vmatprep.subr.bf16.mxu0 0
    %418 = vmatpush1.bf16.msra.mxu0 0
    %419 = vmatprep.subr.bf16.mxu0 0
    %420 = vmatpush1.bf16.msra.mxu0 0
    %421 = vmatprep.subr.bf16.mxu0 0
    %422 = vmatpush1.bf16.msra.mxu0 0
    %423 = vmatprep.subr.bf16.mxu0 0
    %424 = vmatpush1.bf16.msra.mxu0 0
    %425 = vmatprep.subr.bf16.mxu0 0
    %426 = vmatpush1.bf16.msra.mxu0 0
    %427 = vmatprep.subr.bf16.mxu0 0
    %428 = vmatpush1.bf16.msra.mxu0 0
    %429 = vmatprep.subr.bf16.mxu0 0
    %430 = vmatpush1.bf16.msra.mxu0 0
    %431 = vmatprep.subr.bf16.mxu0 0
    %432 = vmatpush1.bf16.msra.mxu0 0
    %433 = vmatprep.subr.bf16.mxu0 0
    %434 = vmatpush1.bf16.msra.mxu0 0
    %435 = vmatprep.subr.bf16.mxu0 0
    %436 = vmatpush1.bf16.msra.mxu0 0
    %437 = vmatprep.subr.bf16.mxu0 0
    %438 = vmatpush1.bf16.msra.mxu0 0
    %439 = vmatprep.subr.bf16.mxu0 0
    %440 = vmatpush1.bf16.msra.mxu0 0
    %441 = vmatprep.subr.bf16.mxu0 0
    %442 = vmatpush1.bf16.msra.mxu0 0
    %443 = vmatprep.mubr.bf16.mxu0 0
    %444 = vmatmul.mubr.bf16.gmra.mrb[0].mxu0 %v400
    %v445 = vpop.f32.mrb[0].mxu0
    %v446 = vadd.f32 0.0, %v445
    %v447 = vpop.f32.mrb[0].mxu0
    %v448 = vadd.f32 0.0, %v447
    %v449 = vpop.f32.mrb[0].mxu0
    %v450 = vadd.f32 0.0, %v449
    %v451 = vpop.f32.mrb[0].mxu0
    %v452 = vadd.f32 0.0, %v451
    %453 = vmatprep.mubr.bf16.mxu0 0
    %454 = vmatmul.mubr.bf16.gmra.mrb[0].mxu0 %v403
    %v455 = vpop.f32.mrb[0].mxu0
    %v456 = vadd.f32 0.0, %v455
    %v457 = vpop.f32.mrb[0].mxu0
    %v458 = vadd.f32 0.0, %v457
    %v459 = vpop.f32.mrb[0].mxu0
    %v460 = vadd.f32 0.0, %v459
    %v461 = vpop.f32.mrb[0].mxu0
    %v462 = vadd.f32 0.0, %v461
    %463 = vmatprep.mubr.bf16.mxu0 0
    %464 = vmatmul.mubr.bf16.gmra.mrb[0].mxu0 %v406
    %v465 = vpop.f32.mrb[0].mxu0
    %v466 = vadd.f32 0.0, %v465
    %v467 = vpop.f32.mrb[0].mxu0
    %v468 = vadd.f32 0.0, %v467
    %v469 = vpop.f32.mrb[0].mxu0
    %v470 = vadd.f32 0.0, %v469
    %v471 = vpop.f32.mrb[0].mxu0
    %v472 = vadd.f32 0.0, %v471
    %473 = vmatprep.mubr.bf16.mxu0 0
    %474 = vmatmul.mubr.bf16.gmra.mrb[0].mxu0 %v409
    %v475 = vpop.f32.mrb[0].mxu0
    %v476 = vadd.f32 0.0, %v475
    %v477 = vpop.f32.mrb[0].mxu0
    %v478 = vadd.f32 0.0, %v477
    %v479 = vpop.f32.mrb[0].mxu0
    %v480 = vadd.f32 0.0, %v479
    %v481 = vpop.f32.mrb[0].mxu0
    %v482 = vadd.f32 0.0, %v481
    %483 = vdwg.mxu0
    %484 = vmatprep.subr.bf16.mxu0 0
    %485 = vmatpush1.bf16.msra.mxu0 %v394
    %486 = vmatprep.subr.bf16.mxu0 0
    %487 = vmatpush1.bf16.msra.mxu0 0
    %488 = vmatprep.subr.bf16.mxu0 0
    %489 = vmatpush1.bf16.msra.mxu0 0
    %490 = vmatprep.subr.bf16.mxu0 0
    %491 = vmatpush1.bf16.msra.mxu0 0
    %492 = vmatprep.subr.bf16.mxu0 0
    %493 = vmatpush1.bf16.msra.mxu0 0
    %494 = vmatprep.subr.bf16.mxu0 0
    %495 = vmatpush1.bf16.msra.mxu0 0
    %496 = vmatprep.subr.bf16.mxu0 0
    %497 = vmatpush1.bf16.msra.mxu0 0
    %498 = vmatprep.subr.bf16.mxu0 0
    %499 = vmatpush1.bf16.msra.mxu0 0
    %500 = vmatprep.subr.bf16.mxu0 0
    %501 = vmatpush1.bf16.msra.mxu0 0
    %502 = vmatprep.subr.bf16.mxu0 0
    %503 = vmatpush1.bf16.msra.mxu0 0
    %504 = vmatprep.subr.bf16.mxu0 0
    %505 = vmatpush1.bf16.msra.mxu0 0
    %506 = vmatprep.subr.bf16.mxu0 0
    %507 = vmatpush1.bf16.msra.mxu0 0
    %508 = vmatprep.subr.bf16.mxu0 0
    %509 = vmatpush1.bf16.msra.mxu0 0
    %510 = vmatprep.subr.bf16.mxu0 0
    %511 = vmatpush1.bf16.msra.mxu0 0
    %512 = vmatprep.subr.bf16.mxu0 0
    %513 = vmatpush1.bf16.msra.mxu0 0
    %514 = vmatprep.subr.bf16.mxu0 0
    %515 = vmatpush1.bf16.msra.mxu0 0
    %516 = vmatprep.mubr.bf16.mxu0 0
    %517 = vmatmul.mubr.bf16.gmra.mrb[0].mxu0 %v400
    %v518 = vpop.f32.mrb[0].mxu0
    %v519 = vadd.f32 0.0, %v518
    %v520 = vpop.f32.mrb[0].mxu0
    %v521 = vpop.f32.mrb[0].mxu0
    %v522 = vadd.f32 0.0, %v521
    %v523 = vpop.f32.mrb[0].mxu0
    %524 = vmatprep.mubr.bf16.mxu0 0
    %525 = vmatmul.mubr.bf16.gmra.mrb[0].mxu0 %v403
    %v526 = vpop.f32.mrb[0].mxu0
    %v527 = vadd.f32 0.0, %v526
    %v528 = vpop.f32.mrb[0].mxu0
    %v529 = vpop.f32.mrb[0].mxu0
    %v530 = vadd.f32 0.0, %v529
    %v531 = vpop.f32.mrb[0].mxu0
    %532 = vmatprep.mubr.bf16.mxu0 0
    %533 = vmatmul.mubr.bf16.gmra.mrb[0].mxu0 %v406
    %v534 = vpop.f32.mrb[0].mxu0
    %v535 = vadd.f32 0.0, %v534
    %v536 = vpop.f32.mrb[0].mxu0
    %v537 = vpop.f32.mrb[0].mxu0
    %v538 = vadd.f32 0.0, %v537
    %v539 = vpop.f32.mrb[0].mxu0
    %540 = vmatprep.mubr.bf16.mxu0 0
    %541 = vmatmul.mubr.bf16.gmra.mrb[0].mxu0 %v409
    %v542 = vpop.f32.mrb[0].mxu0
    %v543 = vadd.f32 0.0, %v542
    %v544 = vpop.f32.mrb[0].mxu0
    %v545 = vpop.f32.mrb[0].mxu0
    %v546 = vadd.f32 0.0, %v545
    %v547 = vpop.f32.mrb[0].mxu0
    %548 = vdwg.mxu0
    %549 = vst [vmem:[#allocation2] sm:$0xff] %v446
    %550 = vst [vmem:[#allocation2 + $0x8] sm:$0xff] %v448
    %551 = vst [vmem:[#allocation2 + $0x10] sm:$0xff] %v519
    %552 = vst [vmem:[#allocation2 + $0x18] sm:$0xff] %v450
    %553 = vst [vmem:[#allocation2 + $0x20] sm:$0xff] %v452
    %554 = vst [vmem:[#allocation2 + $0x28] sm:$0xff] %v522
    %555 = vst [vmem:[#allocation2 + $0x30] sm:$0xff] %v456
    %556 = vst [vmem:[#allocation2 + $0x38] sm:$0xff] %v458
    %557 = vst [vmem:[#allocation2 + $0x40] sm:$0xff] %v527
    %558 = vst [vmem:[#allocation2 + $0x48] sm:$0xff] %v460
    %559 = vst [vmem:[#allocation2 + $0x50] sm:$0xff] %v462
    %560 = vst [vmem:[#allocation2 + $0x58] sm:$0xff] %v530
    %561 = vst [vmem:[#allocation2 + $0x60] sm:$0xff] %v466
    %562 = vst [vmem:[#allocation2 + $0x68] sm:$0xff] %v468
    %563 = vst [vmem:[#allocation2 + $0x70] sm:$0xff] %v535
    %564 = vst [vmem:[#allocation2 + $0x78] sm:$0xff] %v470
    %565 = vst [vmem:[#allocation2 + $0x80] sm:$0xff] %v472
    %566 = vst [vmem:[#allocation2 + $0x88] sm:$0xff] %v538
    %567 = vst [vmem:[#allocation2 + $0x90] sm:$0xff] %v476
    %568 = vst [vmem:[#allocation2 + $0x98] sm:$0xff] %v478
    %569 = vst [vmem:[#allocation2 + $0xa0] sm:$0xff] %v543
    %570 = vst [vmem:[#allocation2 + $0xa8] sm:$0xff] %v480
    %571 = vst [vmem:[#allocation2 + $0xb0] sm:$0xff] %v482
    %572 = vst [vmem:[#allocation2 + $0xb8] sm:$0xff] %v546
    %v573 = vld [vmem:[#allocation10] sm:$0xff]
    %v574 = vld [vmem:[#allocation10 + $0x8] sm:$0xf]
    %v575 = vld [vmem:[#allocation10 + $0xc] sm:$0xff]
    %v576 = vld [vmem:[#allocation10 + $0x14] sm:$0xf]
    %v577 = vld [vmem:[#allocation10 + $0x18] sm:$0xff]
    %v578 = vld [vmem:[#allocation10 + $0x20] sm:$0xf]
    %v579 = vld [vmem:[#allocation10 + $0x24] sm:$0xff]
    %v580 = vld [vmem:[#allocation10 + $0x2c] sm:$0xf]
    %v581 = vld [vmem:[#allocation10 + $0x30] sm:$0xff]
    %v582 = vld [vmem:[#allocation10 + $0x38] sm:$0xf]
    %v583 = vld [vmem:[#allocation10 + $0x3c] sm:$0xff]
    %v584 = vld [vmem:[#allocation10 + $0x44] sm:$0xf]
    %v585 = vld [vmem:[#allocation10 + $0x48] sm:$0xff]
    %v586 = vld [vmem:[#allocation10 + $0x50] sm:$0xf]
    %v587 = vld [vmem:[#allocation10 + $0x54] sm:$0xff]
    %v588 = vld [vmem:[#allocation10 + $0x5c] sm:$0xf]
    %v589 = vld [vmem:[#allocation10 + $0x60] sm:$0xff]
    %v590 = vld [vmem:[#allocation10 + $0x68] sm:$0xf]
    %v591 = vld [vmem:[#allocation10 + $0x6c] sm:$0xff]
    %v592 = vld [vmem:[#allocation10 + $0x74] sm:$0xf]
    %v593 = vld [vmem:[#allocation10 + $0x78] sm:$0xff]
    %v594 = vld [vmem:[#allocation10 + $0x80] sm:$0xf]
    %v595 = vld [vmem:[#allocation10 + $0x84] sm:$0xff]
    %v596 = vld [vmem:[#allocation10 + $0x8c] sm:$0xf]
    %v597 = vld [vmem:[#allocation10 + $0x90] sm:$0xff]
    %v598 = vld [vmem:[#allocation10 + $0x98] sm:$0xf]
    %v599 = vld [vmem:[#allocation10 + $0x9c] sm:$0xff]
    %v600 = vld [vmem:[#allocation10 + $0xa4] sm:$0xf]
    %v601 = vld [vmem:[#allocation10 + $0xa8] sm:$0xff]
    %v602 = vld [vmem:[#allocation10 + $0xb0] sm:$0xf]
    %v603 = vld [vmem:[#allocation10 + $0xb4] sm:$0xff]
    %v604 = vld [vmem:[#allocation10 + $0xbc] sm:$0xf]
    %v605 = vld [vmem:[%s8] sm:$0x1]
    %v607 = vlaneseq
    %v608 = vshrl.u32 %v607, 7
    %v609 = vsub.s32 0, %v608
    %v610 = vrot.slane %v605, %v609
    %v612 = vld [vmem:[%s2] sm:$0xff]
    %s613 = smul.u32 0, 3
    %s614 = smul.addr %s613, 8
    %s615 = scalar_lea.vmem [#allocation2], %s614
    %v616 = vld [vmem:[%s615] sm:$0xff]
    %v617 = vld [vmem:[%s615 + $0x8] sm:$0xff]
    %v618 = vld [vmem:[%s615 + $0x10] sm:$0xff]
    %v619 = vadd.f32 %v616, %v304
    %v620 = vadd.f32 %v617, %v306
    %v621 = vadd.f32 %v618, %v345
    %v622 = vpack.c.bf16 %v612, %v612
    %v655 = vunpack.c.l.b16 %v573
    %v656 = vunpack.c.h.b16 %v573
    %v657 = vunpack.c.l.b16 %v574
    %v658 = vunpack.c.l.b16 %v575
    %v659 = vunpack.c.h.b16 %v575
    %v660 = vunpack.c.l.b16 %v576
    %v661 = vunpack.c.l.b16 %v577
    %v662 = vunpack.c.h.b16 %v577
    %v663 = vunpack.c.l.b16 %v578
    %v664 = vunpack.c.l.b16 %v579
    %v665 = vunpack.c.h.b16 %v579
    %v666 = vunpack.c.l.b16 %v580
    %v667 = vunpack.c.l.b16 %v581
    %v668 = vunpack.c.h.b16 %v581
    %v669 = vunpack.c.l.b16 %v582
    %v670 = vunpack.c.l.b16 %v583
    %v671 = vunpack.c.h.b16 %v583
    %v672 = vunpack.c.l.b16 %v584
    %v673 = vunpack.c.l.b16 %v585
    %v674 = vunpack.c.h.b16 %v585
    %v675 = vunpack.c.l.b16 %v586
    %v676 = vunpack.c.l.b16 %v587
    %v677 = vunpack.c.h.b16 %v587
    %v678 = vunpack.c.l.b16 %v588
    %v679 = vunpack.c.l.b16 %v589
    %v680 = vunpack.c.h.b16 %v589
    %v681 = vunpack.c.l.b16 %v590
    %v682 = vunpack.c.l.b16 %v591
    %v683 = vunpack.c.h.b16 %v591
    %v684 = vunpack.c.l.b16 %v592
    %v685 = vunpack.c.l.b16 %v593
    %v686 = vunpack.c.h.b16 %v593
    %v687 = vunpack.c.l.b16 %v594
    %v688 = vunpack.c.l.b16 %v595
    %v689 = vunpack.c.h.b16 %v595
    %v690 = vunpack.c.l.b16 %v596
    %v691 = vunpack.c.l.b16 %v597
    %v692 = vunpack.c.h.b16 %v597
    %v693 = vunpack.c.l.b16 %v598
    %v694 = vunpack.c.l.b16 %v599
    %v695 = vunpack.c.h.b16 %v599
    %v696 = vunpack.c.l.b16 %v600
    %v697 = vunpack.c.l.b16 %v601
    %v698 = vunpack.c.h.b16 %v601
    %v699 = vunpack.c.l.b16 %v602
    %v700 = vunpack.c.l.b16 %v603
    %v701 = vunpack.c.h.b16 %v603
    %v702 = vunpack.c.l.b16 %v604
    %v703 = vpack.c.b16 %v658, %v655
    %v704 = vpack.c.b16 %v659, %v656
    %v705 = vpack.c.b16 %v660, %v657
    %v706 = vpack.c.b16 %v664, %v661
    %v707 = vpack.c.b16 %v665, %v662
    %v708 = vpack.c.b16 %v666, %v663
    %v709 = vpack.c.b16 %v670, %v667
    %v710 = vpack.c.b16 %v671, %v668
    %v711 = vpack.c.b16 %v672, %v669
    %v712 = vpack.c.b16 %v676, %v673
    %v713 = vpack.c.b16 %v677, %v674
    %v714 = vpack.c.b16 %v678, %v675
    %v715 = vpack.c.b16 %v682, %v679
    %v716 = vpack.c.b16 %v683, %v680
    %v717 = vpack.c.b16 %v684, %v681
    %v718 = vpack.c.b16 %v688, %v685
    %v719 = vpack.c.b16 %v689, %v686
    %v720 = vpack.c.b16 %v690, %v687
    %v721 = vpack.c.b16 %v694, %v691
    %v722 = vpack.c.b16 %v695, %v692
    %v723 = vpack.c.b16 %v696, %v693
    %v724 = vpack.c.b16 %v700, %v697
    %v725 = vpack.c.b16 %v701, %v698
    %v726 = vpack.c.b16 %v702, %v699
    %751 = vmatprep.subr.bf16.mxu0 %v704
    %752 = vmatpush1.bf16.msra.mxu0 %v703
    %753 = vmatprep.subr.bf16.mxu0 %v707
    %754 = vmatpush1.bf16.msra.mxu0 %v706
    %755 = vmatprep.subr.bf16.mxu0 %v710
    %756 = vmatpush1.bf16.msra.mxu0 %v709
    %757 = vmatprep.subr.bf16.mxu0 %v713
    %758 = vmatpush1.bf16.msra.mxu0 %v712
    %759 = vmatprep.subr.bf16.mxu0 %v716
    %760 = vmatpush1.bf16.msra.mxu0 %v715
    %761 = vmatprep.subr.bf16.mxu0 %v719
    %762 = vmatpush1.bf16.msra.mxu0 %v718
    %763 = vmatprep.subr.bf16.mxu0 %v722
    %764 = vmatpush1.bf16.msra.mxu0 %v721
    %765 = vmatprep.subr.bf16.mxu0 %v725
    %766 = vmatpush1.bf16.msra.mxu0 %v724
    %767 = vmatprep.subr.bf16.mxu0 0
    %768 = vmatpush1.bf16.msra.mxu0 0
    %769 = vmatprep.subr.bf16.mxu0 0
    %770 = vmatpush1.bf16.msra.mxu0 0
    %771 = vmatprep.subr.bf16.mxu0 0
    %772 = vmatpush1.bf16.msra.mxu0 0
    %773 = vmatprep.subr.bf16.mxu0 0
    %774 = vmatpush1.bf16.msra.mxu0 0
    %775 = vmatprep.subr.bf16.mxu0 0
    %776 = vmatpush1.bf16.msra.mxu0 0
    %777 = vmatprep.subr.bf16.mxu0 0
    %778 = vmatpush1.bf16.msra.mxu0 0
    %779 = vmatprep.subr.bf16.mxu0 0
    %780 = vmatpush1.bf16.msra.mxu0 0
    %781 = vmatprep.subr.bf16.mxu0 0
    %782 = vmatpush1.bf16.msra.mxu0 0
    %783 = vmatprep.mubr.bf16.mxu0 0
    %784 = vmatmul.mubr.bf16.gmra.mrb[0].mxu0 %v622
    %v785 = vpop.f32.mrb[0].mxu0
    %v786 = vadd.f32 0.0, %v785
    %v787 = vpop.f32.mrb[0].mxu0
    %v788 = vadd.f32 0.0, %v787
    %v789 = vpop.f32.mrb[0].mxu0
    %v790 = vpop.f32.mrb[0].mxu0
    %791 = vdwg.mxu0
    %792 = vmatprep.subr.bf16.mxu0 0
    %793 = vmatpush1.bf16.msra.mxu0 %v705
    %794 = vmatprep.subr.bf16.mxu0 0
    %795 = vmatpush1.bf16.msra.mxu0 %v708
    %796 = vmatprep.subr.bf16.mxu0 0
    %797 = vmatpush1.bf16.msra.mxu0 %v711
    %798 = vmatprep.subr.bf16.mxu0 0
    %799 = vmatpush1.bf16.msra.mxu0 %v714
    %800 = vmatprep.subr.bf16.mxu0 0
    %801 = vmatpush1.bf16.msra.mxu0 %v717
    %802 = vmatprep.subr.bf16.mxu0 0
    %803 = vmatpush1.bf16.msra.mxu0 %v720
    %804 = vmatprep.subr.bf16.mxu0 0
    %805 = vmatpush1.bf16.msra.mxu0 %v723
    %806 = vmatprep.subr.bf16.mxu0 0
    %807 = vmatpush1.bf16.msra.mxu0 %v726
    %808 = vmatprep.subr.bf16.mxu0 0
    %809 = vmatpush1.bf16.msra.mxu0 0
    %810 = vmatprep.subr.bf16.mxu0 0
    %811 = vmatpush1.bf16.msra.mxu0 0
    %812 = vmatprep.subr.bf16.mxu0 0
    %813 = vmatpush1.bf16.msra.mxu0 0
    %814 = vmatprep.subr.bf16.mxu0 0
    %815 = vmatpush1.bf16.msra.mxu0 0
    %816 = vmatprep.subr.bf16.mxu0 0
    %817 = vmatpush1.bf16.msra.mxu0 0
    %818 = vmatprep.subr.bf16.mxu0 0
    %819 = vmatpush1.bf16.msra.mxu0 0
    %820 = vmatprep.subr.bf16.mxu0 0
    %821 = vmatpush1.bf16.msra.mxu0 0
    %822 = vmatprep.subr.bf16.mxu0 0
    %823 = vmatpush1.bf16.msra.mxu0 0
    %824 = vmatprep.mubr.bf16.mxu0 0
    %825 = vmatmul.mubr.bf16.gmra.mrb[0].mxu0 %v622
    %v826 = vpop.f32.mrb[0].mxu0
    %v827 = vadd.f32 0.0, %v826
    %v828 = vpop.f32.mrb[0].mxu0
    %v829 = vpop.f32.mrb[0].mxu0
    %v830 = vpop.f32.mrb[0].mxu0
    %831 = vdwg.mxu0
    %v832 = vadd.f32 %v619, %v786
    %v833 = vxor.u32 %v832, 2147483648
    %v834 = vmul.f32 %v833, 1.442695
    %v835 = vpow.pop %v834
    %v836 = vadd.f32 %v835, 1.0
    %v837 = vrcp.pop %v836
    %v838 = vmul.f32 1.0, %v837
    %v839 = vadd.f32 %v620, %v788
    %v840 = vxor.u32 %v839, 2147483648
    %v841 = vmul.f32 %v840, 1.442695
    %v842 = vpow.pop %v841
    %v843 = vadd.f32 %v842, 1.0
    %v844 = vrcp.pop %v843
    %v845 = vmul.f32 1.0, %v844
    %v846 = vadd.f32 %v827, %v610
    %v847 = vmul.f32 %v838, %v846
    %v848 = vadd.f32 %v621, %v847
    %v849 = vtanh.pop %v848
    %v850 = vsub.f32 1.0, %v845
    %v851 = vmul.f32 %v850, %v849
    %v852 = vmul.f32 %v845, %v612
    %v853 = vadd.f32 %v851, %v852
    %854 = vst [vmem:[#allocation3] sm:$0xff] %v853
    %s855 = smul.u32 1, 3
    %s856 = smul.addr %s855, 8
    %s857 = scalar_lea.vmem [#allocation2], %s856
    %v858 = vld [vmem:[%s857] sm:$0xff]
    %v859 = vld [vmem:[%s857 + $0x8] sm:$0xff]
    %v860 = vld [vmem:[%s857 + $0x10] sm:$0xff]
    %v861 = vadd.f32 %v858, %v304
    %v862 = vadd.f32 %v859, %v306
    %v863 = vadd.f32 %v860, %v345
    %v864 = vpack.c.bf16 %v853, %v853
    %865 = vmatprep.subr.bf16.mxu0 %v704
    %866 = vmatpush1.bf16.msra.mxu0 %v703
    %867 = vmatprep.subr.bf16.mxu0 %v707
    %868 = vmatpush1.bf16.msra.mxu0 %v706
    %869 = vmatprep.subr.bf16.mxu0 %v710
    %870 = vmatpush1.bf16.msra.mxu0 %v709
    %871 = vmatprep.subr.bf16.mxu0 %v713
    %872 = vmatpush1.bf16.msra.mxu0 %v712
    %873 = vmatprep.subr.bf16.mxu0 %v716
    %874 = vmatpush1.bf16.msra.mxu0 %v715
    %875 = vmatprep.subr.bf16.mxu0 %v719
    %876 = vmatpush1.bf16.msra.mxu0 %v718
    %877 = vmatprep.subr.bf16.mxu0 %v722
    %878 = vmatpush1.bf16.msra.mxu0 %v721
    %879 = vmatprep.subr.bf16.mxu0 %v725
    %880 = vmatpush1.bf16.msra.mxu0 %v724
    %881 = vmatprep.subr.bf16.mxu0 0
    %882 = vmatpush1.bf16.msra.mxu0 0
    %883 = vmatprep.subr.bf16.mxu0 0
    %884 = vmatpush1.bf16.msra.mxu0 0
    %885 = vmatprep.subr.bf16.mxu0 0
    %886 = vmatpush1.bf16.msra.mxu0 0
    %887 = vmatprep.subr.bf16.mxu0 0
    %888 = vmatpush1.bf16.msra.mxu0 0
    %889 = vmatprep.subr.bf16.mxu0 0
    %890 = vmatpush1.bf16.msra.mxu0 0
    %891 = vmatprep.subr.bf16.mxu0 0
    %892 = vmatpush1.bf16.msra.mxu0 0
    %893 = vmatprep.subr.bf16.mxu0 0
    %894 = vmatpush1.bf16.msra.mxu0 0
    %895 = vmatprep.subr.bf16.mxu0 0
    %896 = vmatpush1.bf16.msra.mxu0 0
    %897 = vmatprep.mubr.bf16.mxu0 0
    %898 = vmatmul.mubr.bf16.gmra.mrb[0].mxu0 %v864
    %v899 = vpop.f32.mrb[0].mxu0
    %v900 = vadd.f32 0.0, %v899
    %v901 = vpop.f32.mrb[0].mxu0
    %v902 = vadd.f32 0.0, %v901
    %v903 = vpop.f32.mrb[0].mxu0
    %v904 = vpop.f32.mrb[0].mxu0
    %905 = vdwg.mxu0
    %906 = vmatprep.subr.bf16.mxu0 0
    %907 = vmatpush1.bf16.msra.mxu0 %v705
    %908 = vmatprep.subr.bf16.mxu0 0
    %909 = vmatpush1.bf16.msra.mxu0 %v708
    %910 = vmatprep.subr.bf16.mxu0 0
    %911 = vmatpush1.bf16.msra.mxu0 %v711
    %912 = vmatprep.subr.bf16.mxu0 0
    %913 = vmatpush1.bf16.msra.mxu0 %v714
    %914 = vmatprep.subr.bf16.mxu0 0
    %915 = vmatpush1.bf16.msra.mxu0 %v717
    %916 = vmatprep.subr.bf16.mxu0 0
    %917 = vmatpush1.bf16.msra.mxu0 %v720
    %918 = vmatprep.subr.bf16.mxu0 0
    %919 = vmatpush1.bf16.msra.mxu0 %v723
    %920 = vmatprep.subr.bf16.mxu0 0
    %921 = vmatpush1.bf16.msra.mxu0 %v726
    %922 = vmatprep.subr.bf16.mxu0 0
    %923 = vmatpush1.bf16.msra.mxu0 0
    %924 = vmatprep.subr.bf16.mxu0 0
    %925 = vmatpush1.bf16.msra.mxu0 0
    %926 = vmatprep.subr.bf16.mxu0 0
    %927 = vmatpush1.bf16.msra.mxu0 0
    %928 = vmatprep.subr.bf16.mxu0 0
    %929 = vmatpush1.bf16.msra.mxu0 0
    %930 = vmatprep.subr.bf16.mxu0 0
    %931 = vmatpush1.bf16.msra.mxu0 0
    %932 = vmatprep.subr.bf16.mxu0 0
    %933 = vmatpush1.bf16.msra.mxu0 0
    %934 = vmatprep.subr.bf16.mxu0 0
    %935 = vmatpush1.bf16.msra.mxu0 0
    %936 = vmatprep.subr.bf16.mxu0 0
    %937 = vmatpush1.bf16.msra.mxu0 0
    %938 = vmatprep.mubr.bf16.mxu0 0
    %939 = vmatmul.mubr.bf16.gmra.mrb[0].mxu0 %v864
    %v940 = vpop.f32.mrb[0].mxu0
    %v941 = vadd.f32 0.0, %v940
    %v942 = vpop.f32.mrb[0].mxu0
    %v943 = vpop.f32.mrb[0].mxu0
    %v944 = vpop.f32.mrb[0].mxu0
    %945 = vdwg.mxu0
    %v946 = vadd.f32 %v861, %v900
    %v947 = vxor.u32 %v946, 2147483648
    %v948 = vmul.f32 %v947, 1.442695
    %v949 = vpow.pop %v948
    %v950 = vadd.f32 %v949, 1.0
    %v951 = vrcp.pop %v950
    %v952 = vmul.f32 1.0, %v951
    %v953 = vadd.f32 %v862, %v902
    %v954 = vxor.u32 %v953, 2147483648
    %v955 = vmul.f32 %v954, 1.442695
    %v956 = vpow.pop %v955
    %v957 = vadd.f32 %v956, 1.0
    %v958 = vrcp.pop %v957
    %v959 = vmul.f32 1.0, %v958
    %v960 = vadd.f32 %v941, %v610
    %v961 = vmul.f32 %v952, %v960
    %v962 = vadd.f32 %v863, %v961
    %v963 = vtanh.pop %v962
    %v964 = vsub.f32 1.0, %v959
    %v965 = vmul.f32 %v964, %v963
    %v966 = vmul.f32 %v959, %v853
    %v967 = vadd.f32 %v965, %v966
    %s968 = scalar_lea.vmem [#allocation3], 8
    %969 = vst [vmem:[%s968] sm:$0xff] %v967
    %s970 = smul.u32 2, 3
    %s971 = smul.addr %s970, 8
    %s972 = scalar_lea.vmem [#allocation2], %s971
    %v973 = vld [vmem:[%s972] sm:$0xff]
    %v974 = vld [vmem:[%s972 + $0x8] sm:$0xff]
    %v975 = vld [vmem:[%s972 + $0x10] sm:$0xff]
    %v976 = vadd.f32 %v973, %v304
    %v977 = vadd.f32 %v974, %v306
    %v978 = vadd.f32 %v975, %v345
    %v979 = vpack.c.bf16 %v967, %v967
    %980 = vmatprep.subr.bf16.mxu0 %v704
    %981 = vmatpush1.bf16.msra.mxu0 %v703
    %982 = vmatprep.subr.bf16.mxu0 %v707
    %983 = vmatpush1.bf16.msra.mxu0 %v706
    %984 = vmatprep.subr.bf16.mxu0 %v710
    %985 = vmatpush1.bf16.msra.mxu0 %v709
    %986 = vmatprep.subr.bf16.mxu0 %v713
    %987 = vmatpush1.bf16.msra.mxu0 %v712
    %988 = vmatprep.subr.bf16.mxu0 %v716
    %989 = vmatpush1.bf16.msra.mxu0 %v715
    %990 = vmatprep.subr.bf16.mxu0 %v719
    %991 = vmatpush1.bf16.msra.mxu0 %v718
    %992 = vmatprep.subr.bf16.mxu0 %v722
    %993 = vmatpush1.bf16.msra.mxu0 %v721
    %994 = vmatprep.subr.bf16.mxu0 %v725
    %995 = vmatpush1.bf16.msra.mxu0 %v724
    %996 = vmatprep.subr.bf16.mxu0 0
    %997 = vmatpush1.bf16.msra.mxu0 0
    %998 = vmatprep.subr.bf16.mxu0 0
    %999 = vmatpush1.bf16.msra.mxu0 0
    %1000 = vmatprep.subr.bf16.mxu0 0
    %1001 = vmatpush1.bf16.msra.mxu0 0
    %1002 = vmatprep.subr.bf16.mxu0 0
    %1003 = vmatpush1.bf16.msra.mxu0 0
    %1004 = vmatprep.subr.bf16.mxu0 0
    %1005 = vmatpush1.bf16.msra.mxu0 0
    %1006 = vmatprep.subr.bf16.mxu0 0
    %1007 = vmatpush1.bf16.msra.mxu0 0
    %1008 = vmatprep.subr.bf16.mxu0 0
    %1009 = vmatpush1.bf16.msra.mxu0 0
    %1010 = vmatprep.subr.bf16.mxu0 0
    %1011 = vmatpush1.bf16.msra.mxu0 0
    %1012 = vmatprep.mubr.bf16.mxu0 0
    %1013 = vmatmul.mubr.bf16.gmra.mrb[0].mxu0 %v979
    %v1014 = vpop.f32.mrb[0].mxu0
    %v1015 = vadd.f32 0.0, %v1014
    %v1016 = vpop.f32.mrb[0].mxu0
    %v1017 = vadd.f32 0.0, %v1016
    %v1018 = vpop.f32.mrb[0].mxu0
    %v1019 = vpop.f32.mrb[0].mxu0
    %1020 = vdwg.mxu0
    %1021 = vmatprep.subr.bf16.mxu0 0
    %1022 = vmatpush1.bf16.msra.mxu0 %v705
    %1023 = vmatprep.subr.bf16.mxu0 0
    %1024 = vmatpush1.bf16.msra.mxu0 %v708
    %1025 = vmatprep.subr.bf16.mxu0 0
    %1026 = vmatpush1.bf16.msra.mxu0 %v711
    %1027 = vmatprep.subr.bf16.mxu0 0
    %1028 = vmatpush1.bf16.msra.mxu0 %v714
    %1029 = vmatprep.subr.bf16.mxu0 0
    %1030 = vmatpush1.bf16.msra.mxu0 %v717
    %1031 = vmatprep.subr.bf16.mxu0 0
    %1032 = vmatpush1.bf16.msra.mxu0 %v720
    %1033 = vmatprep.subr.bf16.mxu0 0
    %1034 = vmatpush1.bf16.msra.mxu0 %v723
    %1035 = vmatprep.subr.bf16.mxu0 0
    %1036 = vmatpush1.bf16.msra.mxu0 %v726
    %1037 = vmatprep.subr.bf16.mxu0 0
    %1038 = vmatpush1.bf16.msra.mxu0 0
    %1039 = vmatprep.subr.bf16.mxu0 0
    %1040 = vmatpush1.bf16.msra.mxu0 0
    %1041 = vmatprep.subr.bf16.mxu0 0
    %1042 = vmatpush1.bf16.msra.mxu0 0
    %1043 = vmatprep.subr.bf16.mxu0 0
    %1044 = vmatpush1.bf16.msra.mxu0 0
    %1045 = vmatprep.subr.bf16.mxu0 0
    %1046 = vmatpush1.bf16.msra.mxu0 0
    %1047 = vmatprep.subr.bf16.mxu0 0
    %1048 = vmatpush1.bf16.msra.mxu0 0
    %1049 = vmatprep.subr.bf16.mxu0 0
    %1050 = vmatpush1.bf16.msra.mxu0 0
    %1051 = vmatprep.subr.bf16.mxu0 0
    %1052 = vmatpush1.bf16.msra.mxu0 0
    %1053 = vmatprep.mubr.bf16.mxu0 0
    %1054 = vmatmul.mubr.bf16.gmra.mrb[0].mxu0 %v979
    %v1055 = vpop.f32.mrb[0].mxu0
    %v1056 = vadd.f32 0.0, %v1055
    %v1057 = vpop.f32.mrb[0].mxu0
    %v1058 = vpop.f32.mrb[0].mxu0
    %v1059 = vpop.f32.mrb[0].mxu0
    %1060 = vdwg.mxu0
    %v1061 = vadd.f32 %v976, %v1015
    %v1062 = vxor.u32 %v1061, 2147483648
    %v1063 = vmul.f32 %v1062, 1.442695
    %v1064 = vpow.pop %v1063
    %v1065 = vadd.f32 %v1064, 1.0
    %v1066 = vrcp.pop %v1065
    %v1067 = vmul.f32 1.0, %v1066
    %v1068 = vadd.f32 %v977, %v1017
    %v1069 = vxor.u32 %v1068, 2147483648
    %v1070 = vmul.f32 %v1069, 1.442695
    %v1071 = vpow.pop %v1070
    %v1072 = vadd.f32 %v1071, 1.0
    %v1073 = vrcp.pop %v1072
    %v1074 = vmul.f32 1.0, %v1073
    %v1075 = vadd.f32 %v1056, %v610
    %v1076 = vmul.f32 %v1067, %v1075
    %v1077 = vadd.f32 %v978, %v1076
    %v1078 = vtanh.pop %v1077
    %v1079 = vsub.f32 1.0, %v1074
    %v1080 = vmul.f32 %v1079, %v1078
    %v1081 = vmul.f32 %v1074, %v967
    %v1082 = vadd.f32 %v1080, %v1081
    %s1083 = scalar_lea.vmem [#allocation3], 16
    %1084 = vst [vmem:[%s1083] sm:$0xff] %v1082
    %s1085 = smul.u32 3, 3
    %s1086 = smul.addr %s1085, 8
    %s1087 = scalar_lea.vmem [#allocation2], %s1086
    %v1088 = vld [vmem:[%s1087] sm:$0xff]
    %v1089 = vld [vmem:[%s1087 + $0x8] sm:$0xff]
    %v1090 = vld [vmem:[%s1087 + $0x10] sm:$0xff]
    %v1091 = vadd.f32 %v1088, %v304
    %v1092 = vadd.f32 %v1089, %v306
    %v1093 = vadd.f32 %v1090, %v345
    %v1094 = vpack.c.bf16 %v1082, %v1082
    %1095 = vmatprep.subr.bf16.mxu0 %v704
    %1096 = vmatpush1.bf16.msra.mxu0 %v703
    %1097 = vmatprep.subr.bf16.mxu0 %v707
    %1098 = vmatpush1.bf16.msra.mxu0 %v706
    %1099 = vmatprep.subr.bf16.mxu0 %v710
    %1100 = vmatpush1.bf16.msra.mxu0 %v709
    %1101 = vmatprep.subr.bf16.mxu0 %v713
    %1102 = vmatpush1.bf16.msra.mxu0 %v712
    %1103 = vmatprep.subr.bf16.mxu0 %v716
    %1104 = vmatpush1.bf16.msra.mxu0 %v715
    %1105 = vmatprep.subr.bf16.mxu0 %v719
    %1106 = vmatpush1.bf16.msra.mxu0 %v718
    %1107 = vmatprep.subr.bf16.mxu0 %v722
    %1108 = vmatpush1.bf16.msra.mxu0 %v721
    %1109 = vmatprep.subr.bf16.mxu0 %v725
    %1110 = vmatpush1.bf16.msra.mxu0 %v724
    %1111 = vmatprep.subr.bf16.mxu0 0
    %1112 = vmatpush1.bf16.msra.mxu0 0
    %1113 = vmatprep.subr.bf16.mxu0 0
    %1114 = vmatpush1.bf16.msra.mxu0 0
    %1115 = vmatprep.subr.bf16.mxu0 0
    %1116 = vmatpush1.bf16.msra.mxu0 0
    %1117 = vmatprep.subr.bf16.mxu0 0
    %1118 = vmatpush1.bf16.msra.mxu0 0
    %1119 = vmatprep.subr.bf16.mxu0 0
    %1120 = vmatpush1.bf16.msra.mxu0 0
    %1121 = vmatprep.subr.bf16.mxu0 0
    %1122 = vmatpush1.bf16.msra.mxu0 0
    %1123 = vmatprep.subr.bf16.mxu0 0
    %1124 = vmatpush1.bf16.msra.mxu0 0
    %1125 = vmatprep.subr.bf16.mxu0 0
    %1126 = vmatpush1.bf16.msra.mxu0 0
    %1127 = vmatprep.mubr.bf16.mxu0 0
    %1128 = vmatmul.mubr.bf16.gmra.mrb[0].mxu0 %v1094
    %v1129 = vpop.f32.mrb[0].mxu0
    %v1130 = vadd.f32 0.0, %v1129
    %v1131 = vpop.f32.mrb[0].mxu0
    %v1132 = vadd.f32 0.0, %v1131
    %v1133 = vpop.f32.mrb[0].mxu0
    %v1134 = vpop.f32.mrb[0].mxu0
    %1135 = vdwg.mxu0
    %1136 = vmatprep.subr.bf16.mxu0 0
    %1137 = vmatpush1.bf16.msra.mxu0 %v705
    %1138 = vmatprep.subr.bf16.mxu0 0
    %1139 = vmatpush1.bf16.msra.mxu0 %v708
    %1140 = vmatprep.subr.bf16.mxu0 0
    %1141 = vmatpush1.bf16.msra.mxu0 %v711
    %1142 = vmatprep.subr.bf16.mxu0 0
    %1143 = vmatpush1.bf16.msra.mxu0 %v714
    %1144 = vmatprep.subr.bf16.mxu0 0
    %1145 = vmatpush1.bf16.msra.mxu0 %v717
    %1146 = vmatprep.subr.bf16.mxu0 0
    %1147 = vmatpush1.bf16.msra.mxu0 %v720
    %1148 = vmatprep.subr.bf16.mxu0 0
    %1149 = vmatpush1.bf16.msra.mxu0 %v723
    %1150 = vmatprep.subr.bf16.mxu0 0
    %1151 = vmatpush1.bf16.msra.mxu0 %v726
    %1152 = vmatprep.subr.bf16.mxu0 0
    %1153 = vmatpush1.bf16.msra.mxu0 0
    %1154 = vmatprep.subr.bf16.mxu0 0
    %1155 = vmatpush1.bf16.msra.mxu0 0
    %1156 = vmatprep.subr.bf16.mxu0 0
    %1157 = vmatpush1.bf16.msra.mxu0 0
    %1158 = vmatprep.subr.bf16.mxu0 0
    %1159 = vmatpush1.bf16.msra.mxu0 0
    %1160 = vmatprep.subr.bf16.mxu0 0
    %1161 = vmatpush1.bf16.msra.mxu0 0
    %1162 = vmatprep.subr.bf16.mxu0 0
    %1163 = vmatpush1.bf16.msra.mxu0 0
    %1164 = vmatprep.subr.bf16.mxu0 0
    %1165 = vmatpush1.bf16.msra.mxu0 0
    %1166 = vmatprep.subr.bf16.mxu0 0
    %1167 = vmatpush1.bf16.msra.mxu0 0
    %1168 = vmatprep.mubr.bf16.mxu0 0
    %1169 = vmatmul.mubr.bf16.gmra.mrb[0].mxu0 %v1094
    %v1170 = vpop.f32.mrb[0].mxu0
    %v1171 = vadd.f32 0.0, %v1170
    %v1172 = vpop.f32.mrb[0].mxu0
    %v1173 = vpop.f32.mrb[0].mxu0
    %v1174 = vpop.f32.mrb[0].mxu0
    %1175 = vdwg.mxu0
    %v1176 = vadd.f32 %v1091, %v1130
    %v1177 = vxor.u32 %v1176, 2147483648
    %v1178 = vmul.f32 %v1177, 1.442695
    %v1179 = vpow.pop %v1178
    %v1180 = vadd.f32 %v1179, 1.0
    %v1181 = vrcp.pop %v1180
    %v1182 = vmul.f32 1.0, %v1181
    %v1183 = vadd.f32 %v1092, %v1132
    %v1184 = vxor.u32 %v1183, 2147483648
    %v1185 = vmul.f32 %v1184, 1.442695
    %v1186 = vpow.pop %v1185
    %v1187 = vadd.f32 %v1186, 1.0
    %v1188 = vrcp.pop %v1187
    %v1189 = vmul.f32 1.0, %v1188
    %v1190 = vadd.f32 %v1171, %v610
    %v1191 = vmul.f32 %v1182, %v1190
    %v1192 = vadd.f32 %v1093, %v1191
    %v1193 = vtanh.pop %v1192
    %v1194 = vsub.f32 1.0, %v1189
    %v1195 = vmul.f32 %v1194, %v1193
    %v1196 = vmul.f32 %v1189, %v1082
    %v1197 = vadd.f32 %v1195, %v1196
    %s1198 = scalar_lea.vmem [#allocation3], 24
    %1199 = vst [vmem:[%s1198] sm:$0xff] %v1197
    %s1200 = smul.u32 4, 3
    %s1201 = smul.addr %s1200, 8
    %s1202 = scalar_lea.vmem [#allocation2], %s1201
    %v1203 = vld [vmem:[%s1202] sm:$0xff]
    %v1204 = vld [vmem:[%s1202 + $0x8] sm:$0xff]
    %v1205 = vld [vmem:[%s1202 + $0x10] sm:$0xff]
    %v1206 = vadd.f32 %v1203, %v304
    %v1207 = vadd.f32 %v1204, %v306
    %v1208 = vadd.f32 %v1205, %v345
    %v1209 = vpack.c.bf16 %v1197, %v1197
    %1210 = vmatprep.subr.bf16.mxu0 %v704
    %1211 = vmatpush1.bf16.msra.mxu0 %v703
    %1212 = vmatprep.subr.bf16.mxu0 %v707
    %1213 = vmatpush1.bf16.msra.mxu0 %v706
    %1214 = vmatprep.subr.bf16.mxu0 %v710
    %1215 = vmatpush1.bf16.msra.mxu0 %v709
    %1216 = vmatprep.subr.bf16.mxu0 %v713
    %1217 = vmatpush1.bf16.msra.mxu0 %v712
    %1218 = vmatprep.subr.bf16.mxu0 %v716
    %1219 = vmatpush1.bf16.msra.mxu0 %v715
    %1220 = vmatprep.subr.bf16.mxu0 %v719
    %1221 = vmatpush1.bf16.msra.mxu0 %v718
    %1222 = vmatprep.subr.bf16.mxu0 %v722
    %1223 = vmatpush1.bf16.msra.mxu0 %v721
    %1224 = vmatprep.subr.bf16.mxu0 %v725
    %1225 = vmatpush1.bf16.msra.mxu0 %v724
    %1226 = vmatprep.subr.bf16.mxu0 0
    %1227 = vmatpush1.bf16.msra.mxu0 0
    %1228 = vmatprep.subr.bf16.mxu0 0
    %1229 = vmatpush1.bf16.msra.mxu0 0
    %1230 = vmatprep.subr.bf16.mxu0 0
    %1231 = vmatpush1.bf16.msra.mxu0 0
    %1232 = vmatprep.subr.bf16.mxu0 0
    %1233 = vmatpush1.bf16.msra.mxu0 0
    %1234 = vmatprep.subr.bf16.mxu0 0
    %1235 = vmatpush1.bf16.msra.mxu0 0
    %1236 = vmatprep.subr.bf16.mxu0 0
    %1237 = vmatpush1.bf16.msra.mxu0 0
    %1238 = vmatprep.subr.bf16.mxu0 0
    %1239 = vmatpush1.bf16.msra.mxu0 0
    %1240 = vmatprep.subr.bf16.mxu0 0
    %1241 = vmatpush1.bf16.msra.mxu0 0
    %1242 = vmatprep.mubr.bf16.mxu0 0
    %1243 = vmatmul.mubr.bf16.gmra.mrb[0].mxu0 %v1209
    %v1244 = vpop.f32.mrb[0].mxu0
    %v1245 = vadd.f32 0.0, %v1244
    %v1246 = vpop.f32.mrb[0].mxu0
    %v1247 = vadd.f32 0.0, %v1246
    %v1248 = vpop.f32.mrb[0].mxu0
    %v1249 = vpop.f32.mrb[0].mxu0
    %1250 = vdwg.mxu0
    %1251 = vmatprep.subr.bf16.mxu0 0
    %1252 = vmatpush1.bf16.msra.mxu0 %v705
    %1253 = vmatprep.subr.bf16.mxu0 0
    %1254 = vmatpush1.bf16.msra.mxu0 %v708
    %1255 = vmatprep.subr.bf16.mxu0 0
    %1256 = vmatpush1.bf16.msra.mxu0 %v711
    %1257 = vmatprep.subr.bf16.mxu0 0
    %1258 = vmatpush1.bf16.msra.mxu0 %v714
    %1259 = vmatprep.subr.bf16.mxu0 0
    %1260 = vmatpush1.bf16.msra.mxu0 %v717
    %1261 = vmatprep.subr.bf16.mxu0 0
    %1262 = vmatpush1.bf16.msra.mxu0 %v720
    %1263 = vmatprep.subr.bf16.mxu0 0
    %1264 = vmatpush1.bf16.msra.mxu0 %v723
    %1265 = vmatprep.subr.bf16.mxu0 0
    %1266 = vmatpush1.bf16.msra.mxu0 %v726
    %1267 = vmatprep.subr.bf16.mxu0 0
    %1268 = vmatpush1.bf16.msra.mxu0 0
    %1269 = vmatprep.subr.bf16.mxu0 0
    %1270 = vmatpush1.bf16.msra.mxu0 0
    %1271 = vmatprep.subr.bf16.mxu0 0
    %1272 = vmatpush1.bf16.msra.mxu0 0
    %1273 = vmatprep.subr.bf16.mxu0 0
    %1274 = vmatpush1.bf16.msra.mxu0 0
    %1275 = vmatprep.subr.bf16.mxu0 0
    %1276 = vmatpush1.bf16.msra.mxu0 0
    %1277 = vmatprep.subr.bf16.mxu0 0
    %1278 = vmatpush1.bf16.msra.mxu0 0
    %1279 = vmatprep.subr.bf16.mxu0 0
    %1280 = vmatpush1.bf16.msra.mxu0 0
    %1281 = vmatprep.subr.bf16.mxu0 0
    %1282 = vmatpush1.bf16.msra.mxu0 0
    %1283 = vmatprep.mubr.bf16.mxu0 0
    %1284 = vmatmul.mubr.bf16.gmra.mrb[0].mxu0 %v1209
    %v1285 = vpop.f32.mrb[0].mxu0
    %v1286 = vadd.f32 0.0, %v1285
    %v1287 = vpop.f32.mrb[0].mxu0
    %v1288 = vpop.f32.mrb[0].mxu0
    %v1289 = vpop.f32.mrb[0].mxu0
    %1290 = vdwg.mxu0
    %v1291 = vadd.f32 %v1206, %v1245
    %v1292 = vxor.u32 %v1291, 2147483648
    %v1293 = vmul.f32 %v1292, 1.442695
    %v1294 = vpow.pop %v1293
    %v1295 = vadd.f32 %v1294, 1.0
    %v1296 = vrcp.pop %v1295
    %v1297 = vmul.f32 1.0, %v1296
    %v1298 = vadd.f32 %v1207, %v1247
    %v1299 = vxor.u32 %v1298, 2147483648
    %v1300 = vmul.f32 %v1299, 1.442695
    %v1301 = vpow.pop %v1300
    %v1302 = vadd.f32 %v1301, 1.0
    %v1303 = vrcp.pop %v1302
    %v1304 = vmul.f32 1.0, %v1303
    %v1305 = vadd.f32 %v1286, %v610
    %v1306 = vmul.f32 %v1297, %v1305
    %v1307 = vadd.f32 %v1208, %v1306
    %v1308 = vtanh.pop %v1307
    %v1309 = vsub.f32 1.0, %v1304
    %v1310 = vmul.f32 %v1309, %v1308
    %v1311 = vmul.f32 %v1304, %v1197
    %v1312 = vadd.f32 %v1310, %v1311
    %s1313 = scalar_lea.vmem [#allocation3], 32
    %1314 = vst [vmem:[%s1313] sm:$0xff] %v1312
    %s1315 = smul.u32 5, 3
    %s1316 = smul.addr %s1315, 8
    %s1317 = scalar_lea.vmem [#allocation2], %s1316
    %v1318 = vld [vmem:[%s1317] sm:$0xff]
    %v1319 = vld [vmem:[%s1317 + $0x8] sm:$0xff]
    %v1320 = vld [vmem:[%s1317 + $0x10] sm:$0xff]
    %v1321 = vadd.f32 %v1318, %v304
    %v1322 = vadd.f32 %v1319, %v306
    %v1323 = vadd.f32 %v1320, %v345
    %v1324 = vpack.c.bf16 %v1312, %v1312
    %1325 = vmatprep.subr.bf16.mxu0 %v704
    %1326 = vmatpush1.bf16.msra.mxu0 %v703
    %1327 = vmatprep.subr.bf16.mxu0 %v707
    %1328 = vmatpush1.bf16.msra.mxu0 %v706
    %1329 = vmatprep.subr.bf16.mxu0 %v710
    %1330 = vmatpush1.bf16.msra.mxu0 %v709
    %1331 = vmatprep.subr.bf16.mxu0 %v713
    %1332 = vmatpush1.bf16.msra.mxu0 %v712
    %1333 = vmatprep.subr.bf16.mxu0 %v716
    %1334 = vmatpush1.bf16.msra.mxu0 %v715
    %1335 = vmatprep.subr.bf16.mxu0 %v719
    %1336 = vmatpush1.bf16.msra.mxu0 %v718
    %1337 = vmatprep.subr.bf16.mxu0 %v722
    %1338 = vmatpush1.bf16.msra.mxu0 %v721
    %1339 = vmatprep.subr.bf16.mxu0 %v725
    %1340 = vmatpush1.bf16.msra.mxu0 %v724
    %1341 = vmatprep.subr.bf16.mxu0 0
    %1342 = vmatpush1.bf16.msra.mxu0 0
    %1343 = vmatprep.subr.bf16.mxu0 0
    %1344 = vmatpush1.bf16.msra.mxu0 0
    %1345 = vmatprep.subr.bf16.mxu0 0
    %1346 = vmatpush1.bf16.msra.mxu0 0
    %1347 = vmatprep.subr.bf16.mxu0 0
    %1348 = vmatpush1.bf16.msra.mxu0 0
    %1349 = vmatprep.subr.bf16.mxu0 0
    %1350 = vmatpush1.bf16.msra.mxu0 0
    %1351 = vmatprep.subr.bf16.mxu0 0
    %1352 = vmatpush1.bf16.msra.mxu0 0
    %1353 = vmatprep.subr.bf16.mxu0 0
    %1354 = vmatpush1.bf16.msra.mxu0 0
    %1355 = vmatprep.subr.bf16.mxu0 0
    %1356 = vmatpush1.bf16.msra.mxu0 0
    %1357 = vmatprep.mubr.bf16.mxu0 0
    %1358 = vmatmul.mubr.bf16.gmra.mrb[0].mxu0 %v1324
    %v1359 = vpop.f32.mrb[0].mxu0
    %v1360 = vadd.f32 0.0, %v1359
    %v1361 = vpop.f32.mrb[0].mxu0
    %v1362 = vadd.f32 0.0, %v1361
    %v1363 = vpop.f32.mrb[0].mxu0
    %v1364 = vpop.f32.mrb[0].mxu0
    %1365 = vdwg.mxu0
    %1366 = vmatprep.subr.bf16.mxu0 0
    %1367 = vmatpush1.bf16.msra.mxu0 %v705
    %1368 = vmatprep.subr.bf16.mxu0 0
    %1369 = vmatpush1.bf16.msra.mxu0 %v708
    %1370 = vmatprep.subr.bf16.mxu0 0
    %1371 = vmatpush1.bf16.msra.mxu0 %v711
    %1372 = vmatprep.subr.bf16.mxu0 0
    %1373 = vmatpush1.bf16.msra.mxu0 %v714
    %1374 = vmatprep.subr.bf16.mxu0 0
    %1375 = vmatpush1.bf16.msra.mxu0 %v717
    %1376 = vmatprep.subr.bf16.mxu0 0
    %1377 = vmatpush1.bf16.msra.mxu0 %v720
    %1378 = vmatprep.subr.bf16.mxu0 0
    %1379 = vmatpush1.bf16.msra.mxu0 %v723
    %1380 = vmatprep.subr.bf16.mxu0 0
    %1381 = vmatpush1.bf16.msra.mxu0 %v726
    %1382 = vmatprep.subr.bf16.mxu0 0
    %1383 = vmatpush1.bf16.msra.mxu0 0
    %1384 = vmatprep.subr.bf16.mxu0 0
    %1385 = vmatpush1.bf16.msra.mxu0 0
    %1386 = vmatprep.subr.bf16.mxu0 0
    %1387 = vmatpush1.bf16.msra.mxu0 0
    %1388 = vmatprep.subr.bf16.mxu0 0
    %1389 = vmatpush1.bf16.msra.mxu0 0
    %1390 = vmatprep.subr.bf16.mxu0 0
    %1391 = vmatpush1.bf16.msra.mxu0 0
    %1392 = vmatprep.subr.bf16.mxu0 0
    %1393 = vmatpush1.bf16.msra.mxu0 0
    %1394 = vmatprep.subr.bf16.mxu0 0
    %1395 = vmatpush1.bf16.msra.mxu0 0
    %1396 = vmatprep.subr.bf16.mxu0 0
    %1397 = vmatpush1.bf16.msra.mxu0 0
    %1398 = vmatprep.mubr.bf16.mxu0 0
    %1399 = vmatmul.mubr.bf16.gmra.mrb[0].mxu0 %v1324
    %v1400 = vpop.f32.mrb[0].mxu0
    %v1401 = vadd.f32 0.0, %v1400
    %v1402 = vpop.f32.mrb[0].mxu0
    %v1403 = vpop.f32.mrb[0].mxu0
    %v1404 = vpop.f32.mrb[0].mxu0
    %1405 = vdwg.mxu0
    %v1406 = vadd.f32 %v1321, %v1360
    %v1407 = vxor.u32 %v1406, 2147483648
    %v1408 = vmul.f32 %v1407, 1.442695
    %v1409 = vpow.pop %v1408
    %v1410 = vadd.f32 %v1409, 1.0
    %v1411 = vrcp.pop %v1410
    %v1412 = vmul.f32 1.0, %v1411
    %v1413 = vadd.f32 %v1322, %v1362
    %v1414 = vxor.u32 %v1413, 2147483648
    %v1415 = vmul.f32 %v1414, 1.442695
    %v1416 = vpow.pop %v1415
    %v1417 = vadd.f32 %v1416, 1.0
    %v1418 = vrcp.pop %v1417
    %v1419 = vmul.f32 1.0, %v1418
    %v1420 = vadd.f32 %v1401, %v610
    %v1421 = vmul.f32 %v1412, %v1420
    %v1422 = vadd.f32 %v1323, %v1421
    %v1423 = vtanh.pop %v1422
    %v1424 = vsub.f32 1.0, %v1419
    %v1425 = vmul.f32 %v1424, %v1423
    %v1426 = vmul.f32 %v1419, %v1312
    %v1427 = vadd.f32 %v1425, %v1426
    %s1428 = scalar_lea.vmem [#allocation3], 40
    %1429 = vst [vmem:[%s1428] sm:$0xff] %v1427
    %s1430 = smul.u32 6, 3
    %s1431 = smul.addr %s1430, 8
    %s1432 = scalar_lea.vmem [#allocation2], %s1431
    %v1433 = vld [vmem:[%s1432] sm:$0xff]
    %v1434 = vld [vmem:[%s1432 + $0x8] sm:$0xff]
    %v1435 = vld [vmem:[%s1432 + $0x10] sm:$0xff]
    %v1436 = vadd.f32 %v1433, %v304
    %v1437 = vadd.f32 %v1434, %v306
    %v1438 = vadd.f32 %v1435, %v345
    %v1439 = vpack.c.bf16 %v1427, %v1427
    %1440 = vmatprep.subr.bf16.mxu0 %v704
    %1441 = vmatpush1.bf16.msra.mxu0 %v703
    %1442 = vmatprep.subr.bf16.mxu0 %v707
    %1443 = vmatpush1.bf16.msra.mxu0 %v706
    %1444 = vmatprep.subr.bf16.mxu0 %v710
    %1445 = vmatpush1.bf16.msra.mxu0 %v709
    %1446 = vmatprep.subr.bf16.mxu0 %v713
    %1447 = vmatpush1.bf16.msra.mxu0 %v712
    %1448 = vmatprep.subr.bf16.mxu0 %v716
    %1449 = vmatpush1.bf16.msra.mxu0 %v715
    %1450 = vmatprep.subr.bf16.mxu0 %v719
    %1451 = vmatpush1.bf16.msra.mxu0 %v718
    %1452 = vmatprep.subr.bf16.mxu0 %v722
    %1453 = vmatpush1.bf16.msra.mxu0 %v721
    %1454 = vmatprep.subr.bf16.mxu0 %v725
    %1455 = vmatpush1.bf16.msra.mxu0 %v724
    %1456 = vmatprep.subr.bf16.mxu0 0
    %1457 = vmatpush1.bf16.msra.mxu0 0
    %1458 = vmatprep.subr.bf16.mxu0 0
    %1459 = vmatpush1.bf16.msra.mxu0 0
    %1460 = vmatprep.subr.bf16.mxu0 0
    %1461 = vmatpush1.bf16.msra.mxu0 0
    %1462 = vmatprep.subr.bf16.mxu0 0
    %1463 = vmatpush1.bf16.msra.mxu0 0
    %1464 = vmatprep.subr.bf16.mxu0 0
    %1465 = vmatpush1.bf16.msra.mxu0 0
    %1466 = vmatprep.subr.bf16.mxu0 0
    %1467 = vmatpush1.bf16.msra.mxu0 0
    %1468 = vmatprep.subr.bf16.mxu0 0
    %1469 = vmatpush1.bf16.msra.mxu0 0
    %1470 = vmatprep.subr.bf16.mxu0 0
    %1471 = vmatpush1.bf16.msra.mxu0 0
    %1472 = vmatprep.mubr.bf16.mxu0 0
    %1473 = vmatmul.mubr.bf16.gmra.mrb[0].mxu0 %v1439
    %v1474 = vpop.f32.mrb[0].mxu0
    %v1475 = vadd.f32 0.0, %v1474
    %v1476 = vpop.f32.mrb[0].mxu0
    %v1477 = vadd.f32 0.0, %v1476
    %v1478 = vpop.f32.mrb[0].mxu0
    %v1479 = vpop.f32.mrb[0].mxu0
    %1480 = vdwg.mxu0
    %1481 = vmatprep.subr.bf16.mxu0 0
    %1482 = vmatpush1.bf16.msra.mxu0 %v705
    %1483 = vmatprep.subr.bf16.mxu0 0
    %1484 = vmatpush1.bf16.msra.mxu0 %v708
    %1485 = vmatprep.subr.bf16.mxu0 0
    %1486 = vmatpush1.bf16.msra.mxu0 %v711
    %1487 = vmatprep.subr.bf16.mxu0 0
    %1488 = vmatpush1.bf16.msra.mxu0 %v714
    %1489 = vmatprep.subr.bf16.mxu0 0
    %1490 = vmatpush1.bf16.msra.mxu0 %v717
    %1491 = vmatprep.subr.bf16.mxu0 0
    %1492 = vmatpush1.bf16.msra.mxu0 %v720
    %1493 = vmatprep.subr.bf16.mxu0 0
    %1494 = vmatpush1.bf16.msra.mxu0 %v723
    %1495 = vmatprep.subr.bf16.mxu0 0
    %1496 = vmatpush1.bf16.msra.mxu0 %v726
    %1497 = vmatprep.subr.bf16.mxu0 0
    %1498 = vmatpush1.bf16.msra.mxu0 0
    %1499 = vmatprep.subr.bf16.mxu0 0
    %1500 = vmatpush1.bf16.msra.mxu0 0
    %1501 = vmatprep.subr.bf16.mxu0 0
    %1502 = vmatpush1.bf16.msra.mxu0 0
    %1503 = vmatprep.subr.bf16.mxu0 0
    %1504 = vmatpush1.bf16.msra.mxu0 0
    %1505 = vmatprep.subr.bf16.mxu0 0
    %1506 = vmatpush1.bf16.msra.mxu0 0
    %1507 = vmatprep.subr.bf16.mxu0 0
    %1508 = vmatpush1.bf16.msra.mxu0 0
    %1509 = vmatprep.subr.bf16.mxu0 0
    %1510 = vmatpush1.bf16.msra.mxu0 0
    %1511 = vmatprep.subr.bf16.mxu0 0
    %1512 = vmatpush1.bf16.msra.mxu0 0
    %1513 = vmatprep.mubr.bf16.mxu0 0
    %1514 = vmatmul.mubr.bf16.gmra.mrb[0].mxu0 %v1439
    %v1515 = vpop.f32.mrb[0].mxu0
    %v1516 = vadd.f32 0.0, %v1515
    %v1517 = vpop.f32.mrb[0].mxu0
    %v1518 = vpop.f32.mrb[0].mxu0
    %v1519 = vpop.f32.mrb[0].mxu0
    %1520 = vdwg.mxu0
    %v1521 = vadd.f32 %v1436, %v1475
    %v1522 = vxor.u32 %v1521, 2147483648
    %v1523 = vmul.f32 %v1522, 1.442695
    %v1524 = vpow.pop %v1523
    %v1525 = vadd.f32 %v1524, 1.0
    %v1526 = vrcp.pop %v1525
    %v1527 = vmul.f32 1.0, %v1526
    %v1528 = vadd.f32 %v1437, %v1477
    %v1529 = vxor.u32 %v1528, 2147483648
    %v1530 = vmul.f32 %v1529, 1.442695
    %v1531 = vpow.pop %v1530
    %v1532 = vadd.f32 %v1531, 1.0
    %v1533 = vrcp.pop %v1532
    %v1534 = vmul.f32 1.0, %v1533
    %v1535 = vadd.f32 %v1516, %v610
    %v1536 = vmul.f32 %v1527, %v1535
    %v1537 = vadd.f32 %v1438, %v1536
    %v1538 = vtanh.pop %v1537
    %v1539 = vsub.f32 1.0, %v1534
    %v1540 = vmul.f32 %v1539, %v1538
    %v1541 = vmul.f32 %v1534, %v1427
    %v1542 = vadd.f32 %v1540, %v1541
    %s1543 = scalar_lea.vmem [#allocation3], 48
    %1544 = vst [vmem:[%s1543] sm:$0xff] %v1542
    %s1545 = smul.u32 7, 3
    %s1546 = smul.addr %s1545, 8
    %s1547 = scalar_lea.vmem [#allocation2], %s1546
    %v1548 = vld [vmem:[%s1547] sm:$0xff]
    %v1549 = vld [vmem:[%s1547 + $0x8] sm:$0xff]
    %v1550 = vld [vmem:[%s1547 + $0x10] sm:$0xff]
    %v1551 = vadd.f32 %v1548, %v304
    %v1552 = vadd.f32 %v1549, %v306
    %v1553 = vadd.f32 %v1550, %v345
    %v1554 = vpack.c.bf16 %v1542, %v1542
    %1555 = vmatprep.subr.bf16.mxu0 %v704
    %1556 = vmatpush1.bf16.msra.mxu0 %v703
    %1557 = vmatprep.subr.bf16.mxu0 %v707
    %1558 = vmatpush1.bf16.msra.mxu0 %v706
    %1559 = vmatprep.subr.bf16.mxu0 %v710
    %1560 = vmatpush1.bf16.msra.mxu0 %v709
    %1561 = vmatprep.subr.bf16.mxu0 %v713
    %1562 = vmatpush1.bf16.msra.mxu0 %v712
    %1563 = vmatprep.subr.bf16.mxu0 %v716
    %1564 = vmatpush1.bf16.msra.mxu0 %v715
    %1565 = vmatprep.subr.bf16.mxu0 %v719
    %1566 = vmatpush1.bf16.msra.mxu0 %v718
    %1567 = vmatprep.subr.bf16.mxu0 %v722
    %1568 = vmatpush1.bf16.msra.mxu0 %v721
    %1569 = vmatprep.subr.bf16.mxu0 %v725
    %1570 = vmatpush1.bf16.msra.mxu0 %v724
    %1571 = vmatprep.subr.bf16.mxu0 0
    %1572 = vmatpush1.bf16.msra.mxu0 0
    %1573 = vmatprep.subr.bf16.mxu0 0
    %1574 = vmatpush1.bf16.msra.mxu0 0
    %1575 = vmatprep.subr.bf16.mxu0 0
    %1576 = vmatpush1.bf16.msra.mxu0 0
    %1577 = vmatprep.subr.bf16.mxu0 0
    %1578 = vmatpush1.bf16.msra.mxu0 0
    %1579 = vmatprep.subr.bf16.mxu0 0
    %1580 = vmatpush1.bf16.msra.mxu0 0
    %1581 = vmatprep.subr.bf16.mxu0 0
    %1582 = vmatpush1.bf16.msra.mxu0 0
    %1583 = vmatprep.subr.bf16.mxu0 0
    %1584 = vmatpush1.bf16.msra.mxu0 0
    %1585 = vmatprep.subr.bf16.mxu0 0
    %1586 = vmatpush1.bf16.msra.mxu0 0
    %1587 = vmatprep.mubr.bf16.mxu0 0
    %1588 = vmatmul.mubr.bf16.gmra.mrb[0].mxu0 %v1554
    %v1589 = vpop.f32.mrb[0].mxu0
    %v1590 = vadd.f32 0.0, %v1589
    %v1591 = vpop.f32.mrb[0].mxu0
    %v1592 = vadd.f32 0.0, %v1591
    %v1593 = vpop.f32.mrb[0].mxu0
    %v1594 = vpop.f32.mrb[0].mxu0
    %1595 = vdwg.mxu0
    %1596 = vmatprep.subr.bf16.mxu0 0
    %1597 = vmatpush1.bf16.msra.mxu0 %v705
    %1598 = vmatprep.subr.bf16.mxu0 0
    %1599 = vmatpush1.bf16.msra.mxu0 %v708
    %1600 = vmatprep.subr.bf16.mxu0 0
    %1601 = vmatpush1.bf16.msra.mxu0 %v711
    %1602 = vmatprep.subr.bf16.mxu0 0
    %1603 = vmatpush1.bf16.msra.mxu0 %v714
    %1604 = vmatprep.subr.bf16.mxu0 0
    %1605 = vmatpush1.bf16.msra.mxu0 %v717
    %1606 = vmatprep.subr.bf16.mxu0 0
    %1607 = vmatpush1.bf16.msra.mxu0 %v720
    %1608 = vmatprep.subr.bf16.mxu0 0
    %1609 = vmatpush1.bf16.msra.mxu0 %v723
    %1610 = vmatprep.subr.bf16.mxu0 0
    %1611 = vmatpush1.bf16.msra.mxu0 %v726
    %1612 = vmatprep.subr.bf16.mxu0 0
    %1613 = vmatpush1.bf16.msra.mxu0 0
    %1614 = vmatprep.subr.bf16.mxu0 0
    %1615 = vmatpush1.bf16.msra.mxu0 0
    %1616 = vmatprep.subr.bf16.mxu0 0
    %1617 = vmatpush1.bf16.msra.mxu0 0
    %1618 = vmatprep.subr.bf16.mxu0 0
    %1619 = vmatpush1.bf16.msra.mxu0 0
    %1620 = vmatprep.subr.bf16.mxu0 0
    %1621 = vmatpush1.bf16.msra.mxu0 0
    %1622 = vmatprep.subr.bf16.mxu0 0
    %1623 = vmatpush1.bf16.msra.mxu0 0
    %1624 = vmatprep.subr.bf16.mxu0 0
    %1625 = vmatpush1.bf16.msra.mxu0 0
    %1626 = vmatprep.subr.bf16.mxu0 0
    %1627 = vmatpush1.bf16.msra.mxu0 0
    %1628 = vmatprep.mubr.bf16.mxu0 0
    %1629 = vmatmul.mubr.bf16.gmra.mrb[0].mxu0 %v1554
    %v1630 = vpop.f32.mrb[0].mxu0
    %v1631 = vadd.f32 0.0, %v1630
    %v1632 = vpop.f32.mrb[0].mxu0
    %v1633 = vpop.f32.mrb[0].mxu0
    %v1634 = vpop.f32.mrb[0].mxu0
    %1635 = vdwg.mxu0
    %v1636 = vadd.f32 %v1551, %v1590
    %v1637 = vxor.u32 %v1636, 2147483648
    %v1638 = vmul.f32 %v1637, 1.442695
    %v1639 = vpow.pop %v1638
    %v1640 = vadd.f32 %v1639, 1.0
    %v1641 = vrcp.pop %v1640
    %v1642 = vmul.f32 1.0, %v1641
    %v1643 = vadd.f32 %v1552, %v1592
    %v1644 = vxor.u32 %v1643, 2147483648
    %v1645 = vmul.f32 %v1644, 1.442695
    %v1646 = vpow.pop %v1645
    %v1647 = vadd.f32 %v1646, 1.0
    %v1648 = vrcp.pop %v1647
    %v1649 = vmul.f32 1.0, %v1648
    %v1650 = vadd.f32 %v1631, %v610
    %v1651 = vmul.f32 %v1642, %v1650
    %v1652 = vadd.f32 %v1553, %v1651
    %v1653 = vtanh.pop %v1652
    %v1654 = vsub.f32 1.0, %v1649
    %v1655 = vmul.f32 %v1654, %v1653
    %v1656 = vmul.f32 %v1649, %v1542
    %v1657 = vadd.f32 %v1655, %v1656
    %s1658 = scalar_lea.vmem [#allocation3], 56
    %1659 = vst [vmem:[%s1658] sm:$0xff] %v1657
    %1660 = vst [vmem:[#allocation13] sm:$0xff] %v1657
    %v1661 = vld [vmem:[#allocation3] sm:$0xff]
    %v1662 = vld [vmem:[#allocation3 + $0x8] sm:$0xff]
    %v1663 = vld [vmem:[#allocation3 + $0x10] sm:$0xff]
    %v1664 = vld [vmem:[#allocation3 + $0x18] sm:$0xff]
    %v1665 = vld [vmem:[#allocation3 + $0x20] sm:$0xff]
    %v1666 = vld [vmem:[#allocation3 + $0x28] sm:$0xff]
    %v1667 = vld [vmem:[#allocation3 + $0x30] sm:$0xff]
    %v1668 = vld [vmem:[#allocation3 + $0x38] sm:$0xff]
    %v1669 = vpack.c.bf16 %v1662, %v1661
    %v1670 = vpack.c.bf16 %v1664, %v1663
    %v1671 = vpack.c.bf16 %v1666, %v1665
    %v1672 = vpack.c.bf16 %v1668, %v1667
    %v1673 = vld [vmem:[#allocation9] sm:$0xff]
    %v1674 = vld [vmem:[#allocation9 + $0x8] sm:$0xf]
    %v1675 = vld [vmem:[#allocation9 + $0xc] sm:$0xff]
    %v1676 = vld [vmem:[#allocation9 + $0x14] sm:$0xf]
    %v1677 = vld [vmem:[#allocation9 + $0x18] sm:$0xff]
    %v1678 = vld [vmem:[#allocation9 + $0x20] sm:$0xf]
    %v1679 = vld [vmem:[#allocation9 + $0x24] sm:$0xff]
    %v1680 = vld [vmem:[#allocation9 + $0x2c] sm:$0xf]
    %v1681 = vld [vmem:[#allocation9 + $0x30] sm:$0xff]
    %v1682 = vld [vmem:[#allocation9 + $0x38] sm:$0xf]
    %v1683 = vld [vmem:[#allocation9 + $0x3c] sm:$0xff]
    %v1684 = vld [vmem:[#allocation9 + $0x44] sm:$0xf]
    %v1685 = vld [vmem:[#allocation9 + $0x48] sm:$0xff]
    %v1686 = vld [vmem:[#allocation9 + $0x50] sm:$0xf]
    %v1687 = vld [vmem:[#allocation9 + $0x54] sm:$0xff]
    %v1688 = vld [vmem:[#allocation9 + $0x5c] sm:$0xf]
    %v1689 = vld [vmem:[#allocation9 + $0x60] sm:$0xff]
    %v1690 = vld [vmem:[#allocation9 + $0x68] sm:$0xf]
    %v1691 = vld [vmem:[#allocation9 + $0x6c] sm:$0xff]
    %v1692 = vld [vmem:[#allocation9 + $0x74] sm:$0xf]
    %v1693 = vld [vmem:[#allocation9 + $0x78] sm:$0xff]
    %v1694 = vld [vmem:[#allocation9 + $0x80] sm:$0xf]
    %v1695 = vld [vmem:[#allocation9 + $0x84] sm:$0xff]
    %v1696 = vld [vmem:[#allocation9 + $0x8c] sm:$0xf]
    %v1697 = vld [vmem:[#allocation9 + $0x90] sm:$0xff]
    %v1698 = vld [vmem:[#allocation9 + $0x98] sm:$0xf]
    %v1699 = vld [vmem:[#allocation9 + $0x9c] sm:$0xff]
    %v1700 = vld [vmem:[#allocation9 + $0xa4] sm:$0xf]
    %v1701 = vld [vmem:[#allocation9 + $0xa8] sm:$0xff]
    %v1702 = vld [vmem:[#allocation9 + $0xb0] sm:$0xf]
    %v1703 = vld [vmem:[#allocation9 + $0xb4] sm:$0xff]
    %v1704 = vld [vmem:[#allocation9 + $0xbc] sm:$0xf]
    %s1705 = scalar_lea.vmem %s7, 3
    %v1706 = vld [vmem:[%s1705] sm:$0x7]
    %v1708 = vlaneseq
    %v1709 = vshrl.u32 %v1708, 7
    %v1710 = vsub.s32 0, %v1709
    %v1711 = vrot.slane %v1706, %v1710
    %v1712 = vlaneseq
    %v1713 = vshrl.u32 %v1712, 7
    %v1714 = vsub.s32 1, %v1713
    %v1715 = vrot.slane %v1706, %v1714
    %v1716 = vlaneseq
    %v1717 = vshrl.u32 %v1716, 7
    %v1718 = vsub.s32 2, %v1717
    %v1719 = vrot.slane %v1706, %v1718
    %v1755 = vunpack.c.l.b16 %v1673
    %v1756 = vunpack.c.h.b16 %v1673
    %v1757 = vunpack.c.l.b16 %v1674
    %v1758 = vunpack.c.l.b16 %v1675
    %v1759 = vunpack.c.h.b16 %v1675
    %v1760 = vunpack.c.l.b16 %v1676
    %v1761 = vunpack.c.l.b16 %v1677
    %v1762 = vunpack.c.h.b16 %v1677
    %v1763 = vunpack.c.l.b16 %v1678
    %v1764 = vunpack.c.l.b16 %v1679
    %v1765 = vunpack.c.h.b16 %v1679
    %v1766 = vunpack.c.l.b16 %v1680
    %v1767 = vunpack.c.l.b16 %v1681
    %v1768 = vunpack.c.h.b16 %v1681
    %v1769 = vunpack.c.l.b16 %v1682
    %v1770 = vunpack.c.l.b16 %v1683
    %v1771 = vunpack.c.h.b16 %v1683
    %v1772 = vunpack.c.l.b16 %v1684
    %v1773 = vunpack.c.l.b16 %v1685
    %v1774 = vunpack.c.h.b16 %v1685
    %v1775 = vunpack.c.l.b16 %v1686
    %v1776 = vunpack.c.l.b16 %v1687
    %v1777 = vunpack.c.h.b16 %v1687
    %v1778 = vunpack.c.l.b16 %v1688
    %v1779 = vunpack.c.l.b16 %v1689
    %v1780 = vunpack.c.h.b16 %v1689
    %v1781 = vunpack.c.l.b16 %v1690
    %v1782 = vunpack.c.l.b16 %v1691
    %v1783 = vunpack.c.h.b16 %v1691
    %v1784 = vunpack.c.l.b16 %v1692
    %v1785 = vunpack.c.l.b16 %v1693
    %v1786 = vunpack.c.h.b16 %v1693
    %v1787 = vunpack.c.l.b16 %v1694
    %v1788 = vunpack.c.l.b16 %v1695
    %v1789 = vunpack.c.h.b16 %v1695
    %v1790 = vunpack.c.l.b16 %v1696
    %v1791 = vunpack.c.l.b16 %v1697
    %v1792 = vunpack.c.h.b16 %v1697
    %v1793 = vunpack.c.l.b16 %v1698
    %v1794 = vunpack.c.l.b16 %v1699
    %v1795 = vunpack.c.h.b16 %v1699
    %v1796 = vunpack.c.l.b16 %v1700
    %v1797 = vunpack.c.l.b16 %v1701
    %v1798 = vunpack.c.h.b16 %v1701
    %v1799 = vunpack.c.l.b16 %v1702
    %v1800 = vunpack.c.l.b16 %v1703
    %v1801 = vunpack.c.h.b16 %v1703
    %v1802 = vunpack.c.l.b16 %v1704
    %v1803 = vpack.c.b16 %v1758, %v1755
    %v1804 = vpack.c.b16 %v1759, %v1756
    %v1805 = vpack.c.b16 %v1760, %v1757
    %v1806 = vpack.c.b16 %v1764, %v1761
    %v1807 = vpack.c.b16 %v1765, %v1762
    %v1808 = vpack.c.b16 %v1766, %v1763
    %v1809 = vpack.c.b16 %v1770, %v1767
    %v1810 = vpack.c.b16 %v1771, %v1768
    %v1811 = vpack.c.b16 %v1772, %v1769
    %v1812 = vpack.c.b16 %v1776, %v1773
    %v1813 = vpack.c.b16 %v1777, %v1774
    %v1814 = vpack.c.b16 %v1778, %v1775
    %v1815 = vpack.c.b16 %v1782, %v1779
    %v1816 = vpack.c.b16 %v1783, %v1780
    %v1817 = vpack.c.b16 %v1784, %v1781
    %v1818 = vpack.c.b16 %v1788, %v1785
    %v1819 = vpack.c.b16 %v1789, %v1786
    %v1820 = vpack.c.b16 %v1790, %v1787
    %v1821 = vpack.c.b16 %v1794, %v1791
    %v1822 = vpack.c.b16 %v1795, %v1792
    %v1823 = vpack.c.b16 %v1796, %v1793
    %v1824 = vpack.c.b16 %v1800, %v1797
    %v1825 = vpack.c.b16 %v1801, %v1798
    %v1826 = vpack.c.b16 %v1802, %v1799
    %1851 = vmatprep.subr.bf16.mxu0 %v1804
    %1852 = vmatpush1.bf16.msra.mxu0 %v1803
    %1853 = vmatprep.subr.bf16.mxu0 %v1807
    %1854 = vmatpush1.bf16.msra.mxu0 %v1806
    %1855 = vmatprep.subr.bf16.mxu0 %v1810
    %1856 = vmatpush1.bf16.msra.mxu0 %v1809
    %1857 = vmatprep.subr.bf16.mxu0 %v1813
    %1858 = vmatpush1.bf16.msra.mxu0 %v1812
    %1859 = vmatprep.subr.bf16.mxu0 %v1816
    %1860 = vmatpush1.bf16.msra.mxu0 %v1815
    %1861 = vmatprep.subr.bf16.mxu0 %v1819
    %1862 = vmatpush1.bf16.msra.mxu0 %v1818
    %1863 = vmatprep.subr.bf16.mxu0 %v1822
    %1864 = vmatpush1.bf16.msra.mxu0 %v1821
    %1865 = vmatprep.subr.bf16.mxu0 %v1825
    %1866 = vmatpush1.bf16.msra.mxu0 %v1824
    %1867 = vmatprep.subr.bf16.mxu0 0
    %1868 = vmatpush1.bf16.msra.mxu0 0
    %1869 = vmatprep.subr.bf16.mxu0 0
    %1870 = vmatpush1.bf16.msra.mxu0 0
    %1871 = vmatprep.subr.bf16.mxu0 0
    %1872 = vmatpush1.bf16.msra.mxu0 0
    %1873 = vmatprep.subr.bf16.mxu0 0
    %1874 = vmatpush1.bf16.msra.mxu0 0
    %1875 = vmatprep.subr.bf16.mxu0 0
    %1876 = vmatpush1.bf16.msra.mxu0 0
    %1877 = vmatprep.subr.bf16.mxu0 0
    %1878 = vmatpush1.bf16.msra.mxu0 0
    %1879 = vmatprep.subr.bf16.mxu0 0
    %1880 = vmatpush1.bf16.msra.mxu0 0
    %1881 = vmatprep.subr.bf16.mxu0 0
    %1882 = vmatpush1.bf16.msra.mxu0 0
    %1883 = vmatprep.mubr.bf16.mxu0 0
    %1884 = vmatmul.mubr.bf16.gmra.mrb[0].mxu0 %v1669
    %v1885 = vpop.f32.mrb[0].mxu0
    %v1886 = vadd.f32 %v1711, %v1885
    %v1887 = vpop.f32.mrb[0].mxu0
    %v1888 = vadd.f32 %v1715, %v1887
    %v1889 = vpop.f32.mrb[0].mxu0
    %v1890 = vadd.f32 %v1711, %v1889
    %v1891 = vpop.f32.mrb[0].mxu0
    %v1892 = vadd.f32 %v1715, %v1891
    %1893 = vmatprep.mubr.bf16.mxu0 0
    %1894 = vmatmul.mubr.bf16.gmra.mrb[0].mxu0 %v1670
    %v1895 = vpop.f32.mrb[0].mxu0
    %v1896 = vadd.f32 %v1711, %v1895
    %v1897 = vpop.f32.mrb[0].mxu0
    %v1898 = vadd.f32 %v1715, %v1897
    %v1899 = vpop.f32.mrb[0].mxu0
    %v1900 = vadd.f32 %v1711, %v1899
    %v1901 = vpop.f32.mrb[0].mxu0
    %v1902 = vadd.f32 %v1715, %v1901
    %1903 = vmatprep.mubr.bf16.mxu0 0
    %1904 = vmatmul.mubr.bf16.gmra.mrb[0].mxu0 %v1671
    %v1905 = vpop.f32.mrb[0].mxu0
    %v1906 = vadd.f32 %v1711, %v1905
    %v1907 = vpop.f32.mrb[0].mxu0
    %v1908 = vadd.f32 %v1715, %v1907
    %v1909 = vpop.f32.mrb[0].mxu0
    %v1910 = vadd.f32 %v1711, %v1909
    %v1911 = vpop.f32.mrb[0].mxu0
    %v1912 = vadd.f32 %v1715, %v1911
    %1913 = vmatprep.mubr.bf16.mxu0 0
    %1914 = vmatmul.mubr.bf16.gmra.mrb[0].mxu0 %v1672
    %v1915 = vpop.f32.mrb[0].mxu0
    %v1916 = vadd.f32 %v1711, %v1915
    %v1917 = vpop.f32.mrb[0].mxu0
    %v1918 = vadd.f32 %v1715, %v1917
    %v1919 = vpop.f32.mrb[0].mxu0
    %v1920 = vadd.f32 %v1711, %v1919
    %v1921 = vpop.f32.mrb[0].mxu0
    %v1922 = vadd.f32 %v1715, %v1921
    %1923 = vdwg.mxu0
    %1924 = vmatprep.subr.bf16.mxu0 0
    %1925 = vmatpush1.bf16.msra.mxu0 %v1805
    %1926 = vmatprep.subr.bf16.mxu0 0
    %1927 = vmatpush1.bf16.msra.mxu0 %v1808
    %1928 = vmatprep.subr.bf16.mxu0 0
    %1929 = vmatpush1.bf16.msra.mxu0 %v1811
    %1930 = vmatprep.subr.bf16.mxu0 0
    %1931 = vmatpush1.bf16.msra.mxu0 %v1814
    %1932 = vmatprep.subr.bf16.mxu0 0
    %1933 = vmatpush1.bf16.msra.mxu0 %v1817
    %1934 = vmatprep.subr.bf16.mxu0 0
    %1935 = vmatpush1.bf16.msra.mxu0 %v1820
    %1936 = vmatprep.subr.bf16.mxu0 0
    %1937 = vmatpush1.bf16.msra.mxu0 %v1823
    %1938 = vmatprep.subr.bf16.mxu0 0
    %1939 = vmatpush1.bf16.msra.mxu0 %v1826
    %1940 = vmatprep.subr.bf16.mxu0 0
    %1941 = vmatpush1.bf16.msra.mxu0 0
    %1942 = vmatprep.subr.bf16.mxu0 0
    %1943 = vmatpush1.bf16.msra.mxu0 0
    %1944 = vmatprep.subr.bf16.mxu0 0
    %1945 = vmatpush1.bf16.msra.mxu0 0
    %1946 = vmatprep.subr.bf16.mxu0 0
    %1947 = vmatpush1.bf16.msra.mxu0 0
    %1948 = vmatprep.subr.bf16.mxu0 0
    %1949 = vmatpush1.bf16.msra.mxu0 0
    %1950 = vmatprep.subr.bf16.mxu0 0
    %1951 = vmatpush1.bf16.msra.mxu0 0
    %1952 = vmatprep.subr.bf16.mxu0 0
    %1953 = vmatpush1.bf16.msra.mxu0 0
    %1954 = vmatprep.subr.bf16.mxu0 0
    %1955 = vmatpush1.bf16.msra.mxu0 0
    %1956 = vmatprep.mubr.bf16.mxu0 0
    %1957 = vmatmul.mubr.bf16.gmra.mrb[0].mxu0 %v1669
    %v1958 = vpop.f32.mrb[0].mxu0
    %v1959 = vadd.f32 %v1719, %v1958
    %v1960 = vpop.f32.mrb[0].mxu0
    %v1961 = vpop.f32.mrb[0].mxu0
    %v1962 = vadd.f32 %v1719, %v1961
    %v1963 = vpop.f32.mrb[0].mxu0
    %1964 = vmatprep.mubr.bf16.mxu0 0
    %1965 = vmatmul.mubr.bf16.gmra.mrb[0].mxu0 %v1670
    %v1966 = vpop.f32.mrb[0].mxu0
    %v1967 = vadd.f32 %v1719, %v1966
    %v1968 = vpop.f32.mrb[0].mxu0
    %v1969 = vpop.f32.mrb[0].mxu0
    %v1970 = vadd.f32 %v1719, %v1969
    %v1971 = vpop.f32.mrb[0].mxu0
    %1972 = vmatprep.mubr.bf16.mxu0 0
    %1973 = vmatmul.mubr.bf16.gmra.mrb[0].mxu0 %v1671
    %v1974 = vpop.f32.mrb[0].mxu0
    %v1975 = vadd.f32 %v1719, %v1974
    %v1976 = vpop.f32.mrb[0].mxu0
    %v1977 = vpop.f32.mrb[0].mxu0
    %v1978 = vadd.f32 %v1719, %v1977
    %v1979 = vpop.f32.mrb[0].mxu0
    %1980 = vmatprep.mubr.bf16.mxu0 0
    %1981 = vmatmul.mubr.bf16.gmra.mrb[0].mxu0 %v1672
    %v1982 = vpop.f32.mrb[0].mxu0
    %v1983 = vadd.f32 %v1719, %v1982
    %v1984 = vpop.f32.mrb[0].mxu0
    %v1985 = vpop.f32.mrb[0].mxu0
    %v1986 = vadd.f32 %v1719, %v1985
    %v1987 = vpop.f32.mrb[0].mxu0
    %1988 = vdwg.mxu0
    %1989 = vst [vmem:[#allocation2] sm:$0xff] %v1886
    %1990 = vst [vmem:[#allocation2 + $0x8] sm:$0xff] %v1888
    %1991 = vst [vmem:[#allocation2 + $0x10] sm:$0xff] %v1959
    %1992 = vst [vmem:[#allocation2 + $0x18] sm:$0xff] %v1890
    %1993 = vst [vmem:[#allocation2 + $0x20] sm:$0xff] %v1892
    %1994 = vst [vmem:[#allocation2 + $0x28] sm:$0xff] %v1962
    %1995 = vst [vmem:[#allocation2 + $0x30] sm:$0xff] %v1896
    %1996 = vst [vmem:[#allocation2 + $0x38] sm:$0xff] %v1898
    %1997 = vst [vmem:[#allocation2 + $0x40] sm:$0xff] %v1967
    %1998 = vst [vmem:[#allocation2 + $0x48] sm:$0xff] %v1900
    %1999 = vst [vmem:[#allocation2 + $0x50] sm:$0xff] %v1902
    %2000 = vst [vmem:[#allocation2 + $0x58] sm:$0xff] %v1970
    %2001 = vst [vmem:[#allocation2 + $0x60] sm:$0xff] %v1906
    %2002 = vst [vmem:[#allocation2 + $0x68] sm:$0xff] %v1908
    %2003 = vst [vmem:[#allocation2 + $0x70] sm:$0xff] %v1975
    %2004 = vst [vmem:[#allocation2 + $0x78] sm:$0xff] %v1910
    %2005 = vst [vmem:[#allocation2 + $0x80] sm:$0xff] %v1912
    %2006 = vst [vmem:[#allocation2 + $0x88] sm:$0xff] %v1978
    %2007 = vst [vmem:[#allocation2 + $0x90] sm:$0xff] %v1916
    %2008 = vst [vmem:[#allocation2 + $0x98] sm:$0xff] %v1918
    %2009 = vst [vmem:[#allocation2 + $0xa0] sm:$0xff] %v1983
    %2010 = vst [vmem:[#allocation2 + $0xa8] sm:$0xff] %v1920
    %2011 = vst [vmem:[#allocation2 + $0xb0] sm:$0xff] %v1922
    %2012 = vst [vmem:[#allocation2 + $0xb8] sm:$0xff] %v1986
    %s2013 = scalar_lea.vmem [#allocation10], 192
    %v2014 = vld [vmem:[%s2013] sm:$0xff]
    %v2015 = vld [vmem:[%s2013 + $0x8] sm:$0xf]
    %v2016 = vld [vmem:[%s2013 + $0xc] sm:$0xff]
    %v2017 = vld [vmem:[%s2013 + $0x14] sm:$0xf]
    %v2018 = vld [vmem:[%s2013 + $0x18] sm:$0xff]
    %v2019 = vld [vmem:[%s2013 + $0x20] sm:$0xf]
    %v2020 = vld [vmem:[%s2013 + $0x24] sm:$0xff]
    %v2021 = vld [vmem:[%s2013 + $0x2c] sm:$0xf]
    %v2022 = vld [vmem:[%s2013 + $0x30] sm:$0xff]
    %v2023 = vld [vmem:[%s2013 + $0x38] sm:$0xf]
    %v2024 = vld [vmem:[%s2013 + $0x3c] sm:$0xff]
    %v2025 = vld [vmem:[%s2013 + $0x44] sm:$0xf]
    %v2026 = vld [vmem:[%s2013 + $0x48] sm:$0xff]
    %v2027 = vld [vmem:[%s2013 + $0x50] sm:$0xf]
    %v2028 = vld [vmem:[%s2013 + $0x54] sm:$0xff]
    %v2029 = vld [vmem:[%s2013 + $0x5c] sm:$0xf]
    %v2030 = vld [vmem:[%s2013 + $0x60] sm:$0xff]
    %v2031 = vld [vmem:[%s2013 + $0x68] sm:$0xf]
    %v2032 = vld [vmem:[%s2013 + $0x6c] sm:$0xff]
    %v2033 = vld [vmem:[%s2013 + $0x74] sm:$0xf]
    %v2034 = vld [vmem:[%s2013 + $0x78] sm:$0xff]
    %v2035 = vld [vmem:[%s2013 + $0x80] sm:$0xf]
    %v2036 = vld [vmem:[%s2013 + $0x84] sm:$0xff]
    %v2037 = vld [vmem:[%s2013 + $0x8c] sm:$0xf]
    %v2038 = vld [vmem:[%s2013 + $0x90] sm:$0xff]
    %v2039 = vld [vmem:[%s2013 + $0x98] sm:$0xf]
    %v2040 = vld [vmem:[%s2013 + $0x9c] sm:$0xff]
    %v2041 = vld [vmem:[%s2013 + $0xa4] sm:$0xf]
    %v2042 = vld [vmem:[%s2013 + $0xa8] sm:$0xff]
    %v2043 = vld [vmem:[%s2013 + $0xb0] sm:$0xf]
    %v2044 = vld [vmem:[%s2013 + $0xb4] sm:$0xff]
    %v2045 = vld [vmem:[%s2013 + $0xbc] sm:$0xf]
    %s2046 = scalar_lea.vmem %s8, 1
    %v2047 = vld [vmem:[%s2046] sm:$0x1]
    %v2049 = vlaneseq
    %v2050 = vshrl.u32 %v2049, 7
    %v2051 = vsub.s32 0, %v2050
    %v2052 = vrot.slane %v2047, %v2051
    %s2054 = scalar_lea.vmem %s2, 8
    %v2055 = vld [vmem:[%s2054] sm:$0xff]
    %v2056 = vld [vmem:[%s615] sm:$0xff]
    %v2057 = vld [vmem:[%s615 + $0x8] sm:$0xff]
    %v2058 = vld [vmem:[%s615 + $0x10] sm:$0xff]
    %v2059 = vpack.c.bf16 %v2055, %v2055
    %v2092 = vunpack.c.l.b16 %v2014
    %v2093 = vunpack.c.h.b16 %v2014
    %v2094 = vunpack.c.l.b16 %v2015
    %v2095 = vunpack.c.l.b16 %v2016
    %v2096 = vunpack.c.h.b16 %v2016
    %v2097 = vunpack.c.l.b16 %v2017
    %v2098 = vunpack.c.l.b16 %v2018
    %v2099 = vunpack.c.h.b16 %v2018
    %v2100 = vunpack.c.l.b16 %v2019
    %v2101 = vunpack.c.l.b16 %v2020
    %v2102 = vunpack.c.h.b16 %v2020
    %v2103 = vunpack.c.l.b16 %v2021
    %v2104 = vunpack.c.l.b16 %v2022
    %v2105 = vunpack.c.h.b16 %v2022
    %v2106 = vunpack.c.l.b16 %v2023
    %v2107 = vunpack.c.l.b16 %v2024
    %v2108 = vunpack.c.h.b16 %v2024
    %v2109 = vunpack.c.l.b16 %v2025
    %v2110 = vunpack.c.l.b16 %v2026
    %v2111 = vunpack.c.h.b16 %v2026
    %v2112 = vunpack.c.l.b16 %v2027
    %v2113 = vunpack.c.l.b16 %v2028
    %v2114 = vunpack.c.h.b16 %v2028
    %v2115 = vunpack.c.l.b16 %v2029
    %v2116 = vunpack.c.l.b16 %v2030
    %v2117 = vunpack.c.h.b16 %v2030
    %v2118 = vunpack.c.l.b16 %v2031
    %v2119 = vunpack.c.l.b16 %v2032
    %v2120 = vunpack.c.h.b16 %v2032
    %v2121 = vunpack.c.l.b16 %v2033
    %v2122 = vunpack.c.l.b16 %v2034
    %v2123 = vunpack.c.h.b16 %v2034
    %v2124 = vunpack.c.l.b16 %v2035
    %v2125 = vunpack.c.l.b16 %v2036
    %v2126 = vunpack.c.h.b16 %v2036
    %v2127 = vunpack.c.l.b16 %v2037
    %v2128 = vunpack.c.l.b16 %v2038
    %v2129 = vunpack.c.h.b16 %v2038
    %v2130 = vunpack.c.l.b16 %v2039
    %v2131 = vunpack.c.l.b16 %v2040
    %v2132 = vunpack.c.h.b16 %v2040
    %v2133 = vunpack.c.l.b16 %v2041
    %v2134 = vunpack.c.l.b16 %v2042
    %v2135 = vunpack.c.h.b16 %v2042
    %v2136 = vunpack.c.l.b16 %v2043
    %v2137 = vunpack.c.l.b16 %v2044
    %v2138 = vunpack.c.h.b16 %v2044
    %v2139 = vunpack.c.l.b16 %v2045
    %v2140 = vpack.c.b16 %v2095, %v2092
    %v2141 = vpack.c.b16 %v2096, %v2093
    %v2142 = vpack.c.b16 %v2097, %v2094
    %v2143 = vpack.c.b16 %v2101, %v2098
    %v2144 = vpack.c.b16 %v2102, %v2099
    %v2145 = vpack.c.b16 %v2103, %v2100
    %v2146 = vpack.c.b16 %v2107, %v2104
    %v2147 = vpack.c.b16 %v2108, %v2105
    %v2148 = vpack.c.b16 %v2109, %v2106
    %v2149 = vpack.c.b16 %v2113, %v2110
    %v2150 = vpack.c.b16 %v2114, %v2111
    %v2151 = vpack.c.b16 %v2115, %v2112
    %v2152 = vpack.c.b16 %v2119, %v2116
    %v2153 = vpack.c.b16 %v2120, %v2117
    %v2154 = vpack.c.b16 %v2121, %v2118
    %v2155 = vpack.c.b16 %v2125, %v2122
    %v2156 = vpack.c.b16 %v2126, %v2123
    %v2157 = vpack.c.b16 %v2127, %v2124
    %v2158 = vpack.c.b16 %v2131, %v2128
    %v2159 = vpack.c.b16 %v2132, %v2129
    %v2160 = vpack.c.b16 %v2133, %v2130
    %v2161 = vpack.c.b16 %v2137, %v2134
    %v2162 = vpack.c.b16 %v2138, %v2135
    %v2163 = vpack.c.b16 %v2139, %v2136
    %2188 = vmatprep.subr.bf16.mxu0 %v2141
    %2189 = vmatpush1.bf16.msra.mxu0 %v2140
    %2190 = vmatprep.subr.bf16.mxu0 %v2144
    %2191 = vmatpush1.bf16.msra.mxu0 %v2143
    %2192 = vmatprep.subr.bf16.mxu0 %v2147
    %2193 = vmatpush1.bf16.msra.mxu0 %v2146
    %2194 = vmatprep.subr.bf16.mxu0 %v2150
    %2195 = vmatpush1.bf16.msra.mxu0 %v2149
    %2196 = vmatprep.subr.bf16.mxu0 %v2153
    %2197 = vmatpush1.bf16.msra.mxu0 %v2152
    %2198 = vmatprep.subr.bf16.mxu0 %v2156
    %2199 = vmatpush1.bf16.msra.mxu0 %v2155
    %2200 = vmatprep.subr.bf16.mxu0 %v2159
    %2201 = vmatpush1.bf16.msra.mxu0 %v2158
    %2202 = vmatprep.subr.bf16.mxu0 %v2162
    %2203 = vmatpush1.bf16.msra.mxu0 %v2161
    %2204 = vmatprep.subr.bf16.mxu0 0
    %2205 = vmatpush1.bf16.msra.mxu0 0
    %2206 = vmatprep.subr.bf16.mxu0 0
    %2207 = vmatpush1.bf16.msra.mxu0 0
    %2208 = vmatprep.subr.bf16.mxu0 0
    %2209 = vmatpush1.bf16.msra.mxu0 0
    %2210 = vmatprep.subr.bf16.mxu0 0
    %2211 = vmatpush1.bf16.msra.mxu0 0
    %2212 = vmatprep.subr.bf16.mxu0 0
    %2213 = vmatpush1.bf16.msra.mxu0 0
    %2214 = vmatprep.subr.bf16.mxu0 0
    %2215 = vmatpush1.bf16.msra.mxu0 0
    %2216 = vmatprep.subr.bf16.mxu0 0
    %2217 = vmatpush1.bf16.msra.mxu0 0
    %2218 = vmatprep.subr.bf16.mxu0 0
    %2219 = vmatpush1.bf16.msra.mxu0 0
    %2220 = vmatprep.mubr.bf16.mxu0 0
    %2221 = vmatmul.mubr.bf16.gmra.mrb[0].mxu0 %v2059
    %v2222 = vpop.f32.mrb[0].mxu0
    %v2223 = vadd.f32 0.0, %v2222
    %v2224 = vpop.f32.mrb[0].mxu0
    %v2225 = vadd.f32 0.0, %v2224
    %v2226 = vpop.f32.mrb[0].mxu0
    %v2227 = vpop.f32.mrb[0].mxu0
    %2228 = vdwg.mxu0
    %2229 = vmatprep.subr.bf16.mxu0 0
    %2230 = vmatpush1.bf16.msra.mxu0 %v2142
    %2231 = vmatprep.subr.bf16.mxu0 0
    %2232 = vmatpush1.bf16.msra.mxu0 %v2145
    %2233 = vmatprep.subr.bf16.mxu0 0
    %2234 = vmatpush1.bf16.msra.mxu0 %v2148
    %2235 = vmatprep.subr.bf16.mxu0 0
    %2236 = vmatpush1.bf16.msra.mxu0 %v2151
    %2237 = vmatprep.subr.bf16.mxu0 0
    %2238 = vmatpush1.bf16.msra.mxu0 %v2154
    %2239 = vmatprep.subr.bf16.mxu0 0
    %2240 = vmatpush1.bf16.msra.mxu0 %v2157
    %2241 = vmatprep.subr.bf16.mxu0 0
    %2242 = vmatpush1.bf16.msra.mxu0 %v2160
    %2243 = vmatprep.subr.bf16.mxu0 0
    %2244 = vmatpush1.bf16.msra.mxu0 %v2163
    %2245 = vmatprep.subr.bf16.mxu0 0
    %2246 = vmatpush1.bf16.msra.mxu0 0
    %2247 = vmatprep.subr.bf16.mxu0 0
    %2248 = vmatpush1.bf16.msra.mxu0 0
    %2249 = vmatprep.subr.bf16.mxu0 0
    %2250 = vmatpush1.bf16.msra.mxu0 0
    %2251 = vmatprep.subr.bf16.mxu0 0
    %2252 = vmatpush1.bf16.msra.mxu0 0
    %2253 = vmatprep.subr.bf16.mxu0 0
    %2254 = vmatpush1.bf16.msra.mxu0 0
    %2255 = vmatprep.subr.bf16.mxu0 0
    %2256 = vmatpush1.bf16.msra.mxu0 0
    %2257 = vmatprep.subr.bf16.mxu0 0
    %2258 = vmatpush1.bf16.msra.mxu0 0
    %2259 = vmatprep.subr.bf16.mxu0 0
    %2260 = vmatpush1.bf16.msra.mxu0 0
    %2261 = vmatprep.mubr.bf16.mxu0 0
    %2262 = vmatmul.mubr.bf16.gmra.mrb[0].mxu0 %v2059
    %v2263 = vpop.f32.mrb[0].mxu0
    %v2264 = vadd.f32 0.0, %v2263
    %v2265 = vpop.f32.mrb[0].mxu0
    %v2266 = vpop.f32.mrb[0].mxu0
    %v2267 = vpop.f32.mrb[0].mxu0
    %2268 = vdwg.mxu0
    %v2269 = vadd.f32 %v2056, %v2223
    %v2270 = vxor.u32 %v2269, 2147483648
    %v2271 = vmul.f32 %v2270, 1.442695
    %v2272 = vpow.pop %v2271
    %v2273 = vadd.f32 %v2272, 1.0
    %v2274 = vrcp.pop %v2273
    %v2275 = vmul.f32 1.0, %v2274
    %v2276 = vadd.f32 %v2057, %v2225
    %v2277 = vxor.u32 %v2276, 2147483648
    %v2278 = vmul.f32 %v2277, 1.442695
    %v2279 = vpow.pop %v2278
    %v2280 = vadd.f32 %v2279, 1.0
    %v2281 = vrcp.pop %v2280
    %v2282 = vmul.f32 1.0, %v2281
    %v2283 = vadd.f32 %v2264, %v2052
    %v2284 = vmul.f32 %v2275, %v2283
    %v2285 = vadd.f32 %v2058, %v2284
    %v2286 = vtanh.pop %v2285
    %v2287 = vsub.f32 1.0, %v2282
    %v2288 = vmul.f32 %v2287, %v2286
    %v2289 = vmul.f32 %v2282, %v2055
    %v2290 = vadd.f32 %v2288, %v2289
    %2291 = vst [vmem:[#allocation3] sm:$0xff] %v2290
    %v2292 = vld [vmem:[%s857] sm:$0xff]
    %v2293 = vld [vmem:[%s857 + $0x8] sm:$0xff]
    %v2294 = vld [vmem:[%s857 + $0x10] sm:$0xff]
    %v2295 = vpack.c.bf16 %v2290, %v2290
    %2296 = vmatprep.subr.bf16.mxu0 %v2141
    %2297 = vmatpush1.bf16.msra.mxu0 %v2140
    %2298 = vmatprep.subr.bf16.mxu0 %v2144
    %2299 = vmatpush1.bf16.msra.mxu0 %v2143
    %2300 = vmatprep.subr.bf16.mxu0 %v2147
    %2301 = vmatpush1.bf16.msra.mxu0 %v2146
    %2302 = vmatprep.subr.bf16.mxu0 %v2150
    %2303 = vmatpush1.bf16.msra.mxu0 %v2149
    %2304 = vmatprep.subr.bf16.mxu0 %v2153
    %2305 = vmatpush1.bf16.msra.mxu0 %v2152
    %2306 = vmatprep.subr.bf16.mxu0 %v2156
    %2307 = vmatpush1.bf16.msra.mxu0 %v2155
    %2308 = vmatprep.subr.bf16.mxu0 %v2159
    %2309 = vmatpush1.bf16.msra.mxu0 %v2158
    %2310 = vmatprep.subr.bf16.mxu0 %v2162
    %2311 = vmatpush1.bf16.msra.mxu0 %v2161
    %2312 = vmatprep.subr.bf16.mxu0 0
    %2313 = vmatpush1.bf16.msra.mxu0 0
    %2314 = vmatprep.subr.bf16.mxu0 0
    %2315 = vmatpush1.bf16.msra.mxu0 0
    %2316 = vmatprep.subr.bf16.mxu0 0
    %2317 = vmatpush1.bf16.msra.mxu0 0
    %2318 = vmatprep.subr.bf16.mxu0 0
    %2319 = vmatpush1.bf16.msra.mxu0 0
    %2320 = vmatprep.subr.bf16.mxu0 0
    %2321 = vmatpush1.bf16.msra.mxu0 0
    %2322 = vmatprep.subr.bf16.mxu0 0
    %2323 = vmatpush1.bf16.msra.mxu0 0
    %2324 = vmatprep.subr.bf16.mxu0 0
    %2325 = vmatpush1.bf16.msra.mxu0 0
    %2326 = vmatprep.subr.bf16.mxu0 0
    %2327 = vmatpush1.bf16.msra.mxu0 0
    %2328 = vmatprep.mubr.bf16.mxu0 0
    %2329 = vmatmul.mubr.bf16.gmra.mrb[0].mxu0 %v2295
    %v2330 = vpop.f32.mrb[0].mxu0
    %v2331 = vadd.f32 0.0, %v2330
    %v2332 = vpop.f32.mrb[0].mxu0
    %v2333 = vadd.f32 0.0, %v2332
    %v2334 = vpop.f32.mrb[0].mxu0
    %v2335 = vpop.f32.mrb[0].mxu0
    %2336 = vdwg.mxu0
    %2337 = vmatprep.subr.bf16.mxu0 0
    %2338 = vmatpush1.bf16.msra.mxu0 %v2142
    %2339 = vmatprep.subr.bf16.mxu0 0
    %2340 = vmatpush1.bf16.msra.mxu0 %v2145
    %2341 = vmatprep.subr.bf16.mxu0 0
    %2342 = vmatpush1.bf16.msra.mxu0 %v2148
    %2343 = vmatprep.subr.bf16.mxu0 0
    %2344 = vmatpush1.bf16.msra.mxu0 %v2151
    %2345 = vmatprep.subr.bf16.mxu0 0
    %2346 = vmatpush1.bf16.msra.mxu0 %v2154
    %2347 = vmatprep.subr.bf16.mxu0 0
    %2348 = vmatpush1.bf16.msra.mxu0 %v2157
    %2349 = vmatprep.subr.bf16.mxu0 0
    %2350 = vmatpush1.bf16.msra.mxu0 %v2160
    %2351 = vmatprep.subr.bf16.mxu0 0
    %2352 = vmatpush1.bf16.msra.mxu0 %v2163
    %2353 = vmatprep.subr.bf16.mxu0 0
    %2354 = vmatpush1.bf16.msra.mxu0 0
    %2355 = vmatprep.subr.bf16.mxu0 0
    %2356 = vmatpush1.bf16.msra.mxu0 0
    %2357 = vmatprep.subr.bf16.mxu0 0
    %2358 = vmatpush1.bf16.msra.mxu0 0
    %2359 = vmatprep.subr.bf16.mxu0 0
    %2360 = vmatpush1.bf16.msra.mxu0 0
    %2361 = vmatprep.subr.bf16.mxu0 0
    %2362 = vmatpush1.bf16.msra.mxu0 0
    %2363 = vmatprep.subr.bf16.mxu0 0
    %2364 = vmatpush1.bf16.msra.mxu0 0
    %2365 = vmatprep.subr.bf16.mxu0 0
    %2366 = vmatpush1.bf16.msra.mxu0 0
    %2367 = vmatprep.subr.bf16.mxu0 0
    %2368 = vmatpush1.bf16.msra.mxu0 0
    %2369 = vmatprep.mubr.bf16.mxu0 0
    %2370 = vmatmul.mubr.bf16.gmra.mrb[0].mxu0 %v2295
    %v2371 = vpop.f32.mrb[0].mxu0
    %v2372 = vadd.f32 0.0, %v2371
    %v2373 = vpop.f32.mrb[0].mxu0
    %v2374 = vpop.f32.mrb[0].mxu0
    %v2375 = vpop.f32.mrb[0].mxu0
    %2376 = vdwg.mxu0
    %v2377 = vadd.f32 %v2292, %v2331
    %v2378 = vxor.u32 %v2377, 2147483648
    %v2379 = vmul.f32 %v2378, 1.442695
    %v2380 = vpow.pop %v2379
    %v2381 = vadd.f32 %v2380, 1.0
    %v2382 = vrcp.pop %v2381
    %v2383 = vmul.f32 1.0, %v2382
    %v2384 = vadd.f32 %v2293, %v2333
    %v2385 = vxor.u32 %v2384, 2147483648
    %v2386 = vmul.f32 %v2385, 1.442695
    %v2387 = vpow.pop %v2386
    %v2388 = vadd.f32 %v2387, 1.0
    %v2389 = vrcp.pop %v2388
    %v2390 = vmul.f32 1.0, %v2389
    %v2391 = vadd.f32 %v2372, %v2052
    %v2392 = vmul.f32 %v2383, %v2391
    %v2393 = vadd.f32 %v2294, %v2392
    %v2394 = vtanh.pop %v2393
    %v2395 = vsub.f32 1.0, %v2390
    %v2396 = vmul.f32 %v2395, %v2394
    %v2397 = vmul.f32 %v2390, %v2290
    %v2398 = vadd.f32 %v2396, %v2397
    %2399 = vst [vmem:[%s968] sm:$0xff] %v2398
    %v2400 = vld [vmem:[%s972] sm:$0xff]
    %v2401 = vld [vmem:[%s972 + $0x8] sm:$0xff]
    %v2402 = vld [vmem:[%s972 + $0x10] sm:$0xff]
    %v2403 = vpack.c.bf16 %v2398, %v2398
    %2404 = vmatprep.subr.bf16.mxu0 %v2141
    %2405 = vmatpush1.bf16.msra.mxu0 %v2140
    %2406 = vmatprep.subr.bf16.mxu0 %v2144
    %2407 = vmatpush1.bf16.msra.mxu0 %v2143
    %2408 = vmatprep.subr.bf16.mxu0 %v2147
    %2409 = vmatpush1.bf16.msra.mxu0 %v2146
    %2410 = vmatprep.subr.bf16.mxu0 %v2150
    %2411 = vmatpush1.bf16.msra.mxu0 %v2149
    %2412 = vmatprep.subr.bf16.mxu0 %v2153
    %2413 = vmatpush1.bf16.msra.mxu0 %v2152
    %2414 = vmatprep.subr.bf16.mxu0 %v2156
    %2415 = vmatpush1.bf16.msra.mxu0 %v2155
    %2416 = vmatprep.subr.bf16.mxu0 %v2159
    %2417 = vmatpush1.bf16.msra.mxu0 %v2158
    %2418 = vmatprep.subr.bf16.mxu0 %v2162
    %2419 = vmatpush1.bf16.msra.mxu0 %v2161
    %2420 = vmatprep.subr.bf16.mxu0 0
    %2421 = vmatpush1.bf16.msra.mxu0 0
    %2422 = vmatprep.subr.bf16.mxu0 0
    %2423 = vmatpush1.bf16.msra.mxu0 0
    %2424 = vmatprep.subr.bf16.mxu0 0
    %2425 = vmatpush1.bf16.msra.mxu0 0
    %2426 = vmatprep.subr.bf16.mxu0 0
    %2427 = vmatpush1.bf16.msra.mxu0 0
    %2428 = vmatprep.subr.bf16.mxu0 0
    %2429 = vmatpush1.bf16.msra.mxu0 0
    %2430 = vmatprep.subr.bf16.mxu0 0
    %2431 = vmatpush1.bf16.msra.mxu0 0
    %2432 = vmatprep.subr.bf16.mxu0 0
    %2433 = vmatpush1.bf16.msra.mxu0 0
    %2434 = vmatprep.subr.bf16.mxu0 0
    %2435 = vmatpush1.bf16.msra.mxu0 0
    %2436 = vmatprep.mubr.bf16.mxu0 0
    %2437 = vmatmul.mubr.bf16.gmra.mrb[0].mxu0 %v2403
    %v2438 = vpop.f32.mrb[0].mxu0
    %v2439 = vadd.f32 0.0, %v2438
    %v2440 = vpop.f32.mrb[0].mxu0
    %v2441 = vadd.f32 0.0, %v2440
    %v2442 = vpop.f32.mrb[0].mxu0
    %v2443 = vpop.f32.mrb[0].mxu0
    %2444 = vdwg.mxu0
    %2445 = vmatprep.subr.bf16.mxu0 0
    %2446 = vmatpush1.bf16.msra.mxu0 %v2142
    %2447 = vmatprep.subr.bf16.mxu0 0
    %2448 = vmatpush1.bf16.msra.mxu0 %v2145
    %2449 = vmatprep.subr.bf16.mxu0 0
    %2450 = vmatpush1.bf16.msra.mxu0 %v2148
    %2451 = vmatprep.subr.bf16.mxu0 0
    %2452 = vmatpush1.bf16.msra.mxu0 %v2151
    %2453 = vmatprep.subr.bf16.mxu0 0
    %2454 = vmatpush1.bf16.msra.mxu0 %v2154
    %2455 = vmatprep.subr.bf16.mxu0 0
    %2456 = vmatpush1.bf16.msra.mxu0 %v2157
    %2457 = vmatprep.subr.bf16.mxu0 0
    %2458 = vmatpush1.bf16.msra.mxu0 %v2160
    %2459 = vmatprep.subr.bf16.mxu0 0
    %2460 = vmatpush1.bf16.msra.mxu0 %v2163
    %2461 = vmatprep.subr.bf16.mxu0 0
    %2462 = vmatpush1.bf16.msra.mxu0 0
    %2463 = vmatprep.subr.bf16.mxu0 0
    %2464 = vmatpush1.bf16.msra.mxu0 0
    %2465 = vmatprep.subr.bf16.mxu0 0
    %2466 = vmatpush1.bf16.msra.mxu0 0
    %2467 = vmatprep.subr.bf16.mxu0 0
    %2468 = vmatpush1.bf16.msra.mxu0 0
    %2469 = vmatprep.subr.bf16.mxu0 0
    %2470 = vmatpush1.bf16.msra.mxu0 0
    %2471 = vmatprep.subr.bf16.mxu0 0
    %2472 = vmatpush1.bf16.msra.mxu0 0
    %2473 = vmatprep.subr.bf16.mxu0 0
    %2474 = vmatpush1.bf16.msra.mxu0 0
    %2475 = vmatprep.subr.bf16.mxu0 0
    %2476 = vmatpush1.bf16.msra.mxu0 0
    %2477 = vmatprep.mubr.bf16.mxu0 0
    %2478 = vmatmul.mubr.bf16.gmra.mrb[0].mxu0 %v2403
    %v2479 = vpop.f32.mrb[0].mxu0
    %v2480 = vadd.f32 0.0, %v2479
    %v2481 = vpop.f32.mrb[0].mxu0
    %v2482 = vpop.f32.mrb[0].mxu0
    %v2483 = vpop.f32.mrb[0].mxu0
    %2484 = vdwg.mxu0
    %v2485 = vadd.f32 %v2400, %v2439
    %v2486 = vxor.u32 %v2485, 2147483648
    %v2487 = vmul.f32 %v2486, 1.442695
    %v2488 = vpow.pop %v2487
    %v2489 = vadd.f32 %v2488, 1.0
    %v2490 = vrcp.pop %v2489
    %v2491 = vmul.f32 1.0, %v2490
    %v2492 = vadd.f32 %v2401, %v2441
    %v2493 = vxor.u32 %v2492, 2147483648
    %v2494 = vmul.f32 %v2493, 1.442695
    %v2495 = vpow.pop %v2494
    %v2496 = vadd.f32 %v2495, 1.0
    %v2497 = vrcp.pop %v2496
    %v2498 = vmul.f32 1.0, %v2497
    %v2499 = vadd.f32 %v2480, %v2052
    %v2500 = vmul.f32 %v2491, %v2499
    %v2501 = vadd.f32 %v2402, %v2500
    %v2502 = vtanh.pop %v2501
    %v2503 = vsub.f32 1.0, %v2498
    %v2504 = vmul.f32 %v2503, %v2502
    %v2505 = vmul.f32 %v2498, %v2398
    %v2506 = vadd.f32 %v2504, %v2505
    %2507 = vst [vmem:[%s1083] sm:$0xff] %v2506
    %v2508 = vld [vmem:[%s1087] sm:$0xff]
    %v2509 = vld [vmem:[%s1087 + $0x8] sm:$0xff]
    %v2510 = vld [vmem:[%s1087 + $0x10] sm:$0xff]
    %v2511 = vpack.c.bf16 %v2506, %v2506
    %2512 = vmatprep.subr.bf16.mxu0 %v2141
    %2513 = vmatpush1.bf16.msra.mxu0 %v2140
    %2514 = vmatprep.subr.bf16.mxu0 %v2144
    %2515 = vmatpush1.bf16.msra.mxu0 %v2143
    %2516 = vmatprep.subr.bf16.mxu0 %v2147
    %2517 = vmatpush1.bf16.msra.mxu0 %v2146
    %2518 = vmatprep.subr.bf16.mxu0 %v2150
    %2519 = vmatpush1.bf16.msra.mxu0 %v2149
    %2520 = vmatprep.subr.bf16.mxu0 %v2153
    %2521 = vmatpush1.bf16.msra.mxu0 %v2152
    %2522 = vmatprep.subr.bf16.mxu0 %v2156
    %2523 = vmatpush1.bf16.msra.mxu0 %v2155
    %2524 = vmatprep.subr.bf16.mxu0 %v2159
    %2525 = vmatpush1.bf16.msra.mxu0 %v2158
    %2526 = vmatprep.subr.bf16.mxu0 %v2162
    %2527 = vmatpush1.bf16.msra.mxu0 %v2161
    %2528 = vmatprep.subr.bf16.mxu0 0
    %2529 = vmatpush1.bf16.msra.mxu0 0
    %2530 = vmatprep.subr.bf16.mxu0 0
    %2531 = vmatpush1.bf16.msra.mxu0 0
    %2532 = vmatprep.subr.bf16.mxu0 0
    %2533 = vmatpush1.bf16.msra.mxu0 0
    %2534 = vmatprep.subr.bf16.mxu0 0
    %2535 = vmatpush1.bf16.msra.mxu0 0
    %2536 = vmatprep.subr.bf16.mxu0 0
    %2537 = vmatpush1.bf16.msra.mxu0 0
    %2538 = vmatprep.subr.bf16.mxu0 0
    %2539 = vmatpush1.bf16.msra.mxu0 0
    %2540 = vmatprep.subr.bf16.mxu0 0
    %2541 = vmatpush1.bf16.msra.mxu0 0
    %2542 = vmatprep.subr.bf16.mxu0 0
    %2543 = vmatpush1.bf16.msra.mxu0 0
    %2544 = vmatprep.mubr.bf16.mxu0 0
    %2545 = vmatmul.mubr.bf16.gmra.mrb[0].mxu0 %v2511
    %v2546 = vpop.f32.mrb[0].mxu0
    %v2547 = vadd.f32 0.0, %v2546
    %v2548 = vpop.f32.mrb[0].mxu0
    %v2549 = vadd.f32 0.0, %v2548
    %v2550 = vpop.f32.mrb[0].mxu0
    %v2551 = vpop.f32.mrb[0].mxu0
    %2552 = vdwg.mxu0
    %2553 = vmatprep.subr.bf16.mxu0 0
    %2554 = vmatpush1.bf16.msra.mxu0 %v2142
    %2555 = vmatprep.subr.bf16.mxu0 0
    %2556 = vmatpush1.bf16.msra.mxu0 %v2145
    %2557 = vmatprep.subr.bf16.mxu0 0
    %2558 = vmatpush1.bf16.msra.mxu0 %v2148
    %2559 = vmatprep.subr.bf16.mxu0 0
    %2560 = vmatpush1.bf16.msra.mxu0 %v2151
    %2561 = vmatprep.subr.bf16.mxu0 0
    %2562 = vmatpush1.bf16.msra.mxu0 %v2154
    %2563 = vmatprep.subr.bf16.mxu0 0
    %2564 = vmatpush1.bf16.msra.mxu0 %v2157
    %2565 = vmatprep.subr.bf16.mxu0 0
    %2566 = vmatpush1.bf16.msra.mxu0 %v2160
    %2567 = vmatprep.subr.bf16.mxu0 0
    %2568 = vmatpush1.bf16.msra.mxu0 %v2163
    %2569 = vmatprep.subr.bf16.mxu0 0
    %2570 = vmatpush1.bf16.msra.mxu0 0
    %2571 = vmatprep.subr.bf16.mxu0 0
    %2572 = vmatpush1.bf16.msra.mxu0 0
    %2573 = vmatprep.subr.bf16.mxu0 0
    %2574 = vmatpush1.bf16.msra.mxu0 0
    %2575 = vmatprep.subr.bf16.mxu0 0
    %2576 = vmatpush1.bf16.msra.mxu0 0
    %2577 = vmatprep.subr.bf16.mxu0 0
    %2578 = vmatpush1.bf16.msra.mxu0 0
    %2579 = vmatprep.subr.bf16.mxu0 0
    %2580 = vmatpush1.bf16.msra.mxu0 0
    %2581 = vmatprep.subr.bf16.mxu0 0
    %2582 = vmatpush1.bf16.msra.mxu0 0
    %2583 = vmatprep.subr.bf16.mxu0 0
    %2584 = vmatpush1.bf16.msra.mxu0 0
    %2585 = vmatprep.mubr.bf16.mxu0 0
    %2586 = vmatmul.mubr.bf16.gmra.mrb[0].mxu0 %v2511
    %v2587 = vpop.f32.mrb[0].mxu0
    %v2588 = vadd.f32 0.0, %v2587
    %v2589 = vpop.f32.mrb[0].mxu0
    %v2590 = vpop.f32.mrb[0].mxu0
    %v2591 = vpop.f32.mrb[0].mxu0
    %2592 = vdwg.mxu0
    %v2593 = vadd.f32 %v2508, %v2547
    %v2594 = vxor.u32 %v2593, 2147483648
    %v2595 = vmul.f32 %v2594, 1.442695
    %v2596 = vpow.pop %v2595
    %v2597 = vadd.f32 %v2596, 1.0
    %v2598 = vrcp.pop %v2597
    %v2599 = vmul.f32 1.0, %v2598
    %v2600 = vadd.f32 %v2509, %v2549
    %v2601 = vxor.u32 %v2600, 2147483648
    %v2602 = vmul.f32 %v2601, 1.442695
    %v2603 = vpow.pop %v2602
    %v2604 = vadd.f32 %v2603, 1.0
    %v2605 = vrcp.pop %v2604
    %v2606 = vmul.f32 1.0, %v2605
    %v2607 = vadd.f32 %v2588, %v2052
    %v2608 = vmul.f32 %v2599, %v2607
    %v2609 = vadd.f32 %v2510, %v2608
    %v2610 = vtanh.pop %v2609
    %v2611 = vsub.f32 1.0, %v2606
    %v2612 = vmul.f32 %v2611, %v2610
    %v2613 = vmul.f32 %v2606, %v2506
    %v2614 = vadd.f32 %v2612, %v2613
    %2615 = vst [vmem:[%s1198] sm:$0xff] %v2614
    %v2616 = vld [vmem:[%s1202] sm:$0xff]
    %v2617 = vld [vmem:[%s1202 + $0x8] sm:$0xff]
    %v2618 = vld [vmem:[%s1202 + $0x10] sm:$0xff]
    %v2619 = vpack.c.bf16 %v2614, %v2614
    %2620 = vmatprep.subr.bf16.mxu0 %v2141
    %2621 = vmatpush1.bf16.msra.mxu0 %v2140
    %2622 = vmatprep.subr.bf16.mxu0 %v2144
    %2623 = vmatpush1.bf16.msra.mxu0 %v2143
    %2624 = vmatprep.subr.bf16.mxu0 %v2147
    %2625 = vmatpush1.bf16.msra.mxu0 %v2146
    %2626 = vmatprep.subr.bf16.mxu0 %v2150
    %2627 = vmatpush1.bf16.msra.mxu0 %v2149
    %2628 = vmatprep.subr.bf16.mxu0 %v2153
    %2629 = vmatpush1.bf16.msra.mxu0 %v2152
    %2630 = vmatprep.subr.bf16.mxu0 %v2156
    %2631 = vmatpush1.bf16.msra.mxu0 %v2155
    %2632 = vmatprep.subr.bf16.mxu0 %v2159
    %2633 = vmatpush1.bf16.msra.mxu0 %v2158
    %2634 = vmatprep.subr.bf16.mxu0 %v2162
    %2635 = vmatpush1.bf16.msra.mxu0 %v2161
    %2636 = vmatprep.subr.bf16.mxu0 0
    %2637 = vmatpush1.bf16.msra.mxu0 0
    %2638 = vmatprep.subr.bf16.mxu0 0
    %2639 = vmatpush1.bf16.msra.mxu0 0
    %2640 = vmatprep.subr.bf16.mxu0 0
    %2641 = vmatpush1.bf16.msra.mxu0 0
    %2642 = vmatprep.subr.bf16.mxu0 0
    %2643 = vmatpush1.bf16.msra.mxu0 0
    %2644 = vmatprep.subr.bf16.mxu0 0
    %2645 = vmatpush1.bf16.msra.mxu0 0
    %2646 = vmatprep.subr.bf16.mxu0 0
    %2647 = vmatpush1.bf16.msra.mxu0 0
    %2648 = vmatprep.subr.bf16.mxu0 0
    %2649 = vmatpush1.bf16.msra.mxu0 0
    %2650 = vmatprep.subr.bf16.mxu0 0
    %2651 = vmatpush1.bf16.msra.mxu0 0
    %2652 = vmatprep.mubr.bf16.mxu0 0
    %2653 = vmatmul.mubr.bf16.gmra.mrb[0].mxu0 %v2619
    %v2654 = vpop.f32.mrb[0].mxu0
    %v2655 = vadd.f32 0.0, %v2654
    %v2656 = vpop.f32.mrb[0].mxu0
    %v2657 = vadd.f32 0.0, %v2656
    %v2658 = vpop.f32.mrb[0].mxu0
    %v2659 = vpop.f32.mrb[0].mxu0
    %2660 = vdwg.mxu0
    %2661 = vmatprep.subr.bf16.mxu0 0
    %2662 = vmatpush1.bf16.msra.mxu0 %v2142
    %2663 = vmatprep.subr.bf16.mxu0 0
    %2664 = vmatpush1.bf16.msra.mxu0 %v2145
    %2665 = vmatprep.subr.bf16.mxu0 0
    %2666 = vmatpush1.bf16.msra.mxu0 %v2148
    %2667 = vmatprep.subr.bf16.mxu0 0
    %2668 = vmatpush1.bf16.msra.mxu0 %v2151
    %2669 = vmatprep.subr.bf16.mxu0 0
    %2670 = vmatpush1.bf16.msra.mxu0 %v2154
    %2671 = vmatprep.subr.bf16.mxu0 0
    %2672 = vmatpush1.bf16.msra.mxu0 %v2157
    %2673 = vmatprep.subr.bf16.mxu0 0
    %2674 = vmatpush1.bf16.msra.mxu0 %v2160
    %2675 = vmatprep.subr.bf16.mxu0 0
    %2676 = vmatpush1.bf16.msra.mxu0 %v2163
    %2677 = vmatprep.subr.bf16.mxu0 0
    %2678 = vmatpush1.bf16.msra.mxu0 0
    %2679 = vmatprep.subr.bf16.mxu0 0
    %2680 = vmatpush1.bf16.msra.mxu0 0
    %2681 = vmatprep.subr.bf16.mxu0 0
    %2682 = vmatpush1.bf16.msra.mxu0 0
    %2683 = vmatprep.subr.bf16.mxu0 0
    %2684 = vmatpush1.bf16.msra.mxu0 0
    %2685 = vmatprep.subr.bf16.mxu0 0
    %2686 = vmatpush1.bf16.msra.mxu0 0
    %2687 = vmatprep.subr.bf16.mxu0 0
    %2688 = vmatpush1.bf16.msra.mxu0 0
    %2689 = vmatprep.subr.bf16.mxu0 0
    %2690 = vmatpush1.bf16.msra.mxu0 0
    %2691 = vmatprep.subr.bf16.mxu0 0
    %2692 = vmatpush1.bf16.msra.mxu0 0
    %2693 = vmatprep.mubr.bf16.mxu0 0
    %2694 = vmatmul.mubr.bf16.gmra.mrb[0].mxu0 %v2619
    %v2695 = vpop.f32.mrb[0].mxu0
    %v2696 = vadd.f32 0.0, %v2695
    %v2697 = vpop.f32.mrb[0].mxu0
    %v2698 = vpop.f32.mrb[0].mxu0
    %v2699 = vpop.f32.mrb[0].mxu0
    %2700 = vdwg.mxu0
    %v2701 = vadd.f32 %v2616, %v2655
    %v2702 = vxor.u32 %v2701, 2147483648
    %v2703 = vmul.f32 %v2702, 1.442695
    %v2704 = vpow.pop %v2703
    %v2705 = vadd.f32 %v2704, 1.0
    %v2706 = vrcp.pop %v2705
    %v2707 = vmul.f32 1.0, %v2706
    %v2708 = vadd.f32 %v2617, %v2657
    %v2709 = vxor.u32 %v2708, 2147483648
    %v2710 = vmul.f32 %v2709, 1.442695
    %v2711 = vpow.pop %v2710
    %v2712 = vadd.f32 %v2711, 1.0
    %v2713 = vrcp.pop %v2712
    %v2714 = vmul.f32 1.0, %v2713
    %v2715 = vadd.f32 %v2696, %v2052
    %v2716 = vmul.f32 %v2707, %v2715
    %v2717 = vadd.f32 %v2618, %v2716
    %v2718 = vtanh.pop %v2717
    %v2719 = vsub.f32 1.0, %v2714
    %v2720 = vmul.f32 %v2719, %v2718
    %v2721 = vmul.f32 %v2714, %v2614
    %v2722 = vadd.f32 %v2720, %v2721
    %2723 = vst [vmem:[%s1313] sm:$0xff] %v2722
    %v2724 = vld [vmem:[%s1317] sm:$0xff]
    %v2725 = vld [vmem:[%s1317 + $0x8] sm:$0xff]
    %v2726 = vld [vmem:[%s1317 + $0x10] sm:$0xff]
    %v2727 = vpack.c.bf16 %v2722, %v2722
    %2728 = vmatprep.subr.bf16.mxu0 %v2141
    %2729 = vmatpush1.bf16.msra.mxu0 %v2140
    %2730 = vmatprep.subr.bf16.mxu0 %v2144
    %2731 = vmatpush1.bf16.msra.mxu0 %v2143
    %2732 = vmatprep.subr.bf16.mxu0 %v2147
    %2733 = vmatpush1.bf16.msra.mxu0 %v2146
    %2734 = vmatprep.subr.bf16.mxu0 %v2150
    %2735 = vmatpush1.bf16.msra.mxu0 %v2149
    %2736 = vmatprep.subr.bf16.mxu0 %v2153
    %2737 = vmatpush1.bf16.msra.mxu0 %v2152
    %2738 = vmatprep.subr.bf16.mxu0 %v2156
    %2739 = vmatpush1.bf16.msra.mxu0 %v2155
    %2740 = vmatprep.subr.bf16.mxu0 %v2159
    %2741 = vmatpush1.bf16.msra.mxu0 %v2158
    %2742 = vmatprep.subr.bf16.mxu0 %v2162
    %2743 = vmatpush1.bf16.msra.mxu0 %v2161
    %2744 = vmatprep.subr.bf16.mxu0 0
    %2745 = vmatpush1.bf16.msra.mxu0 0
    %2746 = vmatprep.subr.bf16.mxu0 0
    %2747 = vmatpush1.bf16.msra.mxu0 0
    %2748 = vmatprep.subr.bf16.mxu0 0
    %2749 = vmatpush1.bf16.msra.mxu0 0
    %2750 = vmatprep.subr.bf16.mxu0 0
    %2751 = vmatpush1.bf16.msra.mxu0 0
    %2752 = vmatprep.subr.bf16.mxu0 0
    %2753 = vmatpush1.bf16.msra.mxu0 0
    %2754 = vmatprep.subr.bf16.mxu0 0
    %2755 = vmatpush1.bf16.msra.mxu0 0
    %2756 = vmatprep.subr.bf16.mxu0 0
    %2757 = vmatpush1.bf16.msra.mxu0 0
    %2758 = vmatprep.subr.bf16.mxu0 0
    %2759 = vmatpush1.bf16.msra.mxu0 0
    %2760 = vmatprep.mubr.bf16.mxu0 0
    %2761 = vmatmul.mubr.bf16.gmra.mrb[0].mxu0 %v2727
    %v2762 = vpop.f32.mrb[0].mxu0
    %v2763 = vadd.f32 0.0, %v2762
    %v2764 = vpop.f32.mrb[0].mxu0
    %v2765 = vadd.f32 0.0, %v2764
    %v2766 = vpop.f32.mrb[0].mxu0
    %v2767 = vpop.f32.mrb[0].mxu0
    %2768 = vdwg.mxu0
    %2769 = vmatprep.subr.bf16.mxu0 0
    %2770 = vmatpush1.bf16.msra.mxu0 %v2142
    %2771 = vmatprep.subr.bf16.mxu0 0
    %2772 = vmatpush1.bf16.msra.mxu0 %v2145
    %2773 = vmatprep.subr.bf16.mxu0 0
    %2774 = vmatpush1.bf16.msra.mxu0 %v2148
    %2775 = vmatprep.subr.bf16.mxu0 0
    %2776 = vmatpush1.bf16.msra.mxu0 %v2151
    %2777 = vmatprep.subr.bf16.mxu0 0
    %2778 = vmatpush1.bf16.msra.mxu0 %v2154
    %2779 = vmatprep.subr.bf16.mxu0 0
    %2780 = vmatpush1.bf16.msra.mxu0 %v2157
    %2781 = vmatprep.subr.bf16.mxu0 0
    %2782 = vmatpush1.bf16.msra.mxu0 %v2160
    %2783 = vmatprep.subr.bf16.mxu0 0
    %2784 = vmatpush1.bf16.msra.mxu0 %v2163
    %2785 = vmatprep.subr.bf16.mxu0 0
    %2786 = vmatpush1.bf16.msra.mxu0 0
    %2787 = vmatprep.subr.bf16.mxu0 0
    %2788 = vmatpush1.bf16.msra.mxu0 0
    %2789 = vmatprep.subr.bf16.mxu0 0
    %2790 = vmatpush1.bf16.msra.mxu0 0
    %2791 = vmatprep.subr.bf16.mxu0 0
    %2792 = vmatpush1.bf16.msra.mxu0 0
    %2793 = vmatprep.subr.bf16.mxu0 0
    %2794 = vmatpush1.bf16.msra.mxu0 0
    %2795 = vmatprep.subr.bf16.mxu0 0
    %2796 = vmatpush1.bf16.msra.mxu0 0
    %2797 = vmatprep.subr.bf16.mxu0 0
    %2798 = vmatpush1.bf16.msra.mxu0 0
    %2799 = vmatprep.subr.bf16.mxu0 0
    %2800 = vmatpush1.bf16.msra.mxu0 0
    %2801 = vmatprep.mubr.bf16.mxu0 0
    %2802 = vmatmul.mubr.bf16.gmra.mrb[0].mxu0 %v2727
    %v2803 = vpop.f32.mrb[0].mxu0
    %v2804 = vadd.f32 0.0, %v2803
    %v2805 = vpop.f32.mrb[0].mxu0
    %v2806 = vpop.f32.mrb[0].mxu0
    %v2807 = vpop.f32.mrb[0].mxu0
    %2808 = vdwg.mxu0
    %v2809 = vadd.f32 %v2724, %v2763
    %v2810 = vxor.u32 %v2809, 2147483648
    %v2811 = vmul.f32 %v2810, 1.442695
    %v2812 = vpow.pop %v2811
    %v2813 = vadd.f32 %v2812, 1.0
    %v2814 = vrcp.pop %v2813
    %v2815 = vmul.f32 1.0, %v2814
    %v2816 = vadd.f32 %v2725, %v2765
    %v2817 = vxor.u32 %v2816, 2147483648
    %v2818 = vmul.f32 %v2817, 1.442695
    %v2819 = vpow.pop %v2818
    %v2820 = vadd.f32 %v2819, 1.0
    %v2821 = vrcp.pop %v2820
    %v2822 = vmul.f32 1.0, %v2821
    %v2823 = vadd.f32 %v2804, %v2052
    %v2824 = vmul.f32 %v2815, %v2823
    %v2825 = vadd.f32 %v2726, %v2824
    %v2826 = vtanh.pop %v2825
    %v2827 = vsub.f32 1.0, %v2822
    %v2828 = vmul.f32 %v2827, %v2826
    %v2829 = vmul.f32 %v2822, %v2722
    %v2830 = vadd.f32 %v2828, %v2829
    %2831 = vst [vmem:[%s1428] sm:$0xff] %v2830
    %v2832 = vld [vmem:[%s1432] sm:$0xff]
    %v2833 = vld [vmem:[%s1432 + $0x8] sm:$0xff]
    %v2834 = vld [vmem:[%s1432 + $0x10] sm:$0xff]
    %v2835 = vpack.c.bf16 %v2830, %v2830
    %2836 = vmatprep.subr.bf16.mxu0 %v2141
    %2837 = vmatpush1.bf16.msra.mxu0 %v2140
    %2838 = vmatprep.subr.bf16.mxu0 %v2144
    %2839 = vmatpush1.bf16.msra.mxu0 %v2143
    %2840 = vmatprep.subr.bf16.mxu0 %v2147
    %2841 = vmatpush1.bf16.msra.mxu0 %v2146
    %2842 = vmatprep.subr.bf16.mxu0 %v2150
    %2843 = vmatpush1.bf16.msra.mxu0 %v2149
    %2844 = vmatprep.subr.bf16.mxu0 %v2153
    %2845 = vmatpush1.bf16.msra.mxu0 %v2152
    %2846 = vmatprep.subr.bf16.mxu0 %v2156
    %2847 = vmatpush1.bf16.msra.mxu0 %v2155
    %2848 = vmatprep.subr.bf16.mxu0 %v2159
    %2849 = vmatpush1.bf16.msra.mxu0 %v2158
    %2850 = vmatprep.subr.bf16.mxu0 %v2162
    %2851 = vmatpush1.bf16.msra.mxu0 %v2161
    %2852 = vmatprep.subr.bf16.mxu0 0
    %2853 = vmatpush1.bf16.msra.mxu0 0
    %2854 = vmatprep.subr.bf16.mxu0 0
    %2855 = vmatpush1.bf16.msra.mxu0 0
    %2856 = vmatprep.subr.bf16.mxu0 0
    %2857 = vmatpush1.bf16.msra.mxu0 0
    %2858 = vmatprep.subr.bf16.mxu0 0
    %2859 = vmatpush1.bf16.msra.mxu0 0
    %2860 = vmatprep.subr.bf16.mxu0 0
    %2861 = vmatpush1.bf16.msra.mxu0 0
    %2862 = vmatprep.subr.bf16.mxu0 0
    %2863 = vmatpush1.bf16.msra.mxu0 0
    %2864 = vmatprep.subr.bf16.mxu0 0
    %2865 = vmatpush1.bf16.msra.mxu0 0
    %2866 = vmatprep.subr.bf16.mxu0 0
    %2867 = vmatpush1.bf16.msra.mxu0 0
    %2868 = vmatprep.mubr.bf16.mxu0 0
    %2869 = vmatmul.mubr.bf16.gmra.mrb[0].mxu0 %v2835
    %v2870 = vpop.f32.mrb[0].mxu0
    %v2871 = vadd.f32 0.0, %v2870
    %v2872 = vpop.f32.mrb[0].mxu0
    %v2873 = vadd.f32 0.0, %v2872
    %v2874 = vpop.f32.mrb[0].mxu0
    %v2875 = vpop.f32.mrb[0].mxu0
    %2876 = vdwg.mxu0
    %2877 = vmatprep.subr.bf16.mxu0 0
    %2878 = vmatpush1.bf16.msra.mxu0 %v2142
    %2879 = vmatprep.subr.bf16.mxu0 0
    %2880 = vmatpush1.bf16.msra.mxu0 %v2145
    %2881 = vmatprep.subr.bf16.mxu0 0
    %2882 = vmatpush1.bf16.msra.mxu0 %v2148
    %2883 = vmatprep.subr.bf16.mxu0 0
    %2884 = vmatpush1.bf16.msra.mxu0 %v2151
    %2885 = vmatprep.subr.bf16.mxu0 0
    %2886 = vmatpush1.bf16.msra.mxu0 %v2154
    %2887 = vmatprep.subr.bf16.mxu0 0
    %2888 = vmatpush1.bf16.msra.mxu0 %v2157
    %2889 = vmatprep.subr.bf16.mxu0 0
    %2890 = vmatpush1.bf16.msra.mxu0 %v2160
    %2891 = vmatprep.subr.bf16.mxu0 0
    %2892 = vmatpush1.bf16.msra.mxu0 %v2163
    %2893 = vmatprep.subr.bf16.mxu0 0
    %2894 = vmatpush1.bf16.msra.mxu0 0
    %2895 = vmatprep.subr.bf16.mxu0 0
    %2896 = vmatpush1.bf16.msra.mxu0 0
    %2897 = vmatprep.subr.bf16.mxu0 0
    %2898 = vmatpush1.bf16.msra.mxu0 0
    %2899 = vmatprep.subr.bf16.mxu0 0
    %2900 = vmatpush1.bf16.msra.mxu0 0
    %2901 = vmatprep.subr.bf16.mxu0 0
    %2902 = vmatpush1.bf16.msra.mxu0 0
    %2903 = vmatprep.subr.bf16.mxu0 0
    %2904 = vmatpush1.bf16.msra.mxu0 0
    %2905 = vmatprep.subr.bf16.mxu0 0
    %2906 = vmatpush1.bf16.msra.mxu0 0
    %2907 = vmatprep.subr.bf16.mxu0 0
    %2908 = vmatpush1.bf16.msra.mxu0 0
    %2909 = vmatprep.mubr.bf16.mxu0 0
    %2910 = vmatmul.mubr.bf16.gmra.mrb[0].mxu0 %v2835
    %v2911 = vpop.f32.mrb[0].mxu0
    %v2912 = vadd.f32 0.0, %v2911
    %v2913 = vpop.f32.mrb[0].mxu0
    %v2914 = vpop.f32.mrb[0].mxu0
    %v2915 = vpop.f32.mrb[0].mxu0
    %2916 = vdwg.mxu0
    %v2917 = vadd.f32 %v2832, %v2871
    %v2918 = vxor.u32 %v2917, 2147483648
    %v2919 = vmul.f32 %v2918, 1.442695
    %v2920 = vpow.pop %v2919
    %v2921 = vadd.f32 %v2920, 1.0
    %v2922 = vrcp.pop %v2921
    %v2923 = vmul.f32 1.0, %v2922
    %v2924 = vadd.f32 %v2833, %v2873
    %v2925 = vxor.u32 %v2924, 2147483648
    %v2926 = vmul.f32 %v2925, 1.442695
    %v2927 = vpow.pop %v2926
    %v2928 = vadd.f32 %v2927, 1.0
    %v2929 = vrcp.pop %v2928
    %v2930 = vmul.f32 1.0, %v2929
    %v2931 = vadd.f32 %v2912, %v2052
    %v2932 = vmul.f32 %v2923, %v2931
    %v2933 = vadd.f32 %v2834, %v2932
    %v2934 = vtanh.pop %v2933
    %v2935 = vsub.f32 1.0, %v2930
    %v2936 = vmul.f32 %v2935, %v2934
    %v2937 = vmul.f32 %v2930, %v2830
    %v2938 = vadd.f32 %v2936, %v2937
    %2939 = vst [vmem:[%s1543] sm:$0xff] %v2938
    %v2940 = vld [vmem:[%s1547] sm:$0xff]
    %v2941 = vld [vmem:[%s1547 + $0x8] sm:$0xff]
    %v2942 = vld [vmem:[%s1547 + $0x10] sm:$0xff]
    %v2943 = vpack.c.bf16 %v2938, %v2938
    %2944 = vmatprep.subr.bf16.mxu0 %v2141
    %2945 = vmatpush1.bf16.msra.mxu0 %v2140
    %2946 = vmatprep.subr.bf16.mxu0 %v2144
    %2947 = vmatpush1.bf16.msra.mxu0 %v2143
    %2948 = vmatprep.subr.bf16.mxu0 %v2147
    %2949 = vmatpush1.bf16.msra.mxu0 %v2146
    %2950 = vmatprep.subr.bf16.mxu0 %v2150
    %2951 = vmatpush1.bf16.msra.mxu0 %v2149
    %2952 = vmatprep.subr.bf16.mxu0 %v2153
    %2953 = vmatpush1.bf16.msra.mxu0 %v2152
    %2954 = vmatprep.subr.bf16.mxu0 %v2156
    %2955 = vmatpush1.bf16.msra.mxu0 %v2155
    %2956 = vmatprep.subr.bf16.mxu0 %v2159
    %2957 = vmatpush1.bf16.msra.mxu0 %v2158
    %2958 = vmatprep.subr.bf16.mxu0 %v2162
    %2959 = vmatpush1.bf16.msra.mxu0 %v2161
    %2960 = vmatprep.subr.bf16.mxu0 0
    %2961 = vmatpush1.bf16.msra.mxu0 0
    %2962 = vmatprep.subr.bf16.mxu0 0
    %2963 = vmatpush1.bf16.msra.mxu0 0
    %2964 = vmatprep.subr.bf16.mxu0 0
    %2965 = vmatpush1.bf16.msra.mxu0 0
    %2966 = vmatprep.subr.bf16.mxu0 0
    %2967 = vmatpush1.bf16.msra.mxu0 0
    %2968 = vmatprep.subr.bf16.mxu0 0
    %2969 = vmatpush1.bf16.msra.mxu0 0
    %2970 = vmatprep.subr.bf16.mxu0 0
    %2971 = vmatpush1.bf16.msra.mxu0 0
    %2972 = vmatprep.subr.bf16.mxu0 0
    %2973 = vmatpush1.bf16.msra.mxu0 0
    %2974 = vmatprep.subr.bf16.mxu0 0
    %2975 = vmatpush1.bf16.msra.mxu0 0
    %2976 = vmatprep.mubr.bf16.mxu0 0
    %2977 = vmatmul.mubr.bf16.gmra.mrb[0].mxu0 %v2943
    %v2978 = vpop.f32.mrb[0].mxu0
    %v2979 = vadd.f32 0.0, %v2978
    %v2980 = vpop.f32.mrb[0].mxu0
    %v2981 = vadd.f32 0.0, %v2980
    %v2982 = vpop.f32.mrb[0].mxu0
    %v2983 = vpop.f32.mrb[0].mxu0
    %2984 = vdwg.mxu0
    %2985 = vmatprep.subr.bf16.mxu0 0
    %2986 = vmatpush1.bf16.msra.mxu0 %v2142
    %2987 = vmatprep.subr.bf16.mxu0 0
    %2988 = vmatpush1.bf16.msra.mxu0 %v2145
    %2989 = vmatprep.subr.bf16.mxu0 0
    %2990 = vmatpush1.bf16.msra.mxu0 %v2148
    %2991 = vmatprep.subr.bf16.mxu0 0
    %2992 = vmatpush1.bf16.msra.mxu0 %v2151
    %2993 = vmatprep.subr.bf16.mxu0 0
    %2994 = vmatpush1.bf16.msra.mxu0 %v2154
    %2995 = vmatprep.subr.bf16.mxu0 0
    %2996 = vmatpush1.bf16.msra.mxu0 %v2157
    %2997 = vmatprep.subr.bf16.mxu0 0
    %2998 = vmatpush1.bf16.msra.mxu0 %v2160
    %2999 = vmatprep.subr.bf16.mxu0 0
    %3000 = vmatpush1.bf16.msra.mxu0 %v2163
    %3001 = vmatprep.subr.bf16.mxu0 0
    %3002 = vmatpush1.bf16.msra.mxu0 0
    %3003 = vmatprep.subr.bf16.mxu0 0
    %3004 = vmatpush1.bf16.msra.mxu0 0
    %3005 = vmatprep.subr.bf16.mxu0 0
    %3006 = vmatpush1.bf16.msra.mxu0 0
    %3007 = vmatprep.subr.bf16.mxu0 0
    %3008 = vmatpush1.bf16.msra.mxu0 0
    %3009 = vmatprep.subr.bf16.mxu0 0
    %3010 = vmatpush1.bf16.msra.mxu0 0
    %3011 = vmatprep.subr.bf16.mxu0 0
    %3012 = vmatpush1.bf16.msra.mxu0 0
    %3013 = vmatprep.subr.bf16.mxu0 0
    %3014 = vmatpush1.bf16.msra.mxu0 0
    %3015 = vmatprep.subr.bf16.mxu0 0
    %3016 = vmatpush1.bf16.msra.mxu0 0
    %3017 = vmatprep.mubr.bf16.mxu0 0
    %3018 = vmatmul.mubr.bf16.gmra.mrb[0].mxu0 %v2943
    %v3019 = vpop.f32.mrb[0].mxu0
    %v3020 = vadd.f32 0.0, %v3019
    %v3021 = vpop.f32.mrb[0].mxu0
    %v3022 = vpop.f32.mrb[0].mxu0
    %v3023 = vpop.f32.mrb[0].mxu0
    %3024 = vdwg.mxu0
    %v3025 = vadd.f32 %v2940, %v2979
    %v3026 = vxor.u32 %v3025, 2147483648
    %v3027 = vmul.f32 %v3026, 1.442695
    %v3028 = vpow.pop %v3027
    %v3029 = vadd.f32 %v3028, 1.0
    %v3030 = vrcp.pop %v3029
    %v3031 = vmul.f32 1.0, %v3030
    %v3032 = vadd.f32 %v2941, %v2981
    %v3033 = vxor.u32 %v3032, 2147483648
    %v3034 = vmul.f32 %v3033, 1.442695
    %v3035 = vpow.pop %v3034
    %v3036 = vadd.f32 %v3035, 1.0
    %v3037 = vrcp.pop %v3036
    %v3038 = vmul.f32 1.0, %v3037
    %v3039 = vadd.f32 %v3020, %v2052
    %v3040 = vmul.f32 %v3031, %v3039
    %v3041 = vadd.f32 %v2942, %v3040
    %v3042 = vtanh.pop %v3041
    %v3043 = vsub.f32 1.0, %v3038
    %v3044 = vmul.f32 %v3043, %v3042
    %v3045 = vmul.f32 %v3038, %v2938
    %v3046 = vadd.f32 %v3044, %v3045
    %3047 = vst [vmem:[%s1658] sm:$0xff] %v3046
    %s3048 = scalar_lea.vmem [#allocation13], 8
    %3049 = vst [vmem:[%s3048] sm:$0xff] %v3046
    %v3050 = vld [vmem:[#allocation3] sm:$0xff]
    %v3051 = vld [vmem:[#allocation3 + $0x8] sm:$0xff]
    %v3052 = vld [vmem:[#allocation3 + $0x10] sm:$0xff]
    %v3053 = vld [vmem:[#allocation3 + $0x18] sm:$0xff]
    %v3054 = vld [vmem:[#allocation3 + $0x20] sm:$0xff]
    %v3055 = vld [vmem:[#allocation3 + $0x28] sm:$0xff]
    %v3056 = vld [vmem:[#allocation3 + $0x30] sm:$0xff]
    %v3057 = vld [vmem:[#allocation3 + $0x38] sm:$0xff]
    %v3058 = vpack.c.bf16 %v3051, %v3050
    %v3059 = vpack.c.bf16 %v3053, %v3052
    %v3060 = vpack.c.bf16 %v3055, %v3054
    %v3061 = vpack.c.bf16 %v3057, %v3056
    %v3066 = vunpack.c.l.b16 %v3058
    %v3067 = vunpack.c.h.b16 %v3058
    %v3068 = vunpack.c.l.b16 %v3059
    %v3069 = vunpack.c.h.b16 %v3059
    %v3070 = vunpack.c.l.b16 %v3060
    %v3071 = vunpack.c.h.b16 %v3060
    %v3072 = vunpack.c.l.b16 %v3061
    %v3073 = vunpack.c.h.b16 %v3061
    %v3074 = vpack.c.b16 %v3066, %v3066
    %v3075 = vpack.c.b16 %v3067, %v3067
    %v3076 = vpack.c.b16 %v3068, %v3068
    %v3077 = vpack.c.b16 %v3069, %v3069
    %v3078 = vpack.c.b16 %v3070, %v3070
    %v3079 = vpack.c.b16 %v3071, %v3071
    %v3080 = vpack.c.b16 %v3072, %v3072
    %v3081 = vpack.c.b16 %v3073, %v3073
    %3090 = vst [vmem:[#allocation12] sm:$0xf] %v3074
    %3091 = vst [vmem:[#allocation12 + $0x4] sm:$0xf] %v3075
    %3092 = vst [vmem:[#allocation12 + $0x8] sm:$0xf] %v3076
    %3093 = vst [vmem:[#allocation12 + $0xc] sm:$0xf] %v3077
    %3094 = vst [vmem:[#allocation12 + $0x10] sm:$0xf] %v3078
    %3095 = vst [vmem:[#allocation12 + $0x14] sm:$0xf] %v3079
    %3096 = vst [vmem:[#allocation12 + $0x18] sm:$0xf] %v3080
    %3097 = vst [vmem:[#allocation12 + $0x1c] sm:$0xf] %v3081
    // Predicated region
    $region54: #{tpu_custom_call.1} parent=1 // pred_check
      _
    $region55: #{tpu_custom_call.1} parent=1 // pred_check_branch
      %3099 = sbr.rel (0) target = $region57
    $region56: #{tpu_custom_call.1} parent=1 // pred_region
      %s3101 = ssub.s32 512, 512
      %3102 = vsyncadd [#allocation6], %s3101
      %s3103 = sshll.u32 [#allocation12], 4
      %s3104 = int_to_ptr.vmem [resolvable:$true] %s3103
      %3109 = dma.vmem_to_hbm [thread:$0]  %s3104, 512, %s9, [#allocation6], 64, 64, 4
    $region57: #{tpu_custom_call.1} parent=1 // pred_fallthru
      _
    // Predicated region
    $region58: #{tpu_custom_call.1} parent=1 // pred_check
      _
    $region59: #{tpu_custom_call.1} parent=1 // pred_check_branch
      %3111 = sbr.rel (0) target = $region61
    $region60: #{tpu_custom_call.1} parent=1 // pred_region
      %s3113 = ssub.s32 256, 256
      %3114 = vsyncadd [#allocation14], %s3113
      %s3115 = sshll.u32 [#allocation13], 4
      %s3116 = int_to_ptr.vmem [resolvable:$true] %s3115
      %3121 = dma.vmem_to_hbm [thread:$0]  %s3116, 256, %s10, [#allocation14], 128, 128, 8
    $region61: #{tpu_custom_call.1} parent=1 // pred_fallthru
      _
    // Predicated region
    $region62: #{tpu_custom_call.1} parent=1 // pred_check
      _
    $region63: #{tpu_custom_call.1} parent=1 // pred_check_branch
      %3123 = sbr.rel (0) target = $region65
    $region64: #{tpu_custom_call.1} parent=1 // pred_region
      %3124 = dma.done [#allocation6], 512
    $region65: #{tpu_custom_call.1} parent=1 // pred_fallthru
      _
    // Predicated region
    $region66: #{tpu_custom_call.1} parent=1 // pred_check
      _
    $region67: #{tpu_custom_call.1} parent=1 // pred_check_branch
      %3126 = sbr.rel (0) target = $region69
    $region68: #{tpu_custom_call.1} parent=1 // pred_region
      %3127 = dma.done [#allocation14], 256
    $region69: #{tpu_custom_call.1} parent=1 // pred_fallthru
      _
    %3128 = vsyncpa [#allocation5], 1
    %3129 = vsyncpa [#allocation8], 1
    %3130 = vsyncpa [#allocation11], 1
    %3131 = vsyncpa [#allocation6], 1
    %3132 = vsyncpa [#allocation14], 1

</llo_original>
